<compile_context>
chip_gen: v7x
topology: tpu7x:2x2x1
jax: 0.10.0
libtpu: 0.0.40
codegen_flags: <defaults>
</compile_context>

<pallas_src>
import jax
import jax.numpy as jnp
from jax import lax
from jax.experimental import pallas as pl
from jax.experimental.pallas import tpu as pltpu

EPS = 1e-5
LANE = 128
NEG_BIG = -1e30     # additive softmax mask value for padded object columns


def _round_up(n, m):
    return ((n + m - 1) // m) * m


# ------------------------------------------------------------------ kernel ---
def _ocr_kernel(x_ref, k_ref, v_ref, mask_ref,
                wp1_ref, bp1_ref, wp2_ref, bp2_ref,
                wu_ref, bu_ref, wfc_ref, wfx_ref, bf_ref,
                out_ref):
    """One (batch, L-tile) grid point.

    x_ref    : (1, TL, Cp)  bf16 pixel-feature tile (channels-last, zero-padded)
    k_ref    : (1, Mp, Kp)  bf16 key   = f_object(proxy)   (hoisted, per batch)
    v_ref    : (1, Mp, Kp)  bf16 value = f_down(proxy)     (hoisted, per batch)
    mask_ref : (1, Mp)      f32  additive mask (0 for real objects, -1e30 pad)
    w*_ref   : bf16 fused conv1x1+BN weights (transposed for `x @ W`)
    b*_ref   : (1, Co_p)    f32  fused biases
    out_ref  : (1, Cop, TL) bf16 output, channels-first (NCHW) writeback
    """
    bf16 = jnp.bfloat16
    x = x_ref[0]          # (TL, Cp) bf16
    k = k_ref[0]          # (Mp, Kp) bf16
    v = v_ref[0]          # (Mp, Kp) bf16

    def lin_relu(a_bf16, w_ref, b_ref):
        # bf16 MXU matmul with f32 accumulation; bias + ReLU in f32 on the VPU
        # (kept f32 so the same kernel is safe on v5e: no bf16 VPU/EUP there).
        y = jnp.dot(a_bf16, w_ref[...],
                    preferred_element_type=jnp.float32) + b_ref[...]
        return jnp.maximum(y, 0.0)

    # f_pixel : two conv1x1+BN+ReLU -> query (TL, Kp)
    # (the key_channels**-0.5 attention scale is pre-folded into wp2/bp2)
    q = lin_relu(lin_relu(x, wp1_ref, bp1_ref).astype(bf16), wp2_ref, bp2_ref)

    # similarity (TL, Mp): contract last dims of q and k (no explicit transpose),
    # then kill the lane-padded object columns with one broadcast add.
    sim = lax.dot_general(q.astype(bf16), k,
                          (((1,), (1,)), ((), ())),
                          preferred_element_type=jnp.float32)
    sim = sim + mask_ref[...]

    # softmax over objects (EUP approx reciprocal for the denominator).
    sim = sim - jnp.max(sim, axis=-1, keepdims=True)
    e = jnp.exp(sim)
    sm = e * pl.reciprocal(jnp.sum(e, axis=-1, keepdims=True), approx=True)

    # context = softmax @ value -> (TL, Kp); f_up -> (TL, Cp)
    ctx = jnp.dot(sm.astype(bf16), v, preferred_element_type=jnp.float32)
    up = lin_relu(ctx.astype(bf16), wu_ref, bu_ref)

    # conv_bn_dropout on cat([context, feats], channel axis): split the fused
    # weight into the context half and the feats half (concat never built).
    out = (jnp.dot(up.astype(bf16), wfc_ref[...],
                   preferred_element_type=jnp.float32)
           + jnp.dot(x, wfx_ref[...], preferred_element_type=jnp.float32)
           + bf_ref[...])
    out = jnp.maximum(out, 0.0)

    # Emit channels-first directly (XLU transpose rides an otherwise-idle slot)
    # and write back in bf16 to halve the dominant HBM stream.
    out_ref[0] = jnp.transpose(out, (1, 0)).astype(out_ref.dtype)
    # TODO(synk): Dropout2d(0.1) is identity at inference; training-mode
    # channel dropout not implemented.


# --------------------------------------------------- generation-aware tiling ---
def _default_tiling():
    """(tl, vmem_limit_bytes) picked from the physical VMEM of this chip."""
    try:
        cap = int(getattr(pltpu.get_tpu_info(), "vmem_capacity_bytes", 64 << 20))
    except Exception:
        cap = 64 << 20
    if cap >= (128 << 20):            # v5e / v6e: 128 MiB physical VMEM
        tl, lim = 1024, 96 << 20
    else:                             # v7x: 64 MiB per TensorCore
        tl, lim = 512, 44 << 20
    return tl, min(lim, cap * 3 // 4)


# ----------------------------------------------------------- weight prepack ---
def prepare_ocr_params(fused, in_channels, key_channels, out_channels):
    """Pad + cast the fused weights to lane-dense bf16 ONCE (not per forward)."""
    Cp = _round_up(in_channels, LANE)
    Kp = _round_up(key_channels, LANE)
    Cop = _round_up(out_channels, LANE)
    bf16 = jnp.bfloat16

    def pad_w(w, r, c):    # weights feed the MXU -> bf16
        return jnp.pad(w, ((0, r - w.shape[0]), (0, c - w.shape[1]))).astype(bf16)

    def pad_b(b, c):       # biases stay f32 (VPU add after f32 accumulation)
        return jnp.pad(b, ((0, 0), (0, c - b.shape[1]))).astype(jnp.float32)

    return {
        "C": in_channels, "KC": key_channels, "Cout": out_channels,
        "Cp": Cp, "Kp": Kp, "Cop": Cop,
        # in-kernel resident weights (pixel / up / fuse paths)
        "wp1": pad_w(fused["wp1"], Cp, Kp), "bp1": pad_b(fused["bp1"], Kp),
        "wp2": pad_w(fused["wp2"], Kp, Kp), "bp2": pad_b(fused["bp2"], Kp),
        "wu":  pad_w(fused["wu"],  Kp, Cp), "bu":  pad_b(fused["bu"],  Cp),
        "wfc": pad_w(fused["wfc"], Cp, Cop), "wfx": pad_w(fused["wfx"], Cp, Cop),
        "bf":  pad_b(fused["bf"], Cop),
        # host-side proxy-projection weights (tiny matmuls, hoisted out of kernel)
        "wo1": fused["wo1"], "bo1": fused["bo1"],
        "wo2": fused["wo2"], "bo2": fused["bo2"],
        "wd":  fused["wd"],  "bd":  fused["bd"],
    }


# ----------------------------------------------------------------- wrapper ---
def spatial_ocr_pallas(feats_nchw, proxy_nchw, prep, *, tl=None,
                       vmem_limit_bytes=None, out_dtype=jnp.bfloat16):
    """feats_nchw: (N, C, H, W)   proxy_nchw: (N, C, M, 1)   prep: prepacked weights."""
    N, C, H, W = feats_nchw.shape
    assert C == prep["C"]
    M = proxy_nchw.shape[2] * proxy_nchw.shape[3]
    assert M >= 1, "need at least one object/proxy region (softmax would be all-masked)"
    L = H * W
    Cp, Kp, Cop, Cout = prep["Cp"], prep["Kp"], prep["Cop"], prep["Cout"]
    Mp = _round_up(M, LANE)

    tl_def, vmem_def = _default_tiling()
    if tl is None:
        tl = tl_def
    if vmem_limit_bytes is None:
        vmem_limit_bytes = vmem_def
    # tl must be a multiple of 128 so the NCHW output block is lane-dense.
    tl = max(LANE, _round_up(min(tl, L), LANE))
    Lp = _round_up(L, tl)
    n_l = Lp // tl

    bf16 = jnp.bfloat16

    # pixel features: channels-last, flattened spatial, zero padded, bf16.
    x = jnp.transpose(feats_nchw.reshape(N, C, L), (0, 2, 1))          # (N, L, C)
    x = jnp.pad(x, ((0, 0), (0, Lp - L), (0, Cp - C))).astype(bf16)

    # proxy path hoisted out of the kernel: key/value are computed once per
    # forward on the tiny (N, M, C) proxy tensor in plain JAX (f32), instead of
    # being recomputed inside the kernel for every L-tile.
    p = jnp.transpose(proxy_nchw.reshape(N, C, M), (0, 2, 1)).astype(jnp.float32)

    def lin_relu_host(a, w, b):
        return jnp.maximum(a @ w + b, 0.0)

    k = lin_relu_host(lin_relu_host(p, prep["wo1"], prep["bo1"]),
                      prep["wo2"], prep["bo2"])                        # (N, M, KC)
    v = lin_relu_host(p, prep["wd"], prep["bd"])                       # (N, M, KC)
    k = jnp.pad(k, ((0, 0), (0, Mp - M), (0, Kp - k.shape[-1]))).astype(bf16)
    v = jnp.pad(v, ((0, 0), (0, Mp - M), (0, Kp - v.shape[-1]))).astype(bf16)

    # additive softmax mask over the padded object axis (0 real / -1e30 pad).
    mask = jnp.where(jnp.arange(Mp) < M, 0.0, NEG_BIG).astype(jnp.float32)
    mask = mask.reshape(1, Mp)

    weights = [prep["wp1"], prep["bp1"], prep["wp2"], prep["bp2"],
               prep["wu"], prep["bu"], prep["wfc"], prep["wfx"], prep["bf"]]

    def const_spec(arr):   # grid-invariant blocks (weights / mask): whole array
        nd = arr.ndim
        return pl.BlockSpec(arr.shape, lambda b, l, _nd=nd: (0,) * _nd)

    in_specs = ([pl.BlockSpec((1, tl, Cp), lambda b, l: (b, l, 0)),
                 pl.BlockSpec((1, Mp, Kp), lambda b, l: (b, 0, 0)),
                 pl.BlockSpec((1, Mp, Kp), lambda b, l: (b, 0, 0)),
                 const_spec(mask)]
                + [const_spec(w) for w in weights])
    # output is emitted channels-first, so no post-kernel transpose HBM pass.
    out_spec = pl.BlockSpec((1, Cop, tl), lambda b, l: (b, 0, l))

    out = pl.pallas_call(
        _ocr_kernel,
        out_shape=jax.ShapeDtypeStruct((N, Cop, Lp), out_dtype),
        grid_spec=pltpu.PrefetchScalarGridSpec(
            num_scalar_prefetch=0,
            grid=(N, n_l),
            in_specs=in_specs,
            out_specs=out_spec,
        ),
        compiler_params=pltpu.CompilerParams(
            dimension_semantics=("parallel", "parallel"),
            vmem_limit_bytes=vmem_limit_bytes,
        ),
    )(x, k, v, mask, *weights)

    # strip padding; already channels-first -> just reshape back to NCHW.
    return out[:, :Cout, :L].reshape(N, Cout, H, W)


# ----------------------------------------------------- parameter generation ---
def make_params(key, in_channels, key_channels, out_channels):
    """Deterministic synthetic weights for every conv / BN in the module."""
    def conv(k, co, ci):
        return 0.1 * jax.random.normal(k, (co, ci), jnp.float32)

    def bn(k, c):
        k1, k2, k3, k4 = jax.random.split(k, 4)
        gamma = 0.5 + jax.random.uniform(k1, (c,), jnp.float32)
        beta = 0.1 * jax.random.normal(k2, (c,), jnp.float32)
        mean = 0.1 * jax.random.normal(k3, (c,), jnp.float32)
        var = 0.5 + jax.random.uniform(k4, (c,), jnp.float32)
        return gamma, beta, mean, var

    keys = jax.random.split(key, 16)
    p = {}
    # f_pixel: conv(C->K)+BN, conv(K->K)+BN
    p["p1_w"], p["p1_bn"] = conv(keys[0], key_channels, in_channels), bn(keys[1], key_channels)
    p["p2_w"], p["p2_bn"] = conv(keys[2], key_channels, key_channels), bn(keys[3], key_channels)
    # f_object
    p["o1_w"], p["o1_bn"] = conv(keys[4], key_channels, in_channels), bn(keys[5], key_channels)
    p["o2_w"], p["o2_bn"] = conv(keys[6], key_channels, key_channels), bn(keys[7], key_channels)
    # f_down
    p["d_w"], p["d_bn"] = conv(keys[8], key_channels, in_channels), bn(keys[9], key_channels)
    # f_up
    p["u_w"], p["u_bn"] = conv(keys[10], in_channels, key_channels), bn(keys[11], in_channels)
    # conv_bn_dropout: conv(2C -> out)+BN
    p["f_w"], p["f_bn"] = conv(keys[12], out_channels, 2 * in_channels), bn(keys[13], out_channels)
    return p


def fuse_params(p, in_channels, key_channels):
    """Fold eval-mode BatchNorm into the preceding 1x1 conv (exact), and fold
    the key_channels**-0.5 attention scale into the query projection."""
    def fold(w, bnp):
        gamma, beta, mean, var = bnp
        scale = gamma / jnp.sqrt(var + EPS)
        w_f = w * scale[:, None]                 # (Cout, Cin)
        b_f = beta - mean * scale                # (Cout,)
        return w_f.T, b_f.reshape(1, -1)         # transposed for x @ W

    fused = {}
    fused["wp1"], fused["bp1"] = fold(p["p1_w"], p["p1_bn"])
    wp2, bp2 = fold(p["p2_w"], p["p2_bn"])
    s = key_channels ** -0.5                     # exact: ReLU(s*x) = s*ReLU(x), s>0
    fused["wp2"], fused["bp2"] = wp2 * s, bp2 * s
    fused["wo1"], fused["bo1"] = fold(p["o1_w"], p["o1_bn"])
    fused["wo2"], fused["bo2"] = fold(p["o2_w"], p["o2_bn"])
    fused["wd"], fused["bd"] = fold(p["d_w"], p["d_bn"])
    fused["wu"], fused["bu"] = fold(p["u_w"], p["u_bn"])
    wf_t, bf = fold(p["f_w"], p["f_bn"])         # wf_t: (2C, Cout)
    fused["wfc"] = wf_t[:in_channels]            # context half (cat order: [ctx, x])
    fused["wfx"] = wf_t[in_channels:]            # feats half
    fused["bf"] = bf
    return fused


# ----------------------------------------------------------- NCHW reference ---
def reference_forward(feats, proxy, p):
    """Pure-JAX exact port of the PyTorch forward (eval mode), NCHW, f32."""
    def conv_bn_relu(x, w, bnp):
        gamma, beta, mean, var = bnp
        y = jnp.einsum("oc,nchw->nohw", w, x)
        y = (y - mean[None, :, None, None]) / jnp.sqrt(var + EPS)[None, :, None, None]
        y = y * gamma[None, :, None, None] + beta[None, :, None, None]
        return jnp.maximum(y, 0.0)

    N, C, H, W = feats.shape
    K = p["p1_w"].shape[0]

    q = conv_bn_relu(conv_bn_relu(feats, p["p1_w"], p["p1_bn"]), p["p2_w"], p["p2_bn"])
    q = q.reshape(N, K, -1).transpose(0, 2, 1)                    # (N, HW, K)
    k = conv_bn_relu(conv_bn_relu(proxy, p["o1_w"], p["o1_bn"]), p["o2_w"], p["o2_bn"])
    k = k.reshape(N, K, -1)                                       # (N, K, M)
    v = conv_bn_relu(proxy, p["d_w"], p["d_bn"]).reshape(N, K, -1).transpose(0, 2, 1)

    sim = jnp.matmul(q, k) * (K ** -0.5)                          # (N, HW, M)
    sim = jax.nn.softmax(sim, axis=-1)
    ctx = jnp.matmul(sim, v)                                      # (N, HW, K)
    ctx = ctx.transpose(0, 2, 1).reshape(N, K, H, W)
    ctx = conv_bn_relu(ctx, p["u_w"], p["u_bn"])                  # (N, C, H, W)

    cat = jnp.concatenate([ctx, feats], axis=1)                   # (N, 2C, H, W)
    out = conv_bn_relu(cat, p["f_w"], p["f_bn"])                  # dropout = identity (eval)
    return out


# -------------------------------------------------------------------- main ---
if __name__ == "__main__":
    N, C, H, W = 2, 8, 16, 16         # in_channels = 8
    KC = 8                            # key_channels
    COUT = 8                          # out_channels
    M = 8                             # number of proxy/object regions

    root = jax.random.PRNGKey(0)
    k_feat, k_proxy, k_param = jax.random.split(root, 3)

    feats = jax.random.normal(k_feat, (N, C, H, W), jnp.float32)
    proxy = jax.random.normal(k_proxy, (N, C, M, 1), jnp.float32)

    params = make_params(k_param, C, KC, COUT)
    fused = fuse_params(params, C, KC)
    prep = prepare_ocr_params(fused, C, KC, COUT)    # pad + cast weights once

    out = spatial_ocr_pallas(feats, proxy, prep)     # bf16 NCHW output
    out = jax.block_until_ready(out)
    assert out.shape == (N, COUT, H, W)

    ref = jax.block_until_ready(reference_forward(feats, proxy, params))
    out_f32 = out.astype(jnp.float32)
    max_err = float(jnp.max(jnp.abs(out_f32 - ref)))
    # bf16 MXU matmuls (f32 accumulation) + bf16 output vs. the pure-f32 reference.
    assert jnp.allclose(out_f32, ref, rtol=5e-2, atol=5e-2), max_err

    print("KERNEL_OK")
</pallas_src>

<mosaic_0001>
module attributes {stable_mosaic.version = 11 : i64} {
  func.func @_ocr_kernel(%arg0: i32, %arg1: i32, %arg2: memref<1x256x128xbf16, #tpu.memory_space<vmem>>, %arg3: memref<1x128x128xbf16, #tpu.memory_space<vmem>>, %arg4: memref<1x128x128xbf16, #tpu.memory_space<vmem>>, %arg5: memref<1x128xf32, #tpu.memory_space<vmem>>, %arg6: memref<128x128xbf16, #tpu.memory_space<vmem>>, %arg7: memref<1x128xf32, #tpu.memory_space<vmem>>, %arg8: memref<128x128xbf16, #tpu.memory_space<vmem>>, %arg9: memref<1x128xf32, #tpu.memory_space<vmem>>, %arg10: memref<128x128xbf16, #tpu.memory_space<vmem>>, %arg11: memref<1x128xf32, #tpu.memory_space<vmem>>, %arg12: memref<128x128xbf16, #tpu.memory_space<vmem>>, %arg13: memref<128x128xbf16, #tpu.memory_space<vmem>>, %arg14: memref<1x128xf32, #tpu.memory_space<vmem>>, %arg15: memref<1x128x256xbf16, #tpu.memory_space<vmem>>) attributes {dimension_semantics = [#tpu.dimension_semantics<parallel>, #tpu.dimension_semantics<parallel>], iteration_bounds = array<i64: 2, 1>, scalar_prefetch = 0 : i64, scratch_operands = 0 : i64, tpu.core_type = #tpu.core_type<tc>, window_params = [{transform_indices = @transform_0, window_bounds = array<i64: 1, 256, 128>}, {transform_indices = @transform_1, window_bounds = array<i64: 1, 128, 128>}, {transform_indices = @transform_2, window_bounds = array<i64: 1, 128, 128>}, {pipeline_mode = #tpu.pipeline_mode<synchronous>, transform_indices = @transform_3, window_bounds = array<i64: 1, 128>}, {pipeline_mode = #tpu.pipeline_mode<synchronous>, transform_indices = @transform_4, window_bounds = array<i64: 128, 128>}, {pipeline_mode = #tpu.pipeline_mode<synchronous>, transform_indices = @transform_5, window_bounds = array<i64: 1, 128>}, {pipeline_mode = #tpu.pipeline_mode<synchronous>, transform_indices = @transform_6, window_bounds = array<i64: 128, 128>}, {pipeline_mode = #tpu.pipeline_mode<synchronous>, transform_indices = @transform_7, window_bounds = array<i64: 1, 128>}, {pipeline_mode = #tpu.pipeline_mode<synchronous>, transform_indices = @transform_8, window_bounds = array<i64: 128, 128>}, {pipeline_mode = #tpu.pipeline_mode<synchronous>, transform_indices = @transform_9, window_bounds = array<i64: 1, 128>}, {pipeline_mode = #tpu.pipeline_mode<synchronous>, transform_indices = @transform_10, window_bounds = array<i64: 128, 128>}, {pipeline_mode = #tpu.pipeline_mode<synchronous>, transform_indices = @transform_11, window_bounds = array<i64: 128, 128>}, {pipeline_mode = #tpu.pipeline_mode<synchronous>, transform_indices = @transform_12, window_bounds = array<i64: 1, 128>}, {transform_indices = @transform_13, window_bounds = array<i64: 1, 128, 256>}]} {
    %c0 = arith.constant 0 : index
    %c0_0 = arith.constant 0 : index
    %c0_1 = arith.constant 0 : index
    %0 = vector.load %arg2[%c0, %c0_0, %c0_1] : memref<1x256x128xbf16, #tpu.memory_space<vmem>>, vector<1x256x128xbf16>
    %1 = vector.shape_cast %0 : vector<1x256x128xbf16> to vector<256x128xbf16>
    %c0_2 = arith.constant 0 : index
    %c0_3 = arith.constant 0 : index
    %c0_4 = arith.constant 0 : index
    %2 = vector.load %arg3[%c0_2, %c0_3, %c0_4] : memref<1x128x128xbf16, #tpu.memory_space<vmem>>, vector<1x128x128xbf16>
    %3 = vector.shape_cast %2 : vector<1x128x128xbf16> to vector<128x128xbf16>
    %c0_5 = arith.constant 0 : index
    %c0_6 = arith.constant 0 : index
    %c0_7 = arith.constant 0 : index
    %4 = vector.load %arg4[%c0_5, %c0_6, %c0_7] : memref<1x128x128xbf16, #tpu.memory_space<vmem>>, vector<1x128x128xbf16>
    %5 = vector.shape_cast %4 : vector<1x128x128xbf16> to vector<128x128xbf16>
    %c0_8 = arith.constant 0 : index
    %c0_9 = arith.constant 0 : index
    %6 = vector.load %arg6[%c0_8, %c0_9] : memref<128x128xbf16, #tpu.memory_space<vmem>>, vector<128x128xbf16>
    %cst = arith.constant dense<0.000000e+00> : vector<256x128xf32>
    %7 = tpu.matmul %1, %6, %cst {dimension_numbers = #tpu.dot_dimension_numbers<[1], [0], [0], [1], [0, 0, 1, 1], [], []>} : vector<256x128xbf16>, vector<128x128xbf16>, vector<256x128xf32> -> vector<256x128xf32>
    %c0_10 = arith.constant 0 : index
    %c0_11 = arith.constant 0 : index
    %8 = vector.load %arg7[%c0_10, %c0_11] : memref<1x128xf32, #tpu.memory_space<vmem>>, vector<1x128xf32>
    %9 = vector.broadcast %8 : vector<1x128xf32> to vector<256x128xf32>
    %10 = arith.addf %7, %9 : vector<256x128xf32>
    %cst_12 = arith.constant 0.000000e+00 : f32
    %11 = vector.broadcast %cst_12 : f32 to vector<256x128xf32>
    %12 = arith.maximumf %10, %11 : vector<256x128xf32>
    %13 = arith.truncf %12 : vector<256x128xf32> to vector<256x128xbf16>
    %c0_13 = arith.constant 0 : index
    %c0_14 = arith.constant 0 : index
    %14 = vector.load %arg8[%c0_13, %c0_14] : memref<128x128xbf16, #tpu.memory_space<vmem>>, vector<128x128xbf16>
    %cst_15 = arith.constant dense<0.000000e+00> : vector<256x128xf32>
    %15 = tpu.matmul %13, %14, %cst_15 {dimension_numbers = #tpu.dot_dimension_numbers<[1], [0], [0], [1], [0, 0, 1, 1], [], []>} : vector<256x128xbf16>, vector<128x128xbf16>, vector<256x128xf32> -> vector<256x128xf32>
    %c0_16 = arith.constant 0 : index
    %c0_17 = arith.constant 0 : index
    %16 = vector.load %arg9[%c0_16, %c0_17] : memref<1x128xf32, #tpu.memory_space<vmem>>, vector<1x128xf32>
    %17 = vector.broadcast %16 : vector<1x128xf32> to vector<256x128xf32>
    %18 = arith.addf %15, %17 : vector<256x128xf32>
    %cst_18 = arith.constant 0.000000e+00 : f32
    %19 = vector.broadcast %cst_18 : f32 to vector<256x128xf32>
    %20 = arith.maximumf %18, %19 : vector<256x128xf32>
    %21 = arith.truncf %20 : vector<256x128xf32> to vector<256x128xbf16>
    %cst_19 = arith.constant dense<0.000000e+00> : vector<256x128xf32>
    %22 = tpu.matmul %21, %3, %cst_19 {dimension_numbers = #tpu.dot_dimension_numbers<[1], [1], [0], [0], [0, 0, 1, 0], [], []>} : vector<256x128xbf16>, vector<128x128xbf16>, vector<256x128xf32> -> vector<256x128xf32>
    %c0_20 = arith.constant 0 : index
    %c0_21 = arith.constant 0 : index
    %23 = vector.load %arg5[%c0_20, %c0_21] : memref<1x128xf32, #tpu.memory_space<vmem>>, vector<1x128xf32>
    %24 = vector.broadcast %23 : vector<1x128xf32> to vector<256x128xf32>
    %25 = arith.addf %22, %24 : vector<256x128xf32>
    %cst_22 = arith.constant dense<0xFF800000> : vector<256xf32>
    %26 = vector.multi_reduction <maximumf>, %25, %cst_22 [1] : vector<256x128xf32> to vector<256xf32>
    %27 = vector.shape_cast %26 : vector<256xf32> to vector<256x1xf32>
    %28 = vector.broadcast %27 : vector<256x1xf32> to vector<256x128xf32>
    %29 = arith.subf %25, %28 : vector<256x128xf32>
    %30 = math.exp %29 : vector<256x128xf32>
    %cst_23 = arith.constant dense<0.000000e+00> : vector<256xf32>
    %31 = vector.multi_reduction <add>, %30, %cst_23 [1] : vector<256x128xf32> to vector<256xf32>
    %32 = vector.shape_cast %31 : vector<256xf32> to vector<256x1xf32>
    %33 = tpu.reciprocal %32 {approx = true} : vector<256x1xf32> -> vector<256x1xf32>
    %34 = vector.broadcast %33 : vector<256x1xf32> to vector<256x128xf32>
    %35 = arith.mulf %30, %34 : vector<256x128xf32>
    %36 = arith.truncf %35 : vector<256x128xf32> to vector<256x128xbf16>
    %cst_24 = arith.constant dense<0.000000e+00> : vector<256x128xf32>
    %37 = tpu.matmul %36, %5, %cst_24 {dimension_numbers = #tpu.dot_dimension_numbers<[1], [0], [0], [1], [0, 0, 1, 1], [], []>} : vector<256x128xbf16>, vector<128x128xbf16>, vector<256x128xf32> -> vector<256x128xf32>
    %38 = arith.truncf %37 : vector<256x128xf32> to vector<256x128xbf16>
    %c0_25 = arith.constant 0 : index
    %c0_26 = arith.constant 0 : index
    %39 = vector.load %arg10[%c0_25, %c0_26] : memref<128x128xbf16, #tpu.memory_space<vmem>>, vector<128x128xbf16>
    %cst_27 = arith.constant dense<0.000000e+00> : vector<256x128xf32>
    %40 = tpu.matmul %38, %39, %cst_27 {dimension_numbers = #tpu.dot_dimension_numbers<[1], [0], [0], [1], [0, 0, 1, 1], [], []>} : vector<256x128xbf16>, vector<128x128xbf16>, vector<256x128xf32> -> vector<256x128xf32>
    %c0_28 = arith.constant 0 : index
    %c0_29 = arith.constant 0 : index
    %41 = vector.load %arg11[%c0_28, %c0_29] : memref<1x128xf32, #tpu.memory_space<vmem>>, vector<1x128xf32>
    %42 = vector.broadcast %41 : vector<1x128xf32> to vector<256x128xf32>
    %43 = arith.addf %40, %42 : vector<256x128xf32>
    %cst_30 = arith.constant 0.000000e+00 : f32
    %44 = vector.broadcast %cst_30 : f32 to vector<256x128xf32>
    %45 = arith.maximumf %43, %44 : vector<256x128xf32>
    %46 = arith.truncf %45 : vector<256x128xf32> to vector<256x128xbf16>
    %c0_31 = arith.constant 0 : index
    %c0_32 = arith.constant 0 : index
    %47 = vector.load %arg12[%c0_31, %c0_32] : memref<128x128xbf16, #tpu.memory_space<vmem>>, vector<128x128xbf16>
    %cst_33 = arith.constant dense<0.000000e+00> : vector<256x128xf32>
    %48 = tpu.matmul %46, %47, %cst_33 {dimension_numbers = #tpu.dot_dimension_numbers<[1], [0], [0], [1], [0, 0, 1, 1], [], []>} : vector<256x128xbf16>, vector<128x128xbf16>, vector<256x128xf32> -> vector<256x128xf32>
    %c0_34 = arith.constant 0 : index
    %c0_35 = arith.constant 0 : index
    %49 = vector.load %arg13[%c0_34, %c0_35] : memref<128x128xbf16, #tpu.memory_space<vmem>>, vector<128x128xbf16>
    %cst_36 = arith.constant dense<0.000000e+00> : vector<256x128xf32>
    %50 = tpu.matmul %1, %49, %cst_36 {dimension_numbers = #tpu.dot_dimension_numbers<[1], [0], [0], [1], [0, 0, 1, 1], [], []>} : vector<256x128xbf16>, vector<128x128xbf16>, vector<256x128xf32> -> vector<256x128xf32>
    %51 = arith.addf %48, %50 : vector<256x128xf32>
    %c0_37 = arith.constant 0 : index
    %c0_38 = arith.constant 0 : index
    %52 = vector.load %arg14[%c0_37, %c0_38] : memref<1x128xf32, #tpu.memory_space<vmem>>, vector<1x128xf32>
    %53 = vector.broadcast %52 : vector<1x128xf32> to vector<256x128xf32>
    %54 = arith.addf %51, %53 : vector<256x128xf32>
    %cst_39 = arith.constant 0.000000e+00 : f32
    %55 = vector.broadcast %cst_39 : f32 to vector<256x128xf32>
    %56 = arith.maximumf %54, %55 : vector<256x128xf32>
    %57 = tpu.transpose %56, [1, 0] : vector<256x128xf32> -> vector<128x256xf32>
    %58 = arith.truncf %57 : vector<128x256xf32> to vector<128x256xbf16>
    %c0_40 = arith.constant 0 : index
    %c0_41 = arith.constant 0 : index
    %c0_42 = arith.constant 0 : index
    %59 = vector.load %arg15[%c0_40, %c0_41, %c0_42] : memref<1x128x256xbf16, #tpu.memory_space<vmem>>, vector<1x128x256xbf16>
    %60 = vector.shape_cast %59 : vector<1x128x256xbf16> to vector<128x256xbf16>
    %61 = vector.shape_cast %58 : vector<128x256xbf16> to vector<1x128x256xbf16>
    tpu.vector_store %arg15[%c0_40, %c0_41, %c0_42], %61 {strides = array<i32>} : memref<1x128x256xbf16, #tpu.memory_space<vmem>>, vector<1x128x256xbf16>,
    return
  }
  func.func @transform_0(%arg0: i32, %arg1: i32) -> (i32, i32, i32) {
    %c0_i32 = arith.constant 0 : i32
    %c0_i32_0 = arith.constant 0 : i32
    return %arg0, %arg1, %c0_i32 : i32, i32, i32
  }
  func.func @transform_1(%arg0: i32, %arg1: i32) -> (i32, i32, i32) {
    %c0_i32 = arith.constant 0 : i32
    %c0_i32_0 = arith.constant 0 : i32
    %c0_i32_1 = arith.constant 0 : i32
    return %arg0, %c0_i32, %c0_i32_0 : i32, i32, i32
  }
  func.func @transform_2(%arg0: i32, %arg1: i32) -> (i32, i32, i32) {
    %c0_i32 = arith.constant 0 : i32
    %c0_i32_0 = arith.constant 0 : i32
    %c0_i32_1 = arith.constant 0 : i32
    return %arg0, %c0_i32, %c0_i32_0 : i32, i32, i32
  }
  func.func @transform_3(%arg0: i32, %arg1: i32) -> (i32, i32) {
    %c0_i32 = arith.constant 0 : i32
    %c0_i32_0 = arith.constant 0 : i32
    %c0_i32_1 = arith.constant 0 : i32
    return %c0_i32, %c0_i32_0 : i32, i32
  }
  func.func @transform_4(%arg0: i32, %arg1: i32) -> (i32, i32) {
    %c0_i32 = arith.constant 0 : i32
    %c0_i32_0 = arith.constant 0 : i32
    %c0_i32_1 = arith.constant 0 : i32
    return %c0_i32, %c0_i32_0 : i32, i32
  }
  func.func @transform_5(%arg0: i32, %arg1: i32) -> (i32, i32) {
    %c0_i32 = arith.constant 0 : i32
    %c0_i32_0 = arith.constant 0 : i32
    %c0_i32_1 = arith.constant 0 : i32
    return %c0_i32, %c0_i32_0 : i32, i32
  }
  func.func @transform_6(%arg0: i32, %arg1: i32) -> (i32, i32) {
    %c0_i32 = arith.constant 0 : i32
    %c0_i32_0 = arith.constant 0 : i32
    %c0_i32_1 = arith.constant 0 : i32
    return %c0_i32, %c0_i32_0 : i32, i32
  }
  func.func @transform_7(%arg0: i32, %arg1: i32) -> (i32, i32) {
    %c0_i32 = arith.constant 0 : i32
    %c0_i32_0 = arith.constant 0 : i32
    %c0_i32_1 = arith.constant 0 : i32
    return %c0_i32, %c0_i32_0 : i32, i32
  }
  func.func @transform_8(%arg0: i32, %arg1: i32) -> (i32, i32) {
    %c0_i32 = arith.constant 0 : i32
    %c0_i32_0 = arith.constant 0 : i32
    %c0_i32_1 = arith.constant 0 : i32
    return %c0_i32, %c0_i32_0 : i32, i32
  }
  func.func @transform_9(%arg0: i32, %arg1: i32) -> (i32, i32) {
    %c0_i32 = arith.constant 0 : i32
    %c0_i32_0 = arith.constant 0 : i32
    %c0_i32_1 = arith.constant 0 : i32
    return %c0_i32, %c0_i32_0 : i32, i32
  }
  func.func @transform_10(%arg0: i32, %arg1: i32) -> (i32, i32) {
    %c0_i32 = arith.constant 0 : i32
    %c0_i32_0 = arith.constant 0 : i32
    %c0_i32_1 = arith.constant 0 : i32
    return %c0_i32, %c0_i32_0 : i32, i32
  }
  func.func @transform_11(%arg0: i32, %arg1: i32) -> (i32, i32) {
    %c0_i32 = arith.constant 0 : i32
    %c0_i32_0 = arith.constant 0 : i32
    %c0_i32_1 = arith.constant 0 : i32
    return %c0_i32, %c0_i32_0 : i32, i32
  }
  func.func @transform_12(%arg0: i32, %arg1: i32) -> (i32, i32) {
    %c0_i32 = arith.constant 0 : i32
    %c0_i32_0 = arith.constant 0 : i32
    %c0_i32_1 = arith.constant 0 : i32
    return %c0_i32, %c0_i32_0 : i32, i32
  }
  func.func @transform_13(%arg0: i32, %arg1: i32) -> (i32, i32, i32) {
    %c0_i32 = arith.constant 0 : i32
    %c0_i32_0 = arith.constant 0 : i32
    return %arg0, %c0_i32, %arg1 : i32, i32, i32
  }
}

</mosaic_0001>

<llo_original>
// kernel: tpu_custom_call.1
$region0: #{tpu_custom_call.1}
  #allocation0 [shape = 'u32[]', space=smem, size = 0x4, offset = 0x4, fixed_abs, tag = 'smem constant byte address 0x4 - core index']
  #allocation1 [shape = 'u32[144,128]{1,0:T(1,128)}', space=vmem, size = 0x12000, scoped, tag = 'internal scratch']
  %s0 = inlined_call_operand.hbm [shape: bf16[2,256,128], index: 0, kind: input, shape index: {}]
  %s1 = inlined_call_operand.hbm [shape: bf16[2,128,128], index: 1, kind: input, shape index: {}]
  %s2 = inlined_call_operand.hbm [shape: bf16[2,128,128], index: 2, kind: input, shape index: {}]
  %s3 = inlined_call_operand.vmem [shape: f32[1,128], index: 3, kind: input, shape index: {}]
  %s4 = inlined_call_operand.hbm [shape: bf16[128,128], index: 4, kind: input, shape index: {}]
  %s5 = inlined_call_operand.vmem [shape: f32[1,128], index: 5, kind: input, shape index: {}]
  %s6 = inlined_call_operand.hbm [shape: bf16[128,128], index: 6, kind: input, shape index: {}]
  %s7 = inlined_call_operand.vmem [shape: f32[1,128], index: 7, kind: input, shape index: {}]
  %s8 = inlined_call_operand.hbm [shape: bf16[128,128], index: 8, kind: input, shape index: {}]
  %s9 = inlined_call_operand.vmem [shape: f32[1,128], index: 9, kind: input, shape index: {}]
  %s10 = inlined_call_operand.hbm [shape: bf16[128,128], index: 10, kind: input, shape index: {}]
  %s11 = inlined_call_operand.hbm [shape: bf16[128,128], index: 11, kind: input, shape index: {}]
  %s12 = inlined_call_operand.vmem [shape: f32[1,128], index: 12, kind: input, shape index: {}]
  %s13 = inlined_call_operand.hbm [shape: bf16[2,128,256], index: 13, kind: output, shape index: {}]
  %s14 = sld [smem:[#allocation0]]
  $region117: #{tpu_custom_call.1} parent=0
    _
  %s16 = ssub.s32 1, %s14
  %s17 = scalar_select 0, %s16, %s14
  $region1: #{tpu_custom_call.1} parent=0
    #allocation2 [shape = 'u8[131072]{0}', space=vmem, size = 0x20000, scoped, tag = 'input window, operand 0']
    #allocation3 [shape = 's32[2]{0}', space=sflag, size = 0x8, scoped, tag = 'scoped memory for tpu_custom_call.1']
    #allocation4 [shape = 's32[2]{0}', space=sflag, size = 0x8, scoped, tag = 'scoped memory for tpu_custom_call.1']
    #allocation5 [shape = 'u8[65536]{0}', space=vmem, size = 0x10000, scoped, tag = 'input window, operand 1']
    #allocation6 [shape = 's32[2]{0}', space=sflag, size = 0x8, scoped, tag = 'scoped memory for tpu_custom_call.1']
    #allocation7 [shape = 'u8[65536]{0}', space=vmem, size = 0x10000, scoped, tag = 'input window, operand 2']
    #allocation8 [shape = 'u8[32768]{0}', space=vmem, size = 0x8000, scoped, tag = 'input window, operand 4, single buffered']
    #allocation9 [shape = 's32[1]{0}', space=sflag, size = 0x4, scoped, tag = 'scoped memory for tpu_custom_call.1']
    #allocation10 [shape = 'u8[32768]{0}', space=vmem, size = 0x8000, scoped, tag = 'input window, operand 6, single buffered']
    #allocation11 [shape = 'u8[32768]{0}', space=vmem, size = 0x8000, scoped, tag = 'input window, operand 8, single buffered']
    #allocation12 [shape = 's32[1]{0}', space=sflag, size = 0x4, scoped, tag = 'scoped memory for tpu_custom_call.1']
    #allocation13 [shape = 'u8[32768]{0}', space=vmem, size = 0x8000, scoped, tag = 'input window, operand 10, single buffered']
    #allocation14 [shape = 'u8[32768]{0}', space=vmem, size = 0x8000, scoped, tag = 'input window, operand 11, single buffered']
    #allocation15 [shape = 's32[1]{0}', space=sflag, size = 0x4, scoped, tag = 'scoped memory for tpu_custom_call.1']
    #allocation16 [shape = 'u8[131072]{0}', space=vmem, size = 0x20000, scoped, tag = 'output window, operand 0']
    %18 = vsyncpa [#allocation3], 0
    %s19 = scalar_lea.sflag [#allocation3], 1
    %20 = vsyncpa %s19, 0
    %21 = vsyncpa [#allocation6], 0
    %s22 = scalar_lea.sflag [#allocation6], 1
    %23 = vsyncpa %s22, 0
    %24 = vsyncpa [#allocation9], 0
    %25 = vsyncpa [#allocation12], 0
    %26 = vsyncpa [#allocation15], 0
    %27 = vsyncpa [#allocation4], 0
    %s28 = scalar_lea.sflag [#allocation4], 1
    %29 = vsyncpa %s28, 0
    loop: start=0, step=1, limit=4
    $region2: #{tpu_custom_call.1} parent=1 // loop_pre_header
      _
    $region3: #{tpu_custom_call.1} parent=1 // loop_header
      %s31 = sphi 0, %s35
      %p32 = scmp.ge.s32.totalorder %s31, 4
      %s38 = sphi 0, %s50
      %s39 = sphi 0, %s46
      %s40 = sphi 0, %s38
      %s41 = sphi 0, %s39
      %s42 = sphi 0, %s40
      %s43 = sphi 0, %s41
      %s55 = sphi 0, %s57
      %s58 = sphi 0, %s55
      %s59 = sphi 0, %s58
      %s75 = sphi 0, %s59
      %s81 = sphi 0, %s83
      %s84 = sphi 0, %s81
      %s85 = sphi 0, %s84
      %s101 = sphi 0, %s85
      %s107 = sphi 0, %s109
      %s110 = sphi 0, %s107
      %s111 = sphi 0, %s110
      %s127 = sphi 0, %s111
      %s131 = sphi 0, %s131
      %s133 = sphi 0, %s131
      %s134 = sphi 0, %s133
      %s148 = sphi 0, %s134
      %s152 = sphi 0, %s152
      %s154 = sphi 0, %s152
      %s155 = sphi 0, %s154
      %s169 = sphi 0, %s155
      %s173 = sphi 0, %s173
      %s175 = sphi 0, %s173
      %s176 = sphi 0, %s175
      %s190 = sphi 0, %s176
      %s194 = sphi 0, %s194
      %s196 = sphi 0, %s194
      %s197 = sphi 0, %s196
      %s211 = sphi 0, %s197
      %s215 = sphi 0, %s215
      %s217 = sphi 0, %s215
      %s218 = sphi 0, %s217
      %s232 = sphi 0, %s218
      %s236 = sphi 0, %s236
      %s238 = sphi 0, %s236
      %s239 = sphi 0, %s238
      %s253 = sphi 0, %s239
      %s257 = sphi 0, %s257
      %s259 = sphi 0, %s257
      %s260 = sphi 0, %s259
      %s274 = sphi 0, %s260
      %s278 = sphi 0, %s278
      %s280 = sphi 0, %s278
      %s281 = sphi 0, %s280
      %s295 = sphi 0, %s281
      %s299 = sphi 0, %s299
      %s301 = sphi 0, %s299
      %s302 = sphi 0, %s301
      %s316 = sphi 0, %s302
      %s320 = sphi 0, %s320
      %s322 = sphi 0, %s320
      %s323 = sphi 0, %s322
      %s337 = sphi 0, %s323
      %s345 = sphi 0, %s347
      %s348 = sphi 0, %s345
      %s349 = sphi 0, %s348
      %s365 = sphi 0, %s349
    $region4: #{tpu_custom_call.1} parent=1 // loop_header_branch
      %34 = sbr.rel (%p32) target = $region8
    $region5: #{tpu_custom_call.1} parent=1 // loop_body
      %s36 = ssub.s32 %s31, 1
      %s37 = ssub.s32 %s31, 2
      %s44 = sadd.s32 1, %s39
      %p45 = scmp.ge.s32.totalorder %s44, 1
      %s46 = scalar_select %p45, 0, %s44
      %s47 = sadd.s32 1, %s38
      %s48 = scalar_select %p45, %s47, %s38
      %p49 = scmp.ge.s32.totalorder %s48, 2
      %s50 = scalar_select %p49, 0, %s48
      %s51 = ssub.s32 %s38, %s50
      %s52 = ssub.s32 %s39, %s46
      %s53 = sor.u32 %s51, %s52
      %p54 = scmp.eq.s32.totalorder %s53, 0
      %s56 = sadd.s32 %s55, 1
      %s57 = scalar_select %p54, %s55, %s56
      %p60 = pneg %p54
      %p61 = scmp.eq.s32.totalorder %s31, 1
      %p62 = por %p60, %p61
      %p63 = scmp.ne.s32.totalorder %s55, %s58
      %p64 = scmp.eq.s32.totalorder %s31, 0
      %p65 = por %p63, %p64
      %p66 = scmp.ne.s32.totalorder %s55, %s58
      %p67 = scmp.eq.s32.totalorder %s36, 1
      %p68 = por %p66, %p67
      %p69 = scmp.ne.s32.totalorder %s58, %s59
      %p70 = scmp.eq.s32.totalorder %s36, 0
      %p71 = por %p69, %p70
      %p72 = scmp.ne.s32.totalorder %s58, %s59
      %p73 = scmp.eq.s32.totalorder %s37, 1
      %p74 = por %p72, %p73
      %p76 = scmp.ne.s32.totalorder %s59, %s75
      %p77 = scmp.eq.s32.totalorder %s37, 0
      %p78 = por %p76, %p77
      %s79 = ssub.s32 %s38, %s50
      %p80 = scmp.eq.s32.totalorder %s79, 0
      %s82 = sadd.s32 %s81, 1
      %s83 = scalar_select %p80, %s81, %s82
      %p86 = pneg %p80
      %p87 = scmp.eq.s32.totalorder %s31, 1
      %p88 = por %p86, %p87
      %p89 = scmp.ne.s32.totalorder %s81, %s84
      %p90 = scmp.eq.s32.totalorder %s31, 0
      %p91 = por %p89, %p90
      %p92 = scmp.ne.s32.totalorder %s81, %s84
      %p93 = scmp.eq.s32.totalorder %s36, 1
      %p94 = por %p92, %p93
      %p95 = scmp.ne.s32.totalorder %s84, %s85
      %p96 = scmp.eq.s32.totalorder %s36, 0
      %p97 = por %p95, %p96
      %p98 = scmp.ne.s32.totalorder %s84, %s85
      %p99 = scmp.eq.s32.totalorder %s37, 1
      %p100 = por %p98, %p99
      %p102 = scmp.ne.s32.totalorder %s85, %s101
      %p103 = scmp.eq.s32.totalorder %s37, 0
      %p104 = por %p102, %p103
      %s105 = ssub.s32 %s38, %s50
      %p106 = scmp.eq.s32.totalorder %s105, 0
      %s108 = sadd.s32 %s107, 1
      %s109 = scalar_select %p106, %s107, %s108
      %p112 = pneg %p106
      %p113 = scmp.eq.s32.totalorder %s31, 1
      %p114 = por %p112, %p113
      %p115 = scmp.ne.s32.totalorder %s107, %s110
      %p116 = scmp.eq.s32.totalorder %s31, 0
      %p117 = por %p115, %p116
      %p118 = scmp.ne.s32.totalorder %s107, %s110
      %p119 = scmp.eq.s32.totalorder %s36, 1
      %p120 = por %p118, %p119
      %p121 = scmp.ne.s32.totalorder %s110, %s111
      %p122 = scmp.eq.s32.totalorder %s36, 0
      %p123 = por %p121, %p122
      %p124 = scmp.ne.s32.totalorder %s110, %s111
      %p125 = scmp.eq.s32.totalorder %s37, 1
      %p126 = por %p124, %p125
      %p128 = scmp.ne.s32.totalorder %s111, %s127
      %p129 = scmp.eq.s32.totalorder %s37, 0
      %p130 = por %p128, %p129
      %s132 = sadd.s32 %s131, 1
      %p135 = scmp.eq.s32.totalorder %s31, 1
      %p136 = scmp.ne.s32.totalorder %s131, %s133
      %p137 = scmp.eq.s32.totalorder %s31, 0
      %p138 = por %p136, %p137
      %p139 = scmp.ne.s32.totalorder %s131, %s133
      %p140 = scmp.eq.s32.totalorder %s36, 1
      %p141 = por %p139, %p140
      %p142 = scmp.ne.s32.totalorder %s133, %s134
      %p143 = scmp.eq.s32.totalorder %s36, 0
      %p144 = por %p142, %p143
      %p145 = scmp.ne.s32.totalorder %s133, %s134
      %p146 = scmp.eq.s32.totalorder %s37, 1
      %p147 = por %p145, %p146
      %p149 = scmp.ne.s32.totalorder %s134, %s148
      %p150 = scmp.eq.s32.totalorder %s37, 0
      %p151 = por %p149, %p150
      %s153 = sadd.s32 %s152, 1
      %p156 = scmp.eq.s32.totalorder %s31, 1
      %p157 = scmp.ne.s32.totalorder %s152, %s154
      %p158 = scmp.eq.s32.totalorder %s31, 0
      %p159 = por %p157, %p158
      %p160 = scmp.ne.s32.totalorder %s152, %s154
      %p161 = scmp.eq.s32.totalorder %s36, 1
      %p162 = por %p160, %p161
      %p163 = scmp.ne.s32.totalorder %s154, %s155
      %p164 = scmp.eq.s32.totalorder %s36, 0
      %p165 = por %p163, %p164
      %p166 = scmp.ne.s32.totalorder %s154, %s155
      %p167 = scmp.eq.s32.totalorder %s37, 1
      %p168 = por %p166, %p167
      %p170 = scmp.ne.s32.totalorder %s155, %s169
      %p171 = scmp.eq.s32.totalorder %s37, 0
      %p172 = por %p170, %p171
      %s174 = sadd.s32 %s173, 1
      %p177 = scmp.eq.s32.totalorder %s31, 1
      %p178 = scmp.ne.s32.totalorder %s173, %s175
      %p179 = scmp.eq.s32.totalorder %s31, 0
      %p180 = por %p178, %p179
      %p181 = scmp.ne.s32.totalorder %s173, %s175
      %p182 = scmp.eq.s32.totalorder %s36, 1
      %p183 = por %p181, %p182
      %p184 = scmp.ne.s32.totalorder %s175, %s176
      %p185 = scmp.eq.s32.totalorder %s36, 0
      %p186 = por %p184, %p185
      %p187 = scmp.ne.s32.totalorder %s175, %s176
      %p188 = scmp.eq.s32.totalorder %s37, 1
      %p189 = por %p187, %p188
      %p191 = scmp.ne.s32.totalorder %s176, %s190
      %p192 = scmp.eq.s32.totalorder %s37, 0
      %p193 = por %p191, %p192
      %s195 = sadd.s32 %s194, 1
      %p198 = scmp.eq.s32.totalorder %s31, 1
      %p199 = scmp.ne.s32.totalorder %s194, %s196
      %p200 = scmp.eq.s32.totalorder %s31, 0
      %p201 = por %p199, %p200
      %p202 = scmp.ne.s32.totalorder %s194, %s196
      %p203 = scmp.eq.s32.totalorder %s36, 1
      %p204 = por %p202, %p203
      %p205 = scmp.ne.s32.totalorder %s196, %s197
      %p206 = scmp.eq.s32.totalorder %s36, 0
      %p207 = por %p205, %p206
      %p208 = scmp.ne.s32.totalorder %s196, %s197
      %p209 = scmp.eq.s32.totalorder %s37, 1
      %p210 = por %p208, %p209
      %p212 = scmp.ne.s32.totalorder %s197, %s211
      %p213 = scmp.eq.s32.totalorder %s37, 0
      %p214 = por %p212, %p213
      %s216 = sadd.s32 %s215, 1
      %p219 = scmp.eq.s32.totalorder %s31, 1
      %p220 = scmp.ne.s32.totalorder %s215, %s217
      %p221 = scmp.eq.s32.totalorder %s31, 0
      %p222 = por %p220, %p221
      %p223 = scmp.ne.s32.totalorder %s215, %s217
      %p224 = scmp.eq.s32.totalorder %s36, 1
      %p225 = por %p223, %p224
      %p226 = scmp.ne.s32.totalorder %s217, %s218
      %p227 = scmp.eq.s32.totalorder %s36, 0
      %p228 = por %p226, %p227
      %p229 = scmp.ne.s32.totalorder %s217, %s218
      %p230 = scmp.eq.s32.totalorder %s37, 1
      %p231 = por %p229, %p230
      %p233 = scmp.ne.s32.totalorder %s218, %s232
      %p234 = scmp.eq.s32.totalorder %s37, 0
      %p235 = por %p233, %p234
      %s237 = sadd.s32 %s236, 1
      %p240 = scmp.eq.s32.totalorder %s31, 1
      %p241 = scmp.ne.s32.totalorder %s236, %s238
      %p242 = scmp.eq.s32.totalorder %s31, 0
      %p243 = por %p241, %p242
      %p244 = scmp.ne.s32.totalorder %s236, %s238
      %p245 = scmp.eq.s32.totalorder %s36, 1
      %p246 = por %p244, %p245
      %p247 = scmp.ne.s32.totalorder %s238, %s239
      %p248 = scmp.eq.s32.totalorder %s36, 0
      %p249 = por %p247, %p248
      %p250 = scmp.ne.s32.totalorder %s238, %s239
      %p251 = scmp.eq.s32.totalorder %s37, 1
      %p252 = por %p250, %p251
      %p254 = scmp.ne.s32.totalorder %s239, %s253
      %p255 = scmp.eq.s32.totalorder %s37, 0
      %p256 = por %p254, %p255
      %s258 = sadd.s32 %s257, 1
      %p261 = scmp.eq.s32.totalorder %s31, 1
      %p262 = scmp.ne.s32.totalorder %s257, %s259
      %p263 = scmp.eq.s32.totalorder %s31, 0
      %p264 = por %p262, %p263
      %p265 = scmp.ne.s32.totalorder %s257, %s259
      %p266 = scmp.eq.s32.totalorder %s36, 1
      %p267 = por %p265, %p266
      %p268 = scmp.ne.s32.totalorder %s259, %s260
      %p269 = scmp.eq.s32.totalorder %s36, 0
      %p270 = por %p268, %p269
      %p271 = scmp.ne.s32.totalorder %s259, %s260
      %p272 = scmp.eq.s32.totalorder %s37, 1
      %p273 = por %p271, %p272
      %p275 = scmp.ne.s32.totalorder %s260, %s274
      %p276 = scmp.eq.s32.totalorder %s37, 0
      %p277 = por %p275, %p276
      %s279 = sadd.s32 %s278, 1
      %p282 = scmp.eq.s32.totalorder %s31, 1
      %p283 = scmp.ne.s32.totalorder %s278, %s280
      %p284 = scmp.eq.s32.totalorder %s31, 0
      %p285 = por %p283, %p284
      %p286 = scmp.ne.s32.totalorder %s278, %s280
      %p287 = scmp.eq.s32.totalorder %s36, 1
      %p288 = por %p286, %p287
      %p289 = scmp.ne.s32.totalorder %s280, %s281
      %p290 = scmp.eq.s32.totalorder %s36, 0
      %p291 = por %p289, %p290
      %p292 = scmp.ne.s32.totalorder %s280, %s281
      %p293 = scmp.eq.s32.totalorder %s37, 1
      %p294 = por %p292, %p293
      %p296 = scmp.ne.s32.totalorder %s281, %s295
      %p297 = scmp.eq.s32.totalorder %s37, 0
      %p298 = por %p296, %p297
      %s300 = sadd.s32 %s299, 1
      %p303 = scmp.eq.s32.totalorder %s31, 1
      %p304 = scmp.ne.s32.totalorder %s299, %s301
      %p305 = scmp.eq.s32.totalorder %s31, 0
      %p306 = por %p304, %p305
      %p307 = scmp.ne.s32.totalorder %s299, %s301
      %p308 = scmp.eq.s32.totalorder %s36, 1
      %p309 = por %p307, %p308
      %p310 = scmp.ne.s32.totalorder %s301, %s302
      %p311 = scmp.eq.s32.totalorder %s36, 0
      %p312 = por %p310, %p311
      %p313 = scmp.ne.s32.totalorder %s301, %s302
      %p314 = scmp.eq.s32.totalorder %s37, 1
      %p315 = por %p313, %p314
      %p317 = scmp.ne.s32.totalorder %s302, %s316
      %p318 = scmp.eq.s32.totalorder %s37, 0
      %p319 = por %p317, %p318
      %s321 = sadd.s32 %s320, 1
      %p324 = scmp.eq.s32.totalorder %s31, 1
      %p325 = scmp.ne.s32.totalorder %s320, %s322
      %p326 = scmp.eq.s32.totalorder %s31, 0
      %p327 = por %p325, %p326
      %p328 = scmp.ne.s32.totalorder %s320, %s322
      %p329 = scmp.eq.s32.totalorder %s36, 1
      %p330 = por %p328, %p329
      %p331 = scmp.ne.s32.totalorder %s322, %s323
      %p332 = scmp.eq.s32.totalorder %s36, 0
      %p333 = por %p331, %p332
      %p334 = scmp.ne.s32.totalorder %s322, %s323
      %p335 = scmp.eq.s32.totalorder %s37, 1
      %p336 = por %p334, %p335
      %p338 = scmp.ne.s32.totalorder %s323, %s337
      %p339 = scmp.eq.s32.totalorder %s37, 0
      %p340 = por %p338, %p339
      %s341 = ssub.s32 %s38, %s50
      %s342 = ssub.s32 %s39, %s46
      %s343 = sor.u32 %s341, %s342
      %p344 = scmp.eq.s32.totalorder %s343, 0
      %s346 = sadd.s32 %s345, 1
      %s347 = scalar_select %p344, %s345, %s346
      %p350 = pneg %p344
      %p351 = scmp.eq.s32.totalorder %s31, 1
      %p352 = por %p350, %p351
      %p353 = scmp.ne.s32.totalorder %s345, %s348
      %p354 = scmp.eq.s32.totalorder %s31, 0
      %p355 = por %p353, %p354
      %p356 = scmp.ne.s32.totalorder %s345, %s348
      %p357 = scmp.eq.s32.totalorder %s36, 1
      %p358 = por %p356, %p357
      %p359 = scmp.ne.s32.totalorder %s348, %s349
      %p360 = scmp.eq.s32.totalorder %s36, 0
      %p361 = por %p359, %p360
      %p362 = scmp.ne.s32.totalorder %s348, %s349
      %p363 = scmp.eq.s32.totalorder %s37, 1
      %p364 = por %p362, %p363
      %p366 = scmp.ne.s32.totalorder %s349, %s365
      %p367 = scmp.eq.s32.totalorder %s37, 0
      %p368 = por %p366, %p367
      %p369 = scmp.le.s32.totalorder 1, %s31
      %p370 = scmp.lt.s32.totalorder %s31, 3
      %p371 = pnand %p369, %p370
      %p372 = pneg %p371
      // Predicated region
      $region9: #{tpu_custom_call.1} parent=5 // pred_check
        _
      $region10: #{tpu_custom_call.1} parent=5 // pred_check_branch
        %374 = sbr.rel (%p371) target = $region12
      $region11: #{tpu_custom_call.1} parent=5 // pred_region
        %s375 = ssub.s32 %s31, 1
        // Predicated region
        $region13: #{tpu_custom_call.1} parent=11 // pred_check
          %p376 = pneg %p144
        $region14: #{tpu_custom_call.1} parent=11 // pred_check_branch
          %378 = sbr.rel (%p376) target = $region16
        $region15: #{tpu_custom_call.1} parent=11 // pred_region
          _
        $region16: #{tpu_custom_call.1} parent=11 // pred_fallthru
          _
        // Predicated region
        $region17: #{tpu_custom_call.1} parent=11 // pred_check
          %p379 = pneg %p165
        $region18: #{tpu_custom_call.1} parent=11 // pred_check_branch
          %381 = sbr.rel (%p379) target = $region20
        $region19: #{tpu_custom_call.1} parent=11 // pred_region
          %s383 = ssub.s32 1024, 1024
          %384 = vsyncadd [#allocation9], %s383
          %s385 = sshll.u32 [#allocation8], 4
          %s386 = int_to_ptr.vmem [resolvable:$true] %s385
          %391 = dma.hbm_to_vmem [thread:$0]  %s4, 1024, %s386, [#allocation9], 64, 64, 4
        $region20: #{tpu_custom_call.1} parent=11 // pred_fallthru
          _
        // Predicated region
        $region21: #{tpu_custom_call.1} parent=11 // pred_check
          %p392 = pneg %p186
        $region22: #{tpu_custom_call.1} parent=11 // pred_check_branch
          %394 = sbr.rel (%p392) target = $region24
        $region23: #{tpu_custom_call.1} parent=11 // pred_region
          _
        $region24: #{tpu_custom_call.1} parent=11 // pred_fallthru
          _
        // Predicated region
        $region25: #{tpu_custom_call.1} parent=11 // pred_check
          %p395 = pneg %p207
        $region26: #{tpu_custom_call.1} parent=11 // pred_check_branch
          %397 = sbr.rel (%p395) target = $region28
        $region27: #{tpu_custom_call.1} parent=11 // pred_region
          %s399 = ssub.s32 1024, 1024
          %400 = vsyncadd [#allocation9], %s399
          %s401 = sshll.u32 [#allocation10], 4
          %s402 = int_to_ptr.vmem [resolvable:$true] %s401
          %407 = dma.hbm_to_vmem [thread:$0]  %s6, 1024, %s402, [#allocation9], 64, 64, 4
        $region28: #{tpu_custom_call.1} parent=11 // pred_fallthru
          _
        // Predicated region
        $region29: #{tpu_custom_call.1} parent=11 // pred_check
          %p408 = pneg %p228
        $region30: #{tpu_custom_call.1} parent=11 // pred_check_branch
          %410 = sbr.rel (%p408) target = $region32
        $region31: #{tpu_custom_call.1} parent=11 // pred_region
          _
        $region32: #{tpu_custom_call.1} parent=11 // pred_fallthru
          _
        // Predicated region
        $region33: #{tpu_custom_call.1} parent=11 // pred_check
          %p411 = pneg %p249
        $region34: #{tpu_custom_call.1} parent=11 // pred_check_branch
          %413 = sbr.rel (%p411) target = $region36
        $region35: #{tpu_custom_call.1} parent=11 // pred_region
          %s415 = ssub.s32 1024, 1024
          %416 = vsyncadd [#allocation12], %s415
          %s417 = sshll.u32 [#allocation11], 4
          %s418 = int_to_ptr.vmem [resolvable:$true] %s417
          %423 = dma.hbm_to_vmem [thread:$0]  %s8, 1024, %s418, [#allocation12], 64, 64, 4
        $region36: #{tpu_custom_call.1} parent=11 // pred_fallthru
          _
        // Predicated region
        $region37: #{tpu_custom_call.1} parent=11 // pred_check
          %p424 = pneg %p270
        $region38: #{tpu_custom_call.1} parent=11 // pred_check_branch
          %426 = sbr.rel (%p424) target = $region40
        $region39: #{tpu_custom_call.1} parent=11 // pred_region
          _
        $region40: #{tpu_custom_call.1} parent=11 // pred_fallthru
          _
        // Predicated region
        $region41: #{tpu_custom_call.1} parent=11 // pred_check
          %p427 = pneg %p291
        $region42: #{tpu_custom_call.1} parent=11 // pred_check_branch
          %429 = sbr.rel (%p427) target = $region44
        $region43: #{tpu_custom_call.1} parent=11 // pred_region
          %s431 = ssub.s32 1024, 1024
          %432 = vsyncadd [#allocation12], %s431
          %s433 = sshll.u32 [#allocation13], 4
          %s434 = int_to_ptr.vmem [resolvable:$true] %s433
          %439 = dma.hbm_to_vmem [thread:$0]  %s10, 1024, %s434, [#allocation12], 64, 64, 4
        $region44: #{tpu_custom_call.1} parent=11 // pred_fallthru
          _
        // Predicated region
        $region45: #{tpu_custom_call.1} parent=11 // pred_check
          %p440 = pneg %p312
        $region46: #{tpu_custom_call.1} parent=11 // pred_check_branch
          %442 = sbr.rel (%p440) target = $region48
        $region47: #{tpu_custom_call.1} parent=11 // pred_region
          %s444 = ssub.s32 1024, 1024
          %445 = vsyncadd [#allocation15], %s444
          %s446 = sshll.u32 [#allocation14], 4
          %s447 = int_to_ptr.vmem [resolvable:$true] %s446
          %452 = dma.hbm_to_vmem [thread:$0]  %s11, 1024, %s447, [#allocation15], 64, 64, 4
        $region48: #{tpu_custom_call.1} parent=11 // pred_fallthru
          _
        // Predicated region
        $region49: #{tpu_custom_call.1} parent=11 // pred_check
          %p453 = pneg %p333
        $region50: #{tpu_custom_call.1} parent=11 // pred_check_branch
          %455 = sbr.rel (%p453) target = $region52
        $region51: #{tpu_custom_call.1} parent=11 // pred_region
          _
        $region52: #{tpu_custom_call.1} parent=11 // pred_fallthru
          _
      $region12: #{tpu_custom_call.1} parent=5 // pred_fallthru
        _
      %p456 = scmp.lt.s32.totalorder %s31, 2
      // Predicated region
      $region53: #{tpu_custom_call.1} parent=5 // pred_check
        %p457 = pneg %p456
      $region54: #{tpu_custom_call.1} parent=5 // pred_check_branch
        %459 = sbr.rel (%p457) target = $region56
      $region55: #{tpu_custom_call.1} parent=5 // pred_region
        // Predicated region
        $region57: #{tpu_custom_call.1} parent=55 // pred_check
          %p460 = pneg %p65
        $region58: #{tpu_custom_call.1} parent=55 // pred_check_branch
          %462 = sbr.rel (%p460) target = $region60
        $region59: #{tpu_custom_call.1} parent=55 // pred_region
          %s463 = sand.u32 %s55, 1
          %s464 = scalar_lea.sflag [#allocation3], %s463
          %s465 = sand.u32 %s55, 1
          %s466 = smul.addr %s465, 128
          %s467 = scalar_lea.vmem [#allocation2], %s466
          %s468 = smul.u32 32, %s39
          %s470 = ssub.s32 2048, 2048
          %471 = vsyncadd %s464, %s470
          %s472 = smul.addr %s38, 32
          %s473 = sadd.s32 %s468, %s472
          %s474 = smul.addr %s473, 64
          %s475 = scalar_lea.hbm %s0, %s474
          %s476 = sshll.u32 %s467, 4
          %s477 = int_to_ptr.vmem [resolvable:$true] %s476
          %482 = dma.hbm_to_vmem [thread:$0]  %s475, 2048, %s477, %s464, 64, 64, 4
        $region60: #{tpu_custom_call.1} parent=55 // pred_fallthru
          _
        // Predicated region
        $region61: #{tpu_custom_call.1} parent=55 // pred_check
          %p483 = pneg %p91
        $region62: #{tpu_custom_call.1} parent=55 // pred_check_branch
          %485 = sbr.rel (%p483) target = $region64
        $region63: #{tpu_custom_call.1} parent=55 // pred_region
          %s486 = sand.u32 %s31, 1
          %s487 = scalar_lea.sflag [#allocation6], %s486
          %s488 = sand.u32 %s81, 1
          %s489 = smul.addr %s488, 64
          %s490 = scalar_lea.vmem [#allocation5], %s489
          %s492 = ssub.s32 1024, 1024
          %493 = vsyncadd %s487, %s492
          %s494 = smul.addr %s38, 16
          %s495 = smul.addr %s494, 64
          %s496 = scalar_lea.hbm %s1, %s495
          %s497 = sshll.u32 %s490, 4
          %s498 = int_to_ptr.vmem [resolvable:$true] %s497
          %503 = dma.hbm_to_vmem [thread:$0]  %s496, 1024, %s498, %s487, 64, 64, 4
        $region64: #{tpu_custom_call.1} parent=55 // pred_fallthru
          _
        // Predicated region
        $region65: #{tpu_custom_call.1} parent=55 // pred_check
          %p504 = pneg %p117
        $region66: #{tpu_custom_call.1} parent=55 // pred_check_branch
          %506 = sbr.rel (%p504) target = $region68
        $region67: #{tpu_custom_call.1} parent=55 // pred_region
          %s507 = sand.u32 %s31, 1
          %s508 = scalar_lea.sflag [#allocation6], %s507
          %s509 = sand.u32 %s107, 1
          %s510 = smul.addr %s509, 64
          %s511 = scalar_lea.vmem [#allocation7], %s510
          %s513 = ssub.s32 1024, 1024
          %514 = vsyncadd %s508, %s513
          %s515 = smul.addr %s38, 16
          %s516 = smul.addr %s515, 64
          %s517 = scalar_lea.hbm %s2, %s516
          %s518 = sshll.u32 %s511, 4
          %s519 = int_to_ptr.vmem [resolvable:$true] %s518
          %524 = dma.hbm_to_vmem [thread:$0]  %s517, 1024, %s519, %s508, 64, 64, 4
        $region68: #{tpu_custom_call.1} parent=55 // pred_fallthru
          _
      $region56: #{tpu_custom_call.1} parent=5 // pred_fallthru
        _
      %p525 = scmp.le.s32.totalorder 1, %s31
      %p526 = scmp.lt.s32.totalorder %s31, 3
      %p527 = pnand %p525, %p526
      %p528 = pneg %p527
      // Predicated region
      $region69: #{tpu_custom_call.1} parent=5 // pred_check
        _
      $region70: #{tpu_custom_call.1} parent=5 // pred_check_branch
        %530 = sbr.rel (%p527) target = $region72
      $region71: #{tpu_custom_call.1} parent=5 // pred_region
        %s531 = ssub.s32 %s31, 1
        %s532 = sand.u32 %s58, 1
        %s533 = scalar_lea.sflag [#allocation3], %s532
        %s534 = sand.u32 %s58, 1
        %s535 = smul.addr %s534, 128
        %s536 = scalar_lea.vmem [#allocation2], %s535
        // Predicated region
        $region73: #{tpu_custom_call.1} parent=71 // pred_check
          %p537 = pneg %p71
        $region74: #{tpu_custom_call.1} parent=71 // pred_check_branch
          %539 = sbr.rel (%p537) target = $region76
        $region75: #{tpu_custom_call.1} parent=71 // pred_region
          %540 = dma.done %s533, 2048
        $region76: #{tpu_custom_call.1} parent=71 // pred_fallthru
          _
        %s541 = sand.u32 %s36, 1
        %s542 = scalar_lea.sflag [#allocation6], %s541
        %s543 = sand.u32 %s84, 1
        %s544 = smul.addr %s543, 64
        %s545 = scalar_lea.vmem [#allocation5], %s544
        // Predicated region
        $region77: #{tpu_custom_call.1} parent=71 // pred_check
          %p546 = pneg %p97
        $region78: #{tpu_custom_call.1} parent=71 // pred_check_branch
          %548 = sbr.rel (%p546) target = $region80
        $region79: #{tpu_custom_call.1} parent=71 // pred_region
          %549 = dma.done %s542, 1024
        $region80: #{tpu_custom_call.1} parent=71 // pred_fallthru
          _
        %s550 = sand.u32 %s36, 1
        %s551 = scalar_lea.sflag [#allocation6], %s550
        %s552 = sand.u32 %s110, 1
        %s553 = smul.addr %s552, 64
        %s554 = scalar_lea.vmem [#allocation7], %s553
        // Predicated region
        $region81: #{tpu_custom_call.1} parent=71 // pred_check
          %p555 = pneg %p123
        $region82: #{tpu_custom_call.1} parent=71 // pred_check_branch
          %557 = sbr.rel (%p555) target = $region84
        $region83: #{tpu_custom_call.1} parent=71 // pred_region
          %558 = dma.done %s551, 1024
        $region84: #{tpu_custom_call.1} parent=71 // pred_fallthru
          _
        // Predicated region
        $region85: #{tpu_custom_call.1} parent=71 // pred_check
          %p559 = pneg %p165
        $region86: #{tpu_custom_call.1} parent=71 // pred_check_branch
          %561 = sbr.rel (%p559) target = $region88
        $region87: #{tpu_custom_call.1} parent=71 // pred_region
          %562 = dma.done [#allocation9], 1024
        $region88: #{tpu_custom_call.1} parent=71 // pred_fallthru
          _
        // Predicated region
        $region89: #{tpu_custom_call.1} parent=71 // pred_check
          %p563 = pneg %p207
        $region90: #{tpu_custom_call.1} parent=71 // pred_check_branch
          %565 = sbr.rel (%p563) target = $region92
        $region91: #{tpu_custom_call.1} parent=71 // pred_region
          %566 = dma.done [#allocation9], 1024
        $region92: #{tpu_custom_call.1} parent=71 // pred_fallthru
          _
        // Predicated region
        $region93: #{tpu_custom_call.1} parent=71 // pred_check
          %p567 = pneg %p249
        $region94: #{tpu_custom_call.1} parent=71 // pred_check_branch
          %569 = sbr.rel (%p567) target = $region96
        $region95: #{tpu_custom_call.1} parent=71 // pred_region
          %570 = dma.done [#allocation12], 1024
        $region96: #{tpu_custom_call.1} parent=71 // pred_fallthru
          _
        // Predicated region
        $region97: #{tpu_custom_call.1} parent=71 // pred_check
          %p571 = pneg %p291
        $region98: #{tpu_custom_call.1} parent=71 // pred_check_branch
          %573 = sbr.rel (%p571) target = $region100
        $region99: #{tpu_custom_call.1} parent=71 // pred_region
          %574 = dma.done [#allocation12], 1024
        $region100: #{tpu_custom_call.1} parent=71 // pred_fallthru
          _
        // Predicated region
        $region101: #{tpu_custom_call.1} parent=71 // pred_check
          %p575 = pneg %p312
        $region102: #{tpu_custom_call.1} parent=71 // pred_check_branch
          %577 = sbr.rel (%p575) target = $region104
        $region103: #{tpu_custom_call.1} parent=71 // pred_region
          %578 = dma.done [#allocation15], 1024
        $region104: #{tpu_custom_call.1} parent=71 // pred_fallthru
          _
        %s579 = sand.u32 %s58, 1
        %s580 = scalar_lea.sflag [#allocation3], %s579
        %s581 = sand.u32 %s58, 1
        %s582 = smul.addr %s581, 128
        %s583 = scalar_lea.vmem [#allocation2], %s582
        %p584 = pneg %p71
        %p585 = pneg %p68
        %s586 = sand.u32 %s36, 1
        %s587 = scalar_lea.sflag [#allocation6], %s586
        %s588 = sand.u32 %s84, 1
        %s589 = smul.addr %s588, 64
        %s590 = scalar_lea.vmem [#allocation5], %s589
        %p591 = pneg %p97
        %p592 = pneg %p94
        %s593 = sand.u32 %s36, 1
        %s594 = scalar_lea.sflag [#allocation6], %s593
        %s595 = sand.u32 %s110, 1
        %s596 = smul.addr %s595, 64
        %s597 = scalar_lea.vmem [#allocation7], %s596
        %p598 = pneg %p123
        %p599 = pneg %p120
        %p600 = pneg %p144
        %p601 = pneg %p141
        %p602 = pneg %p165
        %p603 = pneg %p162
        %p604 = pneg %p186
        %p605 = pneg %p183
        %p606 = pneg %p207
        %p607 = pneg %p204
        %p608 = pneg %p228
        %p609 = pneg %p225
        %p610 = pneg %p249
        %p611 = pneg %p246
        %p612 = pneg %p270
        %p613 = pneg %p267
        %p614 = pneg %p291
        %p615 = pneg %p288
        %p616 = pneg %p312
        %p617 = pneg %p309
        %p618 = pneg %p333
        %p619 = pneg %p330
        %p620 = pneg %p361
        %p621 = pneg %p358
        %s622 = sand.u32 %s348, 1
        %s623 = scalar_lea.sflag [#allocation4], %s622
        %s624 = sand.u32 %s348, 1
        %s625 = smul.addr %s624, 128
        %s626 = scalar_lea.vmem [#allocation16], %s625
        %s627 = smul.u32 32, %s41
        %s628 = smul.u32 2, %s41
        %v630 = vld [vmem:[%s536] sm:$0xf]
        %v631 = vld [vmem:[%s536 + $0x4] sm:$0xf]
        %v632 = vld [vmem:[%s536 + $0x8] sm:$0xf]
        %v633 = vld [vmem:[%s536 + $0xc] sm:$0xf]
        %v634 = vld [vmem:[%s536 + $0x10] sm:$0xf]
        %v635 = vld [vmem:[%s536 + $0x14] sm:$0xf]
        %v636 = vld [vmem:[%s536 + $0x18] sm:$0xf]
        %v637 = vld [vmem:[%s536 + $0x1c] sm:$0xf]
        %v638 = vld [vmem:[%s536 + $0x20] sm:$0xf]
        %v639 = vld [vmem:[%s536 + $0x24] sm:$0xf]
        %v640 = vld [vmem:[%s536 + $0x28] sm:$0xf]
        %v641 = vld [vmem:[%s536 + $0x2c] sm:$0xf]
        %v642 = vld [vmem:[%s536 + $0x30] sm:$0xf]
        %v643 = vld [vmem:[%s536 + $0x34] sm:$0xf]
        %v644 = vld [vmem:[%s536 + $0x38] sm:$0xf]
        %v645 = vld [vmem:[%s536 + $0x3c] sm:$0xf]
        %v646 = vld [vmem:[%s536 + $0x40] sm:$0xf]
        %v647 = vld [vmem:[%s536 + $0x44] sm:$0xf]
        %v648 = vld [vmem:[%s536 + $0x48] sm:$0xf]
        %v649 = vld [vmem:[%s536 + $0x4c] sm:$0xf]
        %v650 = vld [vmem:[%s536 + $0x50] sm:$0xf]
        %v651 = vld [vmem:[%s536 + $0x54] sm:$0xf]
        %v652 = vld [vmem:[%s536 + $0x58] sm:$0xf]
        %v653 = vld [vmem:[%s536 + $0x5c] sm:$0xf]
        %v654 = vld [vmem:[%s536 + $0x60] sm:$0xf]
        %v655 = vld [vmem:[%s536 + $0x64] sm:$0xf]
        %v656 = vld [vmem:[%s536 + $0x68] sm:$0xf]
        %v657 = vld [vmem:[%s536 + $0x6c] sm:$0xf]
        %v658 = vld [vmem:[%s536 + $0x70] sm:$0xf]
        %v659 = vld [vmem:[%s536 + $0x74] sm:$0xf]
        %v660 = vld [vmem:[%s536 + $0x78] sm:$0xf]
        %v661 = vld [vmem:[%s536 + $0x7c] sm:$0xf]
        %v662 = vld [vmem:[%s545] sm:$0xf]
        %v663 = vld [vmem:[%s545 + $0x4] sm:$0xf]
        %v664 = vld [vmem:[%s545 + $0x8] sm:$0xf]
        %v665 = vld [vmem:[%s545 + $0xc] sm:$0xf]
        %v666 = vld [vmem:[%s545 + $0x10] sm:$0xf]
        %v667 = vld [vmem:[%s545 + $0x14] sm:$0xf]
        %v668 = vld [vmem:[%s545 + $0x18] sm:$0xf]
        %v669 = vld [vmem:[%s545 + $0x1c] sm:$0xf]
        %v670 = vld [vmem:[%s545 + $0x20] sm:$0xf]
        %v671 = vld [vmem:[%s545 + $0x24] sm:$0xf]
        %v672 = vld [vmem:[%s545 + $0x28] sm:$0xf]
        %v673 = vld [vmem:[%s545 + $0x2c] sm:$0xf]
        %v674 = vld [vmem:[%s545 + $0x30] sm:$0xf]
        %v675 = vld [vmem:[%s545 + $0x34] sm:$0xf]
        %v676 = vld [vmem:[%s545 + $0x38] sm:$0xf]
        %v677 = vld [vmem:[%s545 + $0x3c] sm:$0xf]
        %v678 = vld [vmem:[%s554] sm:$0xf]
        %v679 = vld [vmem:[%s554 + $0x4] sm:$0xf]
        %v680 = vld [vmem:[%s554 + $0x8] sm:$0xf]
        %v681 = vld [vmem:[%s554 + $0xc] sm:$0xf]
        %v682 = vld [vmem:[%s554 + $0x10] sm:$0xf]
        %v683 = vld [vmem:[%s554 + $0x14] sm:$0xf]
        %v684 = vld [vmem:[%s554 + $0x18] sm:$0xf]
        %v685 = vld [vmem:[%s554 + $0x1c] sm:$0xf]
        %v686 = vld [vmem:[%s554 + $0x20] sm:$0xf]
        %v687 = vld [vmem:[%s554 + $0x24] sm:$0xf]
        %v688 = vld [vmem:[%s554 + $0x28] sm:$0xf]
        %v689 = vld [vmem:[%s554 + $0x2c] sm:$0xf]
        %v690 = vld [vmem:[%s554 + $0x30] sm:$0xf]
        %v691 = vld [vmem:[%s554 + $0x34] sm:$0xf]
        %v692 = vld [vmem:[%s554 + $0x38] sm:$0xf]
        %v693 = vld [vmem:[%s554 + $0x3c] sm:$0xf]
        %v694 = vld [vmem:[#allocation8] sm:$0xf]
        %v695 = vld [vmem:[#allocation8 + $0x4] sm:$0xf]
        %v696 = vld [vmem:[#allocation8 + $0x8] sm:$0xf]
        %v697 = vld [vmem:[#allocation8 + $0xc] sm:$0xf]
        %v698 = vld [vmem:[#allocation8 + $0x10] sm:$0xf]
        %v699 = vld [vmem:[#allocation8 + $0x14] sm:$0xf]
        %v700 = vld [vmem:[#allocation8 + $0x18] sm:$0xf]
        %v701 = vld [vmem:[#allocation8 + $0x1c] sm:$0xf]
        %v702 = vld [vmem:[#allocation8 + $0x20] sm:$0xf]
        %v703 = vld [vmem:[#allocation8 + $0x24] sm:$0xf]
        %v704 = vld [vmem:[#allocation8 + $0x28] sm:$0xf]
        %v705 = vld [vmem:[#allocation8 + $0x2c] sm:$0xf]
        %v706 = vld [vmem:[#allocation8 + $0x30] sm:$0xf]
        %v707 = vld [vmem:[#allocation8 + $0x34] sm:$0xf]
        %v708 = vld [vmem:[#allocation8 + $0x38] sm:$0xf]
        %v709 = vld [vmem:[#allocation8 + $0x3c] sm:$0xf]
        %v710 = vld [vmem:[%s5] sm:$0x1]
        %v712 = vlaneseq
        %v713 = vshrl.u32 %v712, 7
        %v714 = vsub.s32 0, %v713
        %v715 = vrot.slane %v710, %v714
        %v749 = vunpack.c.l.b16 %v630
        %v750 = vunpack.c.l.b16 %v631
        %v751 = vunpack.c.l.b16 %v632
        %v752 = vunpack.c.l.b16 %v633
        %v753 = vunpack.c.l.b16 %v634
        %v754 = vunpack.c.l.b16 %v635
        %v755 = vunpack.c.l.b16 %v636
        %v756 = vunpack.c.l.b16 %v637
        %v757 = vunpack.c.l.b16 %v638
        %v758 = vunpack.c.l.b16 %v639
        %v759 = vunpack.c.l.b16 %v640
        %v760 = vunpack.c.l.b16 %v641
        %v761 = vunpack.c.l.b16 %v642
        %v762 = vunpack.c.l.b16 %v643
        %v763 = vunpack.c.l.b16 %v644
        %v764 = vunpack.c.l.b16 %v645
        %v765 = vunpack.c.l.b16 %v646
        %v766 = vunpack.c.l.b16 %v647
        %v767 = vunpack.c.l.b16 %v648
        %v768 = vunpack.c.l.b16 %v649
        %v769 = vunpack.c.l.b16 %v650
        %v770 = vunpack.c.l.b16 %v651
        %v771 = vunpack.c.l.b16 %v652
        %v772 = vunpack.c.l.b16 %v653
        %v773 = vunpack.c.l.b16 %v654
        %v774 = vunpack.c.l.b16 %v655
        %v775 = vunpack.c.l.b16 %v656
        %v776 = vunpack.c.l.b16 %v657
        %v777 = vunpack.c.l.b16 %v658
        %v778 = vunpack.c.l.b16 %v659
        %v779 = vunpack.c.l.b16 %v660
        %v780 = vunpack.c.l.b16 %v661
        %v781 = vpack.c.b16 %v750, %v749
        %v782 = vpack.c.b16 %v752, %v751
        %v783 = vpack.c.b16 %v754, %v753
        %v784 = vpack.c.b16 %v756, %v755
        %v785 = vpack.c.b16 %v758, %v757
        %v786 = vpack.c.b16 %v760, %v759
        %v787 = vpack.c.b16 %v762, %v761
        %v788 = vpack.c.b16 %v764, %v763
        %v789 = vpack.c.b16 %v766, %v765
        %v790 = vpack.c.b16 %v768, %v767
        %v791 = vpack.c.b16 %v770, %v769
        %v792 = vpack.c.b16 %v772, %v771
        %v793 = vpack.c.b16 %v774, %v773
        %v794 = vpack.c.b16 %v776, %v775
        %v795 = vpack.c.b16 %v778, %v777
        %v796 = vpack.c.b16 %v780, %v779
        %v829 = vunpack.c.l.b16 %v694
        %v830 = vunpack.c.l.b16 %v695
        %v831 = vunpack.c.l.b16 %v696
        %v832 = vunpack.c.l.b16 %v697
        %v833 = vunpack.c.l.b16 %v698
        %v834 = vunpack.c.l.b16 %v699
        %v835 = vunpack.c.l.b16 %v700
        %v836 = vunpack.c.l.b16 %v701
        %v837 = vunpack.c.l.b16 %v702
        %v838 = vunpack.c.l.b16 %v703
        %v839 = vunpack.c.l.b16 %v704
        %v840 = vunpack.c.l.b16 %v705
        %v841 = vunpack.c.l.b16 %v706
        %v842 = vunpack.c.l.b16 %v707
        %v843 = vunpack.c.l.b16 %v708
        %v844 = vunpack.c.l.b16 %v709
        %v845 = vpack.c.b16 %v830, %v829
        %v846 = vpack.c.b16 %v832, %v831
        %v847 = vpack.c.b16 %v834, %v833
        %v848 = vpack.c.b16 %v836, %v835
        %v849 = vpack.c.b16 %v838, %v837
        %v850 = vpack.c.b16 %v840, %v839
        %v851 = vpack.c.b16 %v842, %v841
        %v852 = vpack.c.b16 %v844, %v843
        %861 = vmatprep.subr.bf16.mxu0 0
        %862 = vmatpush1.bf16.msra.mxu0 %v845
        %863 = vmatprep.subr.bf16.mxu0 0
        %864 = vmatpush1.bf16.msra.mxu0 %v846
        %865 = vmatprep.subr.bf16.mxu0 0
        %866 = vmatpush1.bf16.msra.mxu0 %v847
        %867 = vmatprep.subr.bf16.mxu0 0
        %868 = vmatpush1.bf16.msra.mxu0 %v848
        %869 = vmatprep.subr.bf16.mxu0 0
        %870 = vmatpush1.bf16.msra.mxu0 %v849
        %871 = vmatprep.subr.bf16.mxu0 0
        %872 = vmatpush1.bf16.msra.mxu0 %v850
        %873 = vmatprep.subr.bf16.mxu0 0
        %874 = vmatpush1.bf16.msra.mxu0 %v851
        %875 = vmatprep.subr.bf16.mxu0 0
        %876 = vmatpush1.bf16.msra.mxu0 %v852
        %877 = vmatprep.subr.bf16.mxu0 0
        %878 = vmatpush1.bf16.msra.mxu0 0
        %879 = vmatprep.subr.bf16.mxu0 0
        %880 = vmatpush1.bf16.msra.mxu0 0
        %881 = vmatprep.subr.bf16.mxu0 0
        %882 = vmatpush1.bf16.msra.mxu0 0
        %883 = vmatprep.subr.bf16.mxu0 0
        %884 = vmatpush1.bf16.msra.mxu0 0
        %885 = vmatprep.subr.bf16.mxu0 0
        %886 = vmatpush1.bf16.msra.mxu0 0
        %887 = vmatprep.subr.bf16.mxu0 0
        %888 = vmatpush1.bf16.msra.mxu0 0
        %889 = vmatprep.subr.bf16.mxu0 0
        %890 = vmatpush1.bf16.msra.mxu0 0
        %891 = vmatprep.subr.bf16.mxu0 0
        %892 = vmatpush1.bf16.msra.mxu0 0
        %893 = vmatprep.mubr.bf16.mxu0 0
        %894 = vmatmul.mubr.bf16.gmra.mrb[0].mxu0 %v781
        %v895 = vpop.f32.mrb[0].mxu0
        %v896 = vadd.f32 %v715, %v895
        %v897 = vpop.f32.mrb[0].mxu0
        %v898 = vpop.f32.mrb[0].mxu0
        %v899 = vadd.f32 %v715, %v898
        %v900 = vpop.f32.mrb[0].mxu0
        %901 = vmatprep.mubr.bf16.mxu0 0
        %902 = vmatmul.mubr.bf16.gmra.mrb[0].mxu0 %v782
        %v903 = vpop.f32.mrb[0].mxu0
        %v904 = vadd.f32 %v715, %v903
        %v905 = vpop.f32.mrb[0].mxu0
        %v906 = vpop.f32.mrb[0].mxu0
        %v907 = vadd.f32 %v715, %v906
        %v908 = vpop.f32.mrb[0].mxu0
        %909 = vmatprep.mubr.bf16.mxu0 0
        %910 = vmatmul.mubr.bf16.gmra.mrb[0].mxu0 %v783
        %v911 = vpop.f32.mrb[0].mxu0
        %v912 = vadd.f32 %v715, %v911
        %v913 = vpop.f32.mrb[0].mxu0
        %v914 = vpop.f32.mrb[0].mxu0
        %v915 = vadd.f32 %v715, %v914
        %v916 = vpop.f32.mrb[0].mxu0
        %917 = vmatprep.mubr.bf16.mxu0 0
        %918 = vmatmul.mubr.bf16.gmra.mrb[0].mxu0 %v784
        %v919 = vpop.f32.mrb[0].mxu0
        %v920 = vadd.f32 %v715, %v919
        %v921 = vpop.f32.mrb[0].mxu0
        %v922 = vpop.f32.mrb[0].mxu0
        %v923 = vadd.f32 %v715, %v922
        %v924 = vpop.f32.mrb[0].mxu0
        %925 = vmatprep.mubr.bf16.mxu0 0
        %926 = vmatmul.mubr.bf16.gmra.mrb[0].mxu0 %v785
        %v927 = vpop.f32.mrb[0].mxu0
        %v928 = vadd.f32 %v715, %v927
        %v929 = vpop.f32.mrb[0].mxu0
        %v930 = vpop.f32.mrb[0].mxu0
        %v931 = vadd.f32 %v715, %v930
        %v932 = vpop.f32.mrb[0].mxu0
        %933 = vmatprep.mubr.bf16.mxu0 0
        %934 = vmatmul.mubr.bf16.gmra.mrb[0].mxu0 %v786
        %v935 = vpop.f32.mrb[0].mxu0
        %v936 = vadd.f32 %v715, %v935
        %v937 = vpop.f32.mrb[0].mxu0
        %v938 = vpop.f32.mrb[0].mxu0
        %v939 = vadd.f32 %v715, %v938
        %v940 = vpop.f32.mrb[0].mxu0
        %941 = vmatprep.mubr.bf16.mxu0 0
        %942 = vmatmul.mubr.bf16.gmra.mrb[0].mxu0 %v787
        %v943 = vpop.f32.mrb[0].mxu0
        %v944 = vadd.f32 %v715, %v943
        %v945 = vpop.f32.mrb[0].mxu0
        %v946 = vpop.f32.mrb[0].mxu0
        %v947 = vadd.f32 %v715, %v946
        %v948 = vpop.f32.mrb[0].mxu0
        %949 = vmatprep.mubr.bf16.mxu0 0
        %950 = vmatmul.mubr.bf16.gmra.mrb[0].mxu0 %v788
        %v951 = vpop.f32.mrb[0].mxu0
        %v952 = vadd.f32 %v715, %v951
        %v953 = vpop.f32.mrb[0].mxu0
        %v954 = vpop.f32.mrb[0].mxu0
        %v955 = vadd.f32 %v715, %v954
        %v956 = vpop.f32.mrb[0].mxu0
        %957 = vmatprep.mubr.bf16.mxu0 0
        %958 = vmatmul.mubr.bf16.gmra.mrb[0].mxu0 %v789
        %v959 = vpop.f32.mrb[0].mxu0
        %v960 = vadd.f32 %v715, %v959
        %v961 = vpop.f32.mrb[0].mxu0
        %v962 = vpop.f32.mrb[0].mxu0
        %v963 = vadd.f32 %v715, %v962
        %v964 = vpop.f32.mrb[0].mxu0
        %965 = vmatprep.mubr.bf16.mxu0 0
        %966 = vmatmul.mubr.bf16.gmra.mrb[0].mxu0 %v790
        %v967 = vpop.f32.mrb[0].mxu0
        %v968 = vadd.f32 %v715, %v967
        %v969 = vpop.f32.mrb[0].mxu0
        %v970 = vpop.f32.mrb[0].mxu0
        %v971 = vadd.f32 %v715, %v970
        %v972 = vpop.f32.mrb[0].mxu0
        %973 = vmatprep.mubr.bf16.mxu0 0
        %974 = vmatmul.mubr.bf16.gmra.mrb[0].mxu0 %v791
        %v975 = vpop.f32.mrb[0].mxu0
        %v976 = vadd.f32 %v715, %v975
        %v977 = vpop.f32.mrb[0].mxu0
        %v978 = vpop.f32.mrb[0].mxu0
        %v979 = vadd.f32 %v715, %v978
        %v980 = vpop.f32.mrb[0].mxu0
        %981 = vmatprep.mubr.bf16.mxu0 0
        %982 = vmatmul.mubr.bf16.gmra.mrb[0].mxu0 %v792
        %v983 = vpop.f32.mrb[0].mxu0
        %v984 = vadd.f32 %v715, %v983
        %v985 = vpop.f32.mrb[0].mxu0
        %v986 = vpop.f32.mrb[0].mxu0
        %v987 = vadd.f32 %v715, %v986
        %v988 = vpop.f32.mrb[0].mxu0
        %989 = vmatprep.mubr.bf16.mxu0 0
        %990 = vmatmul.mubr.bf16.gmra.mrb[0].mxu0 %v793
        %v991 = vpop.f32.mrb[0].mxu0
        %v992 = vadd.f32 %v715, %v991
        %v993 = vpop.f32.mrb[0].mxu0
        %v994 = vpop.f32.mrb[0].mxu0
        %v995 = vadd.f32 %v715, %v994
        %v996 = vpop.f32.mrb[0].mxu0
        %997 = vmatprep.mubr.bf16.mxu0 0
        %998 = vmatmul.mubr.bf16.gmra.mrb[0].mxu0 %v794
        %v999 = vpop.f32.mrb[0].mxu0
        %v1000 = vadd.f32 %v715, %v999
        %v1001 = vpop.f32.mrb[0].mxu0
        %v1002 = vpop.f32.mrb[0].mxu0
        %v1003 = vadd.f32 %v715, %v1002
        %v1004 = vpop.f32.mrb[0].mxu0
        %1005 = vmatprep.mubr.bf16.mxu0 0
        %1006 = vmatmul.mubr.bf16.gmra.mrb[0].mxu0 %v795
        %v1007 = vpop.f32.mrb[0].mxu0
        %v1008 = vadd.f32 %v715, %v1007
        %v1009 = vpop.f32.mrb[0].mxu0
        %v1010 = vpop.f32.mrb[0].mxu0
        %v1011 = vadd.f32 %v715, %v1010
        %v1012 = vpop.f32.mrb[0].mxu0
        %1013 = vmatprep.mubr.bf16.mxu0 0
        %1014 = vmatmul.mubr.bf16.gmra.mrb[0].mxu0 %v796
        %v1015 = vpop.f32.mrb[0].mxu0
        %v1016 = vadd.f32 %v715, %v1015
        %v1017 = vpop.f32.mrb[0].mxu0
        %v1018 = vpop.f32.mrb[0].mxu0
        %v1019 = vadd.f32 %v715, %v1018
        %v1020 = vpop.f32.mrb[0].mxu0
        %1021 = vdwg.mxu0
        %v1022 = vmax.f32 %v896, 0.0
        %v1023 = vmax.f32 %v899, 0.0
        %v1024 = vmax.f32 %v904, 0.0
        %v1025 = vmax.f32 %v907, 0.0
        %v1026 = vmax.f32 %v912, 0.0
        %v1027 = vmax.f32 %v915, 0.0
        %v1028 = vmax.f32 %v920, 0.0
        %v1029 = vmax.f32 %v923, 0.0
        %v1030 = vmax.f32 %v928, 0.0
        %v1031 = vmax.f32 %v931, 0.0
        %v1032 = vmax.f32 %v936, 0.0
        %v1033 = vmax.f32 %v939, 0.0
        %v1034 = vmax.f32 %v944, 0.0
        %v1035 = vmax.f32 %v947, 0.0
        %v1036 = vmax.f32 %v952, 0.0
        %v1037 = vmax.f32 %v955, 0.0
        %v1038 = vmax.f32 %v960, 0.0
        %v1039 = vmax.f32 %v963, 0.0
        %v1040 = vmax.f32 %v968, 0.0
        %v1041 = vmax.f32 %v971, 0.0
        %v1042 = vmax.f32 %v976, 0.0
        %v1043 = vmax.f32 %v979, 0.0
        %v1044 = vmax.f32 %v984, 0.0
        %v1045 = vmax.f32 %v987, 0.0
        %v1046 = vmax.f32 %v992, 0.0
        %v1047 = vmax.f32 %v995, 0.0
        %v1048 = vmax.f32 %v1000, 0.0
        %v1049 = vmax.f32 %v1003, 0.0
        %v1050 = vmax.f32 %v1008, 0.0
        %v1051 = vmax.f32 %v1011, 0.0
        %v1052 = vmax.f32 %v1016, 0.0
        %v1053 = vmax.f32 %v1019, 0.0
        %v1054 = vpack.c.bf16 %v1023, %v1022
        %v1055 = vpack.c.bf16 %v1025, %v1024
        %v1056 = vpack.c.bf16 %v1027, %v1026
        %v1057 = vpack.c.bf16 %v1029, %v1028
        %v1058 = vpack.c.bf16 %v1031, %v1030
        %v1059 = vpack.c.bf16 %v1033, %v1032
        %v1060 = vpack.c.bf16 %v1035, %v1034
        %v1061 = vpack.c.bf16 %v1037, %v1036
        %v1062 = vpack.c.bf16 %v1039, %v1038
        %v1063 = vpack.c.bf16 %v1041, %v1040
        %v1064 = vpack.c.bf16 %v1043, %v1042
        %v1065 = vpack.c.bf16 %v1045, %v1044
        %v1066 = vpack.c.bf16 %v1047, %v1046
        %v1067 = vpack.c.bf16 %v1049, %v1048
        %v1068 = vpack.c.bf16 %v1051, %v1050
        %v1069 = vpack.c.bf16 %v1053, %v1052
        %v1070 = vld [vmem:[#allocation10] sm:$0xf]
        %v1071 = vld [vmem:[#allocation10 + $0x4] sm:$0xf]
        %v1072 = vld [vmem:[#allocation10 + $0x8] sm:$0xf]
        %v1073 = vld [vmem:[#allocation10 + $0xc] sm:$0xf]
        %v1074 = vld [vmem:[#allocation10 + $0x10] sm:$0xf]
        %v1075 = vld [vmem:[#allocation10 + $0x14] sm:$0xf]
        %v1076 = vld [vmem:[#allocation10 + $0x18] sm:$0xf]
        %v1077 = vld [vmem:[#allocation10 + $0x1c] sm:$0xf]
        %v1078 = vld [vmem:[#allocation10 + $0x20] sm:$0xf]
        %v1079 = vld [vmem:[#allocation10 + $0x24] sm:$0xf]
        %v1080 = vld [vmem:[#allocation10 + $0x28] sm:$0xf]
        %v1081 = vld [vmem:[#allocation10 + $0x2c] sm:$0xf]
        %v1082 = vld [vmem:[#allocation10 + $0x30] sm:$0xf]
        %v1083 = vld [vmem:[#allocation10 + $0x34] sm:$0xf]
        %v1084 = vld [vmem:[#allocation10 + $0x38] sm:$0xf]
        %v1085 = vld [vmem:[#allocation10 + $0x3c] sm:$0xf]
        %v1086 = vld [vmem:[%s7] sm:$0x1]
        %v1088 = vlaneseq
        %v1089 = vshrl.u32 %v1088, 7
        %v1090 = vsub.s32 0, %v1089
        %v1091 = vrot.slane %v1086, %v1090
        %v1109 = vunpack.c.l.b16 %v1070
        %v1110 = vunpack.c.l.b16 %v1071
        %v1111 = vunpack.c.l.b16 %v1072
        %v1112 = vunpack.c.l.b16 %v1073
        %v1113 = vunpack.c.l.b16 %v1074
        %v1114 = vunpack.c.l.b16 %v1075
        %v1115 = vunpack.c.l.b16 %v1076
        %v1116 = vunpack.c.l.b16 %v1077
        %v1117 = vunpack.c.l.b16 %v1078
        %v1118 = vunpack.c.l.b16 %v1079
        %v1119 = vunpack.c.l.b16 %v1080
        %v1120 = vunpack.c.l.b16 %v1081
        %v1121 = vunpack.c.l.b16 %v1082
        %v1122 = vunpack.c.l.b16 %v1083
        %v1123 = vunpack.c.l.b16 %v1084
        %v1124 = vunpack.c.l.b16 %v1085
        %v1125 = vpack.c.b16 %v1110, %v1109
        %v1126 = vpack.c.b16 %v1112, %v1111
        %v1127 = vpack.c.b16 %v1114, %v1113
        %v1128 = vpack.c.b16 %v1116, %v1115
        %v1129 = vpack.c.b16 %v1118, %v1117
        %v1130 = vpack.c.b16 %v1120, %v1119
        %v1131 = vpack.c.b16 %v1122, %v1121
        %v1132 = vpack.c.b16 %v1124, %v1123
        %1141 = vmatprep.subr.bf16.mxu0 0
        %1142 = vmatpush1.bf16.msra.mxu0 %v1125
        %1143 = vmatprep.subr.bf16.mxu0 0
        %1144 = vmatpush1.bf16.msra.mxu0 %v1126
        %1145 = vmatprep.subr.bf16.mxu0 0
        %1146 = vmatpush1.bf16.msra.mxu0 %v1127
        %1147 = vmatprep.subr.bf16.mxu0 0
        %1148 = vmatpush1.bf16.msra.mxu0 %v1128
        %1149 = vmatprep.subr.bf16.mxu0 0
        %1150 = vmatpush1.bf16.msra.mxu0 %v1129
        %1151 = vmatprep.subr.bf16.mxu0 0
        %1152 = vmatpush1.bf16.msra.mxu0 %v1130
        %1153 = vmatprep.subr.bf16.mxu0 0
        %1154 = vmatpush1.bf16.msra.mxu0 %v1131
        %1155 = vmatprep.subr.bf16.mxu0 0
        %1156 = vmatpush1.bf16.msra.mxu0 %v1132
        %1157 = vmatprep.subr.bf16.mxu0 0
        %1158 = vmatpush1.bf16.msra.mxu0 0
        %1159 = vmatprep.subr.bf16.mxu0 0
        %1160 = vmatpush1.bf16.msra.mxu0 0
        %1161 = vmatprep.subr.bf16.mxu0 0
        %1162 = vmatpush1.bf16.msra.mxu0 0
        %1163 = vmatprep.subr.bf16.mxu0 0
        %1164 = vmatpush1.bf16.msra.mxu0 0
        %1165 = vmatprep.subr.bf16.mxu0 0
        %1166 = vmatpush1.bf16.msra.mxu0 0
        %1167 = vmatprep.subr.bf16.mxu0 0
        %1168 = vmatpush1.bf16.msra.mxu0 0
        %1169 = vmatprep.subr.bf16.mxu0 0
        %1170 = vmatpush1.bf16.msra.mxu0 0
        %1171 = vmatprep.subr.bf16.mxu0 0
        %1172 = vmatpush1.bf16.msra.mxu0 0
        %1173 = vmatprep.mubr.bf16.mxu0 0
        %1174 = vmatmul.mubr.bf16.gmra.mrb[0].mxu0 %v1054
        %v1175 = vpop.f32.mrb[0].mxu0
        %v1176 = vadd.f32 %v1091, %v1175
        %v1177 = vpop.f32.mrb[0].mxu0
        %v1178 = vpop.f32.mrb[0].mxu0
        %v1179 = vadd.f32 %v1091, %v1178
        %v1180 = vpop.f32.mrb[0].mxu0
        %1181 = vmatprep.mubr.bf16.mxu0 0
        %1182 = vmatmul.mubr.bf16.gmra.mrb[0].mxu0 %v1055
        %v1183 = vpop.f32.mrb[0].mxu0
        %v1184 = vadd.f32 %v1091, %v1183
        %v1185 = vpop.f32.mrb[0].mxu0
        %v1186 = vpop.f32.mrb[0].mxu0
        %v1187 = vadd.f32 %v1091, %v1186
        %v1188 = vpop.f32.mrb[0].mxu0
        %1189 = vmatprep.mubr.bf16.mxu0 0
        %1190 = vmatmul.mubr.bf16.gmra.mrb[0].mxu0 %v1056
        %v1191 = vpop.f32.mrb[0].mxu0
        %v1192 = vadd.f32 %v1091, %v1191
        %v1193 = vpop.f32.mrb[0].mxu0
        %v1194 = vpop.f32.mrb[0].mxu0
        %v1195 = vadd.f32 %v1091, %v1194
        %v1196 = vpop.f32.mrb[0].mxu0
        %1197 = vmatprep.mubr.bf16.mxu0 0
        %1198 = vmatmul.mubr.bf16.gmra.mrb[0].mxu0 %v1057
        %v1199 = vpop.f32.mrb[0].mxu0
        %v1200 = vadd.f32 %v1091, %v1199
        %v1201 = vpop.f32.mrb[0].mxu0
        %v1202 = vpop.f32.mrb[0].mxu0
        %v1203 = vadd.f32 %v1091, %v1202
        %v1204 = vpop.f32.mrb[0].mxu0
        %1205 = vmatprep.mubr.bf16.mxu0 0
        %1206 = vmatmul.mubr.bf16.gmra.mrb[0].mxu0 %v1058
        %v1207 = vpop.f32.mrb[0].mxu0
        %v1208 = vadd.f32 %v1091, %v1207
        %v1209 = vpop.f32.mrb[0].mxu0
        %v1210 = vpop.f32.mrb[0].mxu0
        %v1211 = vadd.f32 %v1091, %v1210
        %v1212 = vpop.f32.mrb[0].mxu0
        %1213 = vmatprep.mubr.bf16.mxu0 0
        %1214 = vmatmul.mubr.bf16.gmra.mrb[0].mxu0 %v1059
        %v1215 = vpop.f32.mrb[0].mxu0
        %v1216 = vadd.f32 %v1091, %v1215
        %v1217 = vpop.f32.mrb[0].mxu0
        %v1218 = vpop.f32.mrb[0].mxu0
        %v1219 = vadd.f32 %v1091, %v1218
        %v1220 = vpop.f32.mrb[0].mxu0
        %1221 = vmatprep.mubr.bf16.mxu0 0
        %1222 = vmatmul.mubr.bf16.gmra.mrb[0].mxu0 %v1060
        %v1223 = vpop.f32.mrb[0].mxu0
        %v1224 = vadd.f32 %v1091, %v1223
        %v1225 = vpop.f32.mrb[0].mxu0
        %v1226 = vpop.f32.mrb[0].mxu0
        %v1227 = vadd.f32 %v1091, %v1226
        %v1228 = vpop.f32.mrb[0].mxu0
        %1229 = vmatprep.mubr.bf16.mxu0 0
        %1230 = vmatmul.mubr.bf16.gmra.mrb[0].mxu0 %v1061
        %v1231 = vpop.f32.mrb[0].mxu0
        %v1232 = vadd.f32 %v1091, %v1231
        %v1233 = vpop.f32.mrb[0].mxu0
        %v1234 = vpop.f32.mrb[0].mxu0
        %v1235 = vadd.f32 %v1091, %v1234
        %v1236 = vpop.f32.mrb[0].mxu0
        %1237 = vmatprep.mubr.bf16.mxu0 0
        %1238 = vmatmul.mubr.bf16.gmra.mrb[0].mxu0 %v1062
        %v1239 = vpop.f32.mrb[0].mxu0
        %v1240 = vadd.f32 %v1091, %v1239
        %v1241 = vpop.f32.mrb[0].mxu0
        %v1242 = vpop.f32.mrb[0].mxu0
        %v1243 = vadd.f32 %v1091, %v1242
        %v1244 = vpop.f32.mrb[0].mxu0
        %1245 = vmatprep.mubr.bf16.mxu0 0
        %1246 = vmatmul.mubr.bf16.gmra.mrb[0].mxu0 %v1063
        %v1247 = vpop.f32.mrb[0].mxu0
        %v1248 = vadd.f32 %v1091, %v1247
        %v1249 = vpop.f32.mrb[0].mxu0
        %v1250 = vpop.f32.mrb[0].mxu0
        %v1251 = vadd.f32 %v1091, %v1250
        %v1252 = vpop.f32.mrb[0].mxu0
        %1253 = vmatprep.mubr.bf16.mxu0 0
        %1254 = vmatmul.mubr.bf16.gmra.mrb[0].mxu0 %v1064
        %v1255 = vpop.f32.mrb[0].mxu0
        %v1256 = vadd.f32 %v1091, %v1255
        %v1257 = vpop.f32.mrb[0].mxu0
        %v1258 = vpop.f32.mrb[0].mxu0
        %v1259 = vadd.f32 %v1091, %v1258
        %v1260 = vpop.f32.mrb[0].mxu0
        %1261 = vmatprep.mubr.bf16.mxu0 0
        %1262 = vmatmul.mubr.bf16.gmra.mrb[0].mxu0 %v1065
        %v1263 = vpop.f32.mrb[0].mxu0
        %v1264 = vadd.f32 %v1091, %v1263
        %v1265 = vpop.f32.mrb[0].mxu0
        %v1266 = vpop.f32.mrb[0].mxu0
        %v1267 = vadd.f32 %v1091, %v1266
        %v1268 = vpop.f32.mrb[0].mxu0
        %1269 = vmatprep.mubr.bf16.mxu0 0
        %1270 = vmatmul.mubr.bf16.gmra.mrb[0].mxu0 %v1066
        %v1271 = vpop.f32.mrb[0].mxu0
        %v1272 = vadd.f32 %v1091, %v1271
        %v1273 = vpop.f32.mrb[0].mxu0
        %v1274 = vpop.f32.mrb[0].mxu0
        %v1275 = vadd.f32 %v1091, %v1274
        %v1276 = vpop.f32.mrb[0].mxu0
        %1277 = vmatprep.mubr.bf16.mxu0 0
        %1278 = vmatmul.mubr.bf16.gmra.mrb[0].mxu0 %v1067
        %v1279 = vpop.f32.mrb[0].mxu0
        %v1280 = vadd.f32 %v1091, %v1279
        %v1281 = vpop.f32.mrb[0].mxu0
        %v1282 = vpop.f32.mrb[0].mxu0
        %v1283 = vadd.f32 %v1091, %v1282
        %v1284 = vpop.f32.mrb[0].mxu0
        %1285 = vmatprep.mubr.bf16.mxu0 0
        %1286 = vmatmul.mubr.bf16.gmra.mrb[0].mxu0 %v1068
        %v1287 = vpop.f32.mrb[0].mxu0
        %v1288 = vadd.f32 %v1091, %v1287
        %v1289 = vpop.f32.mrb[0].mxu0
        %v1290 = vpop.f32.mrb[0].mxu0
        %v1291 = vadd.f32 %v1091, %v1290
        %v1292 = vpop.f32.mrb[0].mxu0
        %1293 = vmatprep.mubr.bf16.mxu0 0
        %1294 = vmatmul.mubr.bf16.gmra.mrb[0].mxu0 %v1069
        %v1295 = vpop.f32.mrb[0].mxu0
        %v1296 = vadd.f32 %v1091, %v1295
        %v1297 = vpop.f32.mrb[0].mxu0
        %v1298 = vpop.f32.mrb[0].mxu0
        %v1299 = vadd.f32 %v1091, %v1298
        %v1300 = vpop.f32.mrb[0].mxu0
        %1301 = vdwg.mxu0
        %v1302 = vmax.f32 %v1176, 0.0
        %v1303 = vmax.f32 %v1179, 0.0
        %v1304 = vmax.f32 %v1184, 0.0
        %v1305 = vmax.f32 %v1187, 0.0
        %v1306 = vmax.f32 %v1192, 0.0
        %v1307 = vmax.f32 %v1195, 0.0
        %v1308 = vmax.f32 %v1200, 0.0
        %v1309 = vmax.f32 %v1203, 0.0
        %v1310 = vmax.f32 %v1208, 0.0
        %v1311 = vmax.f32 %v1211, 0.0
        %v1312 = vmax.f32 %v1216, 0.0
        %v1313 = vmax.f32 %v1219, 0.0
        %v1314 = vmax.f32 %v1224, 0.0
        %v1315 = vmax.f32 %v1227, 0.0
        %v1316 = vmax.f32 %v1232, 0.0
        %v1317 = vmax.f32 %v1235, 0.0
        %v1318 = vmax.f32 %v1240, 0.0
        %v1319 = vmax.f32 %v1243, 0.0
        %v1320 = vmax.f32 %v1248, 0.0
        %v1321 = vmax.f32 %v1251, 0.0
        %v1322 = vmax.f32 %v1256, 0.0
        %v1323 = vmax.f32 %v1259, 0.0
        %v1324 = vmax.f32 %v1264, 0.0
        %v1325 = vmax.f32 %v1267, 0.0
        %v1326 = vmax.f32 %v1272, 0.0
        %v1327 = vmax.f32 %v1275, 0.0
        %v1328 = vmax.f32 %v1280, 0.0
        %v1329 = vmax.f32 %v1283, 0.0
        %v1330 = vmax.f32 %v1288, 0.0
        %v1331 = vmax.f32 %v1291, 0.0
        %v1332 = vmax.f32 %v1296, 0.0
        %v1333 = vmax.f32 %v1299, 0.0
        %v1334 = vpack.c.bf16 %v1303, %v1302
        %v1335 = vpack.c.bf16 %v1305, %v1304
        %v1336 = vpack.c.bf16 %v1307, %v1306
        %v1337 = vpack.c.bf16 %v1309, %v1308
        %v1338 = vpack.c.bf16 %v1311, %v1310
        %v1339 = vpack.c.bf16 %v1313, %v1312
        %v1340 = vpack.c.bf16 %v1315, %v1314
        %v1341 = vpack.c.bf16 %v1317, %v1316
        %v1342 = vpack.c.bf16 %v1319, %v1318
        %v1343 = vpack.c.bf16 %v1321, %v1320
        %v1344 = vpack.c.bf16 %v1323, %v1322
        %v1345 = vpack.c.bf16 %v1325, %v1324
        %v1346 = vpack.c.bf16 %v1327, %v1326
        %v1347 = vpack.c.bf16 %v1329, %v1328
        %v1348 = vpack.c.bf16 %v1331, %v1330
        %v1349 = vpack.c.bf16 %v1333, %v1332
        %v1350 = vld [vmem:[%s3] sm:$0x1]
        %v1352 = vlaneseq
        %v1353 = vshrl.u32 %v1352, 7
        %v1354 = vsub.s32 0, %v1353
        %v1355 = vrot.slane %v1350, %v1354
        %v1373 = vunpack.c.l.b16 %v662
        %v1374 = vunpack.c.l.b16 %v663
        %v1375 = vunpack.c.l.b16 %v664
        %v1376 = vunpack.c.l.b16 %v665
        %v1377 = vunpack.c.l.b16 %v666
        %v1378 = vunpack.c.l.b16 %v667
        %v1379 = vunpack.c.l.b16 %v668
        %v1380 = vunpack.c.l.b16 %v669
        %v1381 = vunpack.c.l.b16 %v670
        %v1382 = vunpack.c.l.b16 %v671
        %v1383 = vunpack.c.l.b16 %v672
        %v1384 = vunpack.c.l.b16 %v673
        %v1385 = vunpack.c.l.b16 %v674
        %v1386 = vunpack.c.l.b16 %v675
        %v1387 = vunpack.c.l.b16 %v676
        %v1388 = vunpack.c.l.b16 %v677
        %v1389 = vpack.c.b16 %v1374, %v1373
        %v1390 = vpack.c.b16 %v1376, %v1375
        %v1391 = vpack.c.b16 %v1378, %v1377
        %v1392 = vpack.c.b16 %v1380, %v1379
        %v1393 = vpack.c.b16 %v1382, %v1381
        %v1394 = vpack.c.b16 %v1384, %v1383
        %v1395 = vpack.c.b16 %v1386, %v1385
        %v1396 = vpack.c.b16 %v1388, %v1387
        %1405 = vmatprep.subr.bf16.mxu0 0
        %1406 = vmatpush1.bf16.xpose.msra.mxu0 %v1389
        %1407 = vmatprep.subr.bf16.mxu0 0
        %1408 = vmatpush1.bf16.xpose.msra.mxu0 %v1390
        %1409 = vmatprep.subr.bf16.mxu0 0
        %1410 = vmatpush1.bf16.xpose.msra.mxu0 %v1391
        %1411 = vmatprep.subr.bf16.mxu0 0
        %1412 = vmatpush1.bf16.xpose.msra.mxu0 %v1392
        %1413 = vmatprep.subr.bf16.mxu0 0
        %1414 = vmatpush1.bf16.xpose.msra.mxu0 %v1393
        %1415 = vmatprep.subr.bf16.mxu0 0
        %1416 = vmatpush1.bf16.xpose.msra.mxu0 %v1394
        %1417 = vmatprep.subr.bf16.mxu0 0
        %1418 = vmatpush1.bf16.xpose.msra.mxu0 %v1395
        %1419 = vmatprep.subr.bf16.mxu0 0
        %1420 = vmatpush1.bf16.xpose.msra.mxu0 %v1396
        %1421 = vmatprep.subr.bf16.mxu0 0
        %1422 = vmatpush1.bf16.xpose.msra.mxu0 0
        %1423 = vmatprep.subr.bf16.mxu0 0
        %1424 = vmatpush1.bf16.xpose.msra.mxu0 0
        %1425 = vmatprep.subr.bf16.mxu0 0
        %1426 = vmatpush1.bf16.xpose.msra.mxu0 0
        %1427 = vmatprep.subr.bf16.mxu0 0
        %1428 = vmatpush1.bf16.xpose.msra.mxu0 0
        %1429 = vmatprep.subr.bf16.mxu0 0
        %1430 = vmatpush1.bf16.xpose.msra.mxu0 0
        %1431 = vmatprep.subr.bf16.mxu0 0
        %1432 = vmatpush1.bf16.xpose.msra.mxu0 0
        %1433 = vmatprep.subr.bf16.mxu0 0
        %1434 = vmatpush1.bf16.xpose.msra.mxu0 0
        %1435 = vmatprep.subr.bf16.mxu0 0
        %1436 = vmatpush1.bf16.xpose.msra.mxu0 0
        %1437 = vmatprep.mubr.bf16.mxu0 0
        %1438 = vmatmul.mubr.bf16.gmra.mrb[0].mxu0 %v1334
        %v1439 = vpop.f32.mrb[0].mxu0
        %v1440 = vadd.f32 %v1355, %v1439
        %v1441 = vpop.f32.mrb[0].mxu0
        %v1442 = vpop.f32.mrb[0].mxu0
        %v1443 = vadd.f32 %v1355, %v1442
        %v1444 = vpop.f32.mrb[0].mxu0
        %1445 = vmatprep.mubr.bf16.mxu0 0
        %1446 = vmatmul.mubr.bf16.gmra.mrb[0].mxu0 %v1335
        %v1447 = vpop.f32.mrb[0].mxu0
        %v1448 = vadd.f32 %v1355, %v1447
        %v1449 = vpop.f32.mrb[0].mxu0
        %v1450 = vpop.f32.mrb[0].mxu0
        %v1451 = vadd.f32 %v1355, %v1450
        %v1452 = vpop.f32.mrb[0].mxu0
        %1453 = vmatprep.mubr.bf16.mxu0 0
        %1454 = vmatmul.mubr.bf16.gmra.mrb[0].mxu0 %v1336
        %v1455 = vpop.f32.mrb[0].mxu0
        %v1456 = vadd.f32 %v1355, %v1455
        %v1457 = vpop.f32.mrb[0].mxu0
        %v1458 = vpop.f32.mrb[0].mxu0
        %v1459 = vadd.f32 %v1355, %v1458
        %v1460 = vpop.f32.mrb[0].mxu0
        %1461 = vmatprep.mubr.bf16.mxu0 0
        %1462 = vmatmul.mubr.bf16.gmra.mrb[0].mxu0 %v1337
        %v1463 = vpop.f32.mrb[0].mxu0
        %v1464 = vadd.f32 %v1355, %v1463
        %v1465 = vpop.f32.mrb[0].mxu0
        %v1466 = vpop.f32.mrb[0].mxu0
        %v1467 = vadd.f32 %v1355, %v1466
        %v1468 = vpop.f32.mrb[0].mxu0
        %1469 = vmatprep.mubr.bf16.mxu0 0
        %1470 = vmatmul.mubr.bf16.gmra.mrb[0].mxu0 %v1338
        %v1471 = vpop.f32.mrb[0].mxu0
        %v1472 = vadd.f32 %v1355, %v1471
        %v1473 = vpop.f32.mrb[0].mxu0
        %v1474 = vpop.f32.mrb[0].mxu0
        %v1475 = vadd.f32 %v1355, %v1474
        %v1476 = vpop.f32.mrb[0].mxu0
        %1477 = vmatprep.mubr.bf16.mxu0 0
        %1478 = vmatmul.mubr.bf16.gmra.mrb[0].mxu0 %v1339
        %v1479 = vpop.f32.mrb[0].mxu0
        %v1480 = vadd.f32 %v1355, %v1479
        %v1481 = vpop.f32.mrb[0].mxu0
        %v1482 = vpop.f32.mrb[0].mxu0
        %v1483 = vadd.f32 %v1355, %v1482
        %v1484 = vpop.f32.mrb[0].mxu0
        %1485 = vmatprep.mubr.bf16.mxu0 0
        %1486 = vmatmul.mubr.bf16.gmra.mrb[0].mxu0 %v1340
        %v1487 = vpop.f32.mrb[0].mxu0
        %v1488 = vadd.f32 %v1355, %v1487
        %v1489 = vpop.f32.mrb[0].mxu0
        %v1490 = vpop.f32.mrb[0].mxu0
        %v1491 = vadd.f32 %v1355, %v1490
        %v1492 = vpop.f32.mrb[0].mxu0
        %1493 = vmatprep.mubr.bf16.mxu0 0
        %1494 = vmatmul.mubr.bf16.gmra.mrb[0].mxu0 %v1341
        %v1495 = vpop.f32.mrb[0].mxu0
        %v1496 = vadd.f32 %v1355, %v1495
        %v1497 = vpop.f32.mrb[0].mxu0
        %v1498 = vpop.f32.mrb[0].mxu0
        %v1499 = vadd.f32 %v1355, %v1498
        %v1500 = vpop.f32.mrb[0].mxu0
        %1501 = vmatprep.mubr.bf16.mxu0 0
        %1502 = vmatmul.mubr.bf16.gmra.mrb[0].mxu0 %v1342
        %v1503 = vpop.f32.mrb[0].mxu0
        %v1504 = vadd.f32 %v1355, %v1503
        %v1505 = vpop.f32.mrb[0].mxu0
        %v1506 = vpop.f32.mrb[0].mxu0
        %v1507 = vadd.f32 %v1355, %v1506
        %v1508 = vpop.f32.mrb[0].mxu0
        %1509 = vmatprep.mubr.bf16.mxu0 0
        %1510 = vmatmul.mubr.bf16.gmra.mrb[0].mxu0 %v1343
        %v1511 = vpop.f32.mrb[0].mxu0
        %v1512 = vadd.f32 %v1355, %v1511
        %v1513 = vpop.f32.mrb[0].mxu0
        %v1514 = vpop.f32.mrb[0].mxu0
        %v1515 = vadd.f32 %v1355, %v1514
        %v1516 = vpop.f32.mrb[0].mxu0
        %1517 = vmatprep.mubr.bf16.mxu0 0
        %1518 = vmatmul.mubr.bf16.gmra.mrb[0].mxu0 %v1344
        %v1519 = vpop.f32.mrb[0].mxu0
        %v1520 = vadd.f32 %v1355, %v1519
        %v1521 = vpop.f32.mrb[0].mxu0
        %v1522 = vpop.f32.mrb[0].mxu0
        %v1523 = vadd.f32 %v1355, %v1522
        %v1524 = vpop.f32.mrb[0].mxu0
        %1525 = vmatprep.mubr.bf16.mxu0 0
        %1526 = vmatmul.mubr.bf16.gmra.mrb[0].mxu0 %v1345
        %v1527 = vpop.f32.mrb[0].mxu0
        %v1528 = vadd.f32 %v1355, %v1527
        %v1529 = vpop.f32.mrb[0].mxu0
        %v1530 = vpop.f32.mrb[0].mxu0
        %v1531 = vadd.f32 %v1355, %v1530
        %v1532 = vpop.f32.mrb[0].mxu0
        %1533 = vmatprep.mubr.bf16.mxu0 0
        %1534 = vmatmul.mubr.bf16.gmra.mrb[0].mxu0 %v1346
        %v1535 = vpop.f32.mrb[0].mxu0
        %v1536 = vadd.f32 %v1355, %v1535
        %v1537 = vpop.f32.mrb[0].mxu0
        %v1538 = vpop.f32.mrb[0].mxu0
        %v1539 = vadd.f32 %v1355, %v1538
        %v1540 = vpop.f32.mrb[0].mxu0
        %1541 = vmatprep.mubr.bf16.mxu0 0
        %1542 = vmatmul.mubr.bf16.gmra.mrb[0].mxu0 %v1347
        %v1543 = vpop.f32.mrb[0].mxu0
        %v1544 = vadd.f32 %v1355, %v1543
        %v1545 = vpop.f32.mrb[0].mxu0
        %v1546 = vpop.f32.mrb[0].mxu0
        %v1547 = vadd.f32 %v1355, %v1546
        %v1548 = vpop.f32.mrb[0].mxu0
        %1549 = vmatprep.mubr.bf16.mxu0 0
        %1550 = vmatmul.mubr.bf16.gmra.mrb[0].mxu0 %v1348
        %v1551 = vpop.f32.mrb[0].mxu0
        %v1552 = vadd.f32 %v1355, %v1551
        %v1553 = vpop.f32.mrb[0].mxu0
        %v1554 = vpop.f32.mrb[0].mxu0
        %v1555 = vadd.f32 %v1355, %v1554
        %v1556 = vpop.f32.mrb[0].mxu0
        %1557 = vmatprep.mubr.bf16.mxu0 0
        %1558 = vmatmul.mubr.bf16.gmra.mrb[0].mxu0 %v1349
        %v1559 = vpop.f32.mrb[0].mxu0
        %v1560 = vadd.f32 %v1355, %v1559
        %v1561 = vpop.f32.mrb[0].mxu0
        %v1562 = vpop.f32.mrb[0].mxu0
        %v1563 = vadd.f32 %v1355, %v1562
        %v1564 = vpop.f32.mrb[0].mxu0
        %1565 = vdwg.mxu0
        %1566 = vmax.xlane.f32.xlu0 %v1440
        %v1567 = vpop.xlane.xlu0 %1566
        %1568 = vmax.xlane.f32.xlu0 %v1443
        %v1569 = vpop.xlane.xlu0 %1568
        %1570 = vmax.xlane.f32.xlu0 %v1448
        %v1571 = vpop.xlane.xlu0 %1570
        %1572 = vmax.xlane.f32.xlu0 %v1451
        %v1573 = vpop.xlane.xlu0 %1572
        %1574 = vmax.xlane.f32.xlu0 %v1456
        %v1575 = vpop.xlane.xlu0 %1574
        %1576 = vmax.xlane.f32.xlu0 %v1459
        %v1577 = vpop.xlane.xlu0 %1576
        %1578 = vmax.xlane.f32.xlu0 %v1464
        %v1579 = vpop.xlane.xlu0 %1578
        %1580 = vmax.xlane.f32.xlu0 %v1467
        %v1581 = vpop.xlane.xlu0 %1580
        %1582 = vmax.xlane.f32.xlu0 %v1472
        %v1583 = vpop.xlane.xlu0 %1582
        %1584 = vmax.xlane.f32.xlu0 %v1475
        %v1585 = vpop.xlane.xlu0 %1584
        %1586 = vmax.xlane.f32.xlu0 %v1480
        %v1587 = vpop.xlane.xlu0 %1586
        %1588 = vmax.xlane.f32.xlu0 %v1483
        %v1589 = vpop.xlane.xlu0 %1588
        %1590 = vmax.xlane.f32.xlu0 %v1488
        %v1591 = vpop.xlane.xlu0 %1590
        %1592 = vmax.xlane.f32.xlu0 %v1491
        %v1593 = vpop.xlane.xlu0 %1592
        %1594 = vmax.xlane.f32.xlu0 %v1496
        %v1595 = vpop.xlane.xlu0 %1594
        %1596 = vmax.xlane.f32.xlu0 %v1499
        %v1597 = vpop.xlane.xlu0 %1596
        %1598 = vmax.xlane.f32.xlu0 %v1504
        %v1599 = vpop.xlane.xlu0 %1598
        %1600 = vmax.xlane.f32.xlu0 %v1507
        %v1601 = vpop.xlane.xlu0 %1600
        %1602 = vmax.xlane.f32.xlu0 %v1512
        %v1603 = vpop.xlane.xlu0 %1602
        %1604 = vmax.xlane.f32.xlu0 %v1515
        %v1605 = vpop.xlane.xlu0 %1604
        %1606 = vmax.xlane.f32.xlu0 %v1520
        %v1607 = vpop.xlane.xlu0 %1606
        %1608 = vmax.xlane.f32.xlu0 %v1523
        %v1609 = vpop.xlane.xlu0 %1608
        %1610 = vmax.xlane.f32.xlu0 %v1528
        %v1611 = vpop.xlane.xlu0 %1610
        %1612 = vmax.xlane.f32.xlu0 %v1531
        %v1613 = vpop.xlane.xlu0 %1612
        %1614 = vmax.xlane.f32.xlu0 %v1536
        %v1615 = vpop.xlane.xlu0 %1614
        %1616 = vmax.xlane.f32.xlu0 %v1539
        %v1617 = vpop.xlane.xlu0 %1616
        %1618 = vmax.xlane.f32.xlu0 %v1544
        %v1619 = vpop.xlane.xlu0 %1618
        %1620 = vmax.xlane.f32.xlu0 %v1547
        %v1621 = vpop.xlane.xlu0 %1620
        %1622 = vmax.xlane.f32.xlu0 %v1552
        %v1623 = vpop.xlane.xlu0 %1622
        %1624 = vmax.xlane.f32.xlu0 %v1555
        %v1625 = vpop.xlane.xlu0 %1624
        %1626 = vmax.xlane.f32.xlu0 %v1560
        %v1627 = vpop.xlane.xlu0 %1626
        %1628 = vmax.xlane.f32.xlu0 %v1563
        %v1629 = vpop.xlane.xlu0 %1628
        %v1630 = vsub.f32 %v1440, %v1567
        %v1631 = vsub.f32 %v1443, %v1569
        %v1632 = vsub.f32 %v1448, %v1571
        %v1633 = vsub.f32 %v1451, %v1573
        %v1634 = vsub.f32 %v1456, %v1575
        %v1635 = vsub.f32 %v1459, %v1577
        %v1636 = vsub.f32 %v1464, %v1579
        %v1637 = vsub.f32 %v1467, %v1581
        %v1638 = vsub.f32 %v1472, %v1583
        %v1639 = vsub.f32 %v1475, %v1585
        %v1640 = vsub.f32 %v1480, %v1587
        %v1641 = vsub.f32 %v1483, %v1589
        %v1642 = vsub.f32 %v1488, %v1591
        %v1643 = vsub.f32 %v1491, %v1593
        %v1644 = vsub.f32 %v1496, %v1595
        %v1645 = vsub.f32 %v1499, %v1597
        %v1646 = vsub.f32 %v1504, %v1599
        %v1647 = vsub.f32 %v1507, %v1601
        %v1648 = vsub.f32 %v1512, %v1603
        %v1649 = vsub.f32 %v1515, %v1605
        %v1650 = vsub.f32 %v1520, %v1607
        %v1651 = vsub.f32 %v1523, %v1609
        %v1652 = vsub.f32 %v1528, %v1611
        %v1653 = vsub.f32 %v1531, %v1613
        %v1654 = vsub.f32 %v1536, %v1615
        %v1655 = vsub.f32 %v1539, %v1617
        %v1656 = vsub.f32 %v1544, %v1619
        %v1657 = vsub.f32 %v1547, %v1621
        %v1658 = vsub.f32 %v1552, %v1623
        %v1659 = vsub.f32 %v1555, %v1625
        %v1660 = vsub.f32 %v1560, %v1627
        %v1661 = vsub.f32 %v1563, %v1629
        %v1662 = vmul.f32 %v1630, 1.442695
        %v1663 = vpow.pop %v1662
        %v1664 = vmul.f32 %v1631, 1.442695
        %v1665 = vpow.pop %v1664
        %v1666 = vmul.f32 %v1632, 1.442695
        %v1667 = vpow.pop %v1666
        %v1668 = vmul.f32 %v1633, 1.442695
        %v1669 = vpow.pop %v1668
        %v1670 = vmul.f32 %v1634, 1.442695
        %v1671 = vpow.pop %v1670
        %v1672 = vmul.f32 %v1635, 1.442695
        %v1673 = vpow.pop %v1672
        %v1674 = vmul.f32 %v1636, 1.442695
        %v1675 = vpow.pop %v1674
        %v1676 = vmul.f32 %v1637, 1.442695
        %v1677 = vpow.pop %v1676
        %v1678 = vmul.f32 %v1638, 1.442695
        %v1679 = vpow.pop %v1678
        %v1680 = vmul.f32 %v1639, 1.442695
        %v1681 = vpow.pop %v1680
        %v1682 = vmul.f32 %v1640, 1.442695
        %v1683 = vpow.pop %v1682
        %v1684 = vmul.f32 %v1641, 1.442695
        %v1685 = vpow.pop %v1684
        %v1686 = vmul.f32 %v1642, 1.442695
        %v1687 = vpow.pop %v1686
        %v1688 = vmul.f32 %v1643, 1.442695
        %v1689 = vpow.pop %v1688
        %v1690 = vmul.f32 %v1644, 1.442695
        %v1691 = vpow.pop %v1690
        %v1692 = vmul.f32 %v1645, 1.442695
        %v1693 = vpow.pop %v1692
        %v1694 = vmul.f32 %v1646, 1.442695
        %v1695 = vpow.pop %v1694
        %v1696 = vmul.f32 %v1647, 1.442695
        %v1697 = vpow.pop %v1696
        %v1698 = vmul.f32 %v1648, 1.442695
        %v1699 = vpow.pop %v1698
        %v1700 = vmul.f32 %v1649, 1.442695
        %v1701 = vpow.pop %v1700
        %v1702 = vmul.f32 %v1650, 1.442695
        %v1703 = vpow.pop %v1702
        %v1704 = vmul.f32 %v1651, 1.442695
        %v1705 = vpow.pop %v1704
        %v1706 = vmul.f32 %v1652, 1.442695
        %v1707 = vpow.pop %v1706
        %v1708 = vmul.f32 %v1653, 1.442695
        %v1709 = vpow.pop %v1708
        %v1710 = vmul.f32 %v1654, 1.442695
        %v1711 = vpow.pop %v1710
        %v1712 = vmul.f32 %v1655, 1.442695
        %v1713 = vpow.pop %v1712
        %v1714 = vmul.f32 %v1656, 1.442695
        %v1715 = vpow.pop %v1714
        %v1716 = vmul.f32 %v1657, 1.442695
        %v1717 = vpow.pop %v1716
        %v1718 = vmul.f32 %v1658, 1.442695
        %v1719 = vpow.pop %v1718
        %v1720 = vmul.f32 %v1659, 1.442695
        %v1721 = vpow.pop %v1720
        %v1722 = vmul.f32 %v1660, 1.442695
        %v1723 = vpow.pop %v1722
        %v1724 = vmul.f32 %v1661, 1.442695
        %v1725 = vpow.pop %v1724
        %1726 = vadd.xlane.f32.xlu0 %v1663
        %v1727 = vpop.xlane.xlu0 %1726
        %1728 = vadd.xlane.f32.xlu0 %v1665
        %v1729 = vpop.xlane.xlu0 %1728
        %1730 = vadd.xlane.f32.xlu0 %v1667
        %v1731 = vpop.xlane.xlu0 %1730
        %1732 = vadd.xlane.f32.xlu0 %v1669
        %v1733 = vpop.xlane.xlu0 %1732
        %1734 = vadd.xlane.f32.xlu0 %v1671
        %v1735 = vpop.xlane.xlu0 %1734
        %1736 = vadd.xlane.f32.xlu0 %v1673
        %v1737 = vpop.xlane.xlu0 %1736
        %1738 = vadd.xlane.f32.xlu0 %v1675
        %v1739 = vpop.xlane.xlu0 %1738
        %1740 = vadd.xlane.f32.xlu0 %v1677
        %v1741 = vpop.xlane.xlu0 %1740
        %1742 = vadd.xlane.f32.xlu0 %v1679
        %v1743 = vpop.xlane.xlu0 %1742
        %1744 = vadd.xlane.f32.xlu0 %v1681
        %v1745 = vpop.xlane.xlu0 %1744
        %1746 = vadd.xlane.f32.xlu0 %v1683
        %v1747 = vpop.xlane.xlu0 %1746
        %1748 = vadd.xlane.f32.xlu0 %v1685
        %v1749 = vpop.xlane.xlu0 %1748
        %1750 = vadd.xlane.f32.xlu0 %v1687
        %v1751 = vpop.xlane.xlu0 %1750
        %1752 = vadd.xlane.f32.xlu0 %v1689
        %v1753 = vpop.xlane.xlu0 %1752
        %1754 = vadd.xlane.f32.xlu0 %v1691
        %v1755 = vpop.xlane.xlu0 %1754
        %1756 = vadd.xlane.f32.xlu0 %v1693
        %v1757 = vpop.xlane.xlu0 %1756
        %1758 = vadd.xlane.f32.xlu0 %v1695
        %v1759 = vpop.xlane.xlu0 %1758
        %1760 = vadd.xlane.f32.xlu0 %v1697
        %v1761 = vpop.xlane.xlu0 %1760
        %1762 = vadd.xlane.f32.xlu0 %v1699
        %v1763 = vpop.xlane.xlu0 %1762
        %1764 = vadd.xlane.f32.xlu0 %v1701
        %v1765 = vpop.xlane.xlu0 %1764
        %1766 = vadd.xlane.f32.xlu0 %v1703
        %v1767 = vpop.xlane.xlu0 %1766
        %1768 = vadd.xlane.f32.xlu0 %v1705
        %v1769 = vpop.xlane.xlu0 %1768
        %1770 = vadd.xlane.f32.xlu0 %v1707
        %v1771 = vpop.xlane.xlu0 %1770
        %1772 = vadd.xlane.f32.xlu0 %v1709
        %v1773 = vpop.xlane.xlu0 %1772
        %1774 = vadd.xlane.f32.xlu0 %v1711
        %v1775 = vpop.xlane.xlu0 %1774
        %1776 = vadd.xlane.f32.xlu0 %v1713
        %v1777 = vpop.xlane.xlu0 %1776
        %1778 = vadd.xlane.f32.xlu0 %v1715
        %v1779 = vpop.xlane.xlu0 %1778
        %1780 = vadd.xlane.f32.xlu0 %v1717
        %v1781 = vpop.xlane.xlu0 %1780
        %1782 = vadd.xlane.f32.xlu0 %v1719
        %v1783 = vpop.xlane.xlu0 %1782
        %1784 = vadd.xlane.f32.xlu0 %v1721
        %v1785 = vpop.xlane.xlu0 %1784
        %1786 = vadd.xlane.f32.xlu0 %v1723
        %v1787 = vpop.xlane.xlu0 %1786
        %1788 = vadd.xlane.f32.xlu0 %v1725
        %v1789 = vpop.xlane.xlu0 %1788
        %v1790 = vrcp.pop %v1727
        %v1791 = vrcp.pop %v1729
        %v1792 = vrcp.pop %v1731
        %v1793 = vrcp.pop %v1733
        %v1794 = vrcp.pop %v1735
        %v1795 = vrcp.pop %v1737
        %v1796 = vrcp.pop %v1739
        %v1797 = vrcp.pop %v1741
        %v1798 = vrcp.pop %v1743
        %v1799 = vrcp.pop %v1745
        %v1800 = vrcp.pop %v1747
        %v1801 = vrcp.pop %v1749
        %v1802 = vrcp.pop %v1751
        %v1803 = vrcp.pop %v1753
        %v1804 = vrcp.pop %v1755
        %v1805 = vrcp.pop %v1757
        %v1806 = vrcp.pop %v1759
        %v1807 = vrcp.pop %v1761
        %v1808 = vrcp.pop %v1763
        %v1809 = vrcp.pop %v1765
        %v1810 = vrcp.pop %v1767
        %v1811 = vrcp.pop %v1769
        %v1812 = vrcp.pop %v1771
        %v1813 = vrcp.pop %v1773
        %v1814 = vrcp.pop %v1775
        %v1815 = vrcp.pop %v1777
        %v1816 = vrcp.pop %v1779
        %v1817 = vrcp.pop %v1781
        %v1818 = vrcp.pop %v1783
        %v1819 = vrcp.pop %v1785
        %v1820 = vrcp.pop %v1787
        %v1821 = vrcp.pop %v1789
        %v1822 = vmul.f32 %v1663, %v1790
        %v1823 = vmul.f32 %v1665, %v1791
        %v1824 = vmul.f32 %v1667, %v1792
        %v1825 = vmul.f32 %v1669, %v1793
        %v1826 = vmul.f32 %v1671, %v1794
        %v1827 = vmul.f32 %v1673, %v1795
        %v1828 = vmul.f32 %v1675, %v1796
        %v1829 = vmul.f32 %v1677, %v1797
        %v1830 = vmul.f32 %v1679, %v1798
        %v1831 = vmul.f32 %v1681, %v1799
        %v1832 = vmul.f32 %v1683, %v1800
        %v1833 = vmul.f32 %v1685, %v1801
        %v1834 = vmul.f32 %v1687, %v1802
        %v1835 = vmul.f32 %v1689, %v1803
        %v1836 = vmul.f32 %v1691, %v1804
        %v1837 = vmul.f32 %v1693, %v1805
        %v1838 = vmul.f32 %v1695, %v1806
        %v1839 = vmul.f32 %v1697, %v1807
        %v1840 = vmul.f32 %v1699, %v1808
        %v1841 = vmul.f32 %v1701, %v1809
        %v1842 = vmul.f32 %v1703, %v1810
        %v1843 = vmul.f32 %v1705, %v1811
        %v1844 = vmul.f32 %v1707, %v1812
        %v1845 = vmul.f32 %v1709, %v1813
        %v1846 = vmul.f32 %v1711, %v1814
        %v1847 = vmul.f32 %v1713, %v1815
        %v1848 = vmul.f32 %v1715, %v1816
        %v1849 = vmul.f32 %v1717, %v1817
        %v1850 = vmul.f32 %v1719, %v1818
        %v1851 = vmul.f32 %v1721, %v1819
        %v1852 = vmul.f32 %v1723, %v1820
        %v1853 = vmul.f32 %v1725, %v1821
        %v1854 = vpack.c.bf16 %v1823, %v1822
        %v1855 = vpack.c.bf16 %v1825, %v1824
        %v1856 = vpack.c.bf16 %v1827, %v1826
        %v1857 = vpack.c.bf16 %v1829, %v1828
        %v1858 = vpack.c.bf16 %v1831, %v1830
        %v1859 = vpack.c.bf16 %v1833, %v1832
        %v1860 = vpack.c.bf16 %v1835, %v1834
        %v1861 = vpack.c.bf16 %v1837, %v1836
        %v1862 = vpack.c.bf16 %v1839, %v1838
        %v1863 = vpack.c.bf16 %v1841, %v1840
        %v1864 = vpack.c.bf16 %v1843, %v1842
        %v1865 = vpack.c.bf16 %v1845, %v1844
        %v1866 = vpack.c.bf16 %v1847, %v1846
        %v1867 = vpack.c.bf16 %v1849, %v1848
        %v1868 = vpack.c.bf16 %v1851, %v1850
        %v1869 = vpack.c.bf16 %v1853, %v1852
        %v1886 = vunpack.c.l.b16 %v678
        %v1887 = vunpack.c.l.b16 %v679
        %v1888 = vunpack.c.l.b16 %v680
        %v1889 = vunpack.c.l.b16 %v681
        %v1890 = vunpack.c.l.b16 %v682
        %v1891 = vunpack.c.l.b16 %v683
        %v1892 = vunpack.c.l.b16 %v684
        %v1893 = vunpack.c.l.b16 %v685
        %v1894 = vunpack.c.l.b16 %v686
        %v1895 = vunpack.c.l.b16 %v687
        %v1896 = vunpack.c.l.b16 %v688
        %v1897 = vunpack.c.l.b16 %v689
        %v1898 = vunpack.c.l.b16 %v690
        %v1899 = vunpack.c.l.b16 %v691
        %v1900 = vunpack.c.l.b16 %v692
        %v1901 = vunpack.c.l.b16 %v693
        %v1902 = vpack.c.b16 %v1887, %v1886
        %v1903 = vpack.c.b16 %v1889, %v1888
        %v1904 = vpack.c.b16 %v1891, %v1890
        %v1905 = vpack.c.b16 %v1893, %v1892
        %v1906 = vpack.c.b16 %v1895, %v1894
        %v1907 = vpack.c.b16 %v1897, %v1896
        %v1908 = vpack.c.b16 %v1899, %v1898
        %v1909 = vpack.c.b16 %v1901, %v1900
        %1918 = vmatprep.subr.bf16.mxu0 0
        %1919 = vmatpush1.bf16.msra.mxu0 %v1902
        %1920 = vmatprep.subr.bf16.mxu0 0
        %1921 = vmatpush1.bf16.msra.mxu0 %v1903
        %1922 = vmatprep.subr.bf16.mxu0 0
        %1923 = vmatpush1.bf16.msra.mxu0 %v1904
        %1924 = vmatprep.subr.bf16.mxu0 0
        %1925 = vmatpush1.bf16.msra.mxu0 %v1905
        %1926 = vmatprep.subr.bf16.mxu0 0
        %1927 = vmatpush1.bf16.msra.mxu0 %v1906
        %1928 = vmatprep.subr.bf16.mxu0 0
        %1929 = vmatpush1.bf16.msra.mxu0 %v1907
        %1930 = vmatprep.subr.bf16.mxu0 0
        %1931 = vmatpush1.bf16.msra.mxu0 %v1908
        %1932 = vmatprep.subr.bf16.mxu0 0
        %1933 = vmatpush1.bf16.msra.mxu0 %v1909
        %1934 = vmatprep.subr.bf16.mxu0 0
        %1935 = vmatpush1.bf16.msra.mxu0 0
        %1936 = vmatprep.subr.bf16.mxu0 0
        %1937 = vmatpush1.bf16.msra.mxu0 0
        %1938 = vmatprep.subr.bf16.mxu0 0
        %1939 = vmatpush1.bf16.msra.mxu0 0
        %1940 = vmatprep.subr.bf16.mxu0 0
        %1941 = vmatpush1.bf16.msra.mxu0 0
        %1942 = vmatprep.subr.bf16.mxu0 0
        %1943 = vmatpush1.bf16.msra.mxu0 0
        %1944 = vmatprep.subr.bf16.mxu0 0
        %1945 = vmatpush1.bf16.msra.mxu0 0
        %1946 = vmatprep.subr.bf16.mxu0 0
        %1947 = vmatpush1.bf16.msra.mxu0 0
        %1948 = vmatprep.subr.bf16.mxu0 0
        %1949 = vmatpush1.bf16.msra.mxu0 0
        %1950 = vmatprep.mubr.bf16.mxu0 0
        %1951 = vmatmul.mubr.bf16.gmra.mrb[0].mxu0 %v1854
        %v1952 = vpop.f32.mrb[0].mxu0
        %v1953 = vadd.f32 0.0, %v1952
        %v1954 = vpop.f32.mrb[0].mxu0
        %v1955 = vpop.f32.mrb[0].mxu0
        %v1956 = vadd.f32 0.0, %v1955
        %v1957 = vpop.f32.mrb[0].mxu0
        %1958 = vmatprep.mubr.bf16.mxu0 0
        %1959 = vmatmul.mubr.bf16.gmra.mrb[0].mxu0 %v1855
        %v1960 = vpop.f32.mrb[0].mxu0
        %v1961 = vadd.f32 0.0, %v1960
        %v1962 = vpop.f32.mrb[0].mxu0
        %v1963 = vpop.f32.mrb[0].mxu0
        %v1964 = vadd.f32 0.0, %v1963
        %v1965 = vpop.f32.mrb[0].mxu0
        %1966 = vmatprep.mubr.bf16.mxu0 0
        %1967 = vmatmul.mubr.bf16.gmra.mrb[0].mxu0 %v1856
        %v1968 = vpop.f32.mrb[0].mxu0
        %v1969 = vadd.f32 0.0, %v1968
        %v1970 = vpop.f32.mrb[0].mxu0
        %v1971 = vpop.f32.mrb[0].mxu0
        %v1972 = vadd.f32 0.0, %v1971
        %v1973 = vpop.f32.mrb[0].mxu0
        %1974 = vmatprep.mubr.bf16.mxu0 0
        %1975 = vmatmul.mubr.bf16.gmra.mrb[0].mxu0 %v1857
        %v1976 = vpop.f32.mrb[0].mxu0
        %v1977 = vadd.f32 0.0, %v1976
        %v1978 = vpop.f32.mrb[0].mxu0
        %v1979 = vpop.f32.mrb[0].mxu0
        %v1980 = vadd.f32 0.0, %v1979
        %v1981 = vpop.f32.mrb[0].mxu0
        %1982 = vmatprep.mubr.bf16.mxu0 0
        %1983 = vmatmul.mubr.bf16.gmra.mrb[0].mxu0 %v1858
        %v1984 = vpop.f32.mrb[0].mxu0
        %v1985 = vadd.f32 0.0, %v1984
        %v1986 = vpop.f32.mrb[0].mxu0
        %v1987 = vpop.f32.mrb[0].mxu0
        %v1988 = vadd.f32 0.0, %v1987
        %v1989 = vpop.f32.mrb[0].mxu0
        %1990 = vmatprep.mubr.bf16.mxu0 0
        %1991 = vmatmul.mubr.bf16.gmra.mrb[0].mxu0 %v1859
        %v1992 = vpop.f32.mrb[0].mxu0
        %v1993 = vadd.f32 0.0, %v1992
        %v1994 = vpop.f32.mrb[0].mxu0
        %v1995 = vpop.f32.mrb[0].mxu0
        %v1996 = vadd.f32 0.0, %v1995
        %v1997 = vpop.f32.mrb[0].mxu0
        %1998 = vmatprep.mubr.bf16.mxu0 0
        %1999 = vmatmul.mubr.bf16.gmra.mrb[0].mxu0 %v1860
        %v2000 = vpop.f32.mrb[0].mxu0
        %v2001 = vadd.f32 0.0, %v2000
        %v2002 = vpop.f32.mrb[0].mxu0
        %v2003 = vpop.f32.mrb[0].mxu0
        %v2004 = vadd.f32 0.0, %v2003
        %v2005 = vpop.f32.mrb[0].mxu0
        %2006 = vmatprep.mubr.bf16.mxu0 0
        %2007 = vmatmul.mubr.bf16.gmra.mrb[0].mxu0 %v1861
        %v2008 = vpop.f32.mrb[0].mxu0
        %v2009 = vadd.f32 0.0, %v2008
        %v2010 = vpop.f32.mrb[0].mxu0
        %v2011 = vpop.f32.mrb[0].mxu0
        %v2012 = vadd.f32 0.0, %v2011
        %v2013 = vpop.f32.mrb[0].mxu0
        %2014 = vmatprep.mubr.bf16.mxu0 0
        %2015 = vmatmul.mubr.bf16.gmra.mrb[0].mxu0 %v1862
        %v2016 = vpop.f32.mrb[0].mxu0
        %v2017 = vadd.f32 0.0, %v2016
        %v2018 = vpop.f32.mrb[0].mxu0
        %v2019 = vpop.f32.mrb[0].mxu0
        %v2020 = vadd.f32 0.0, %v2019
        %v2021 = vpop.f32.mrb[0].mxu0
        %2022 = vmatprep.mubr.bf16.mxu0 0
        %2023 = vmatmul.mubr.bf16.gmra.mrb[0].mxu0 %v1863
        %v2024 = vpop.f32.mrb[0].mxu0
        %v2025 = vadd.f32 0.0, %v2024
        %v2026 = vpop.f32.mrb[0].mxu0
        %v2027 = vpop.f32.mrb[0].mxu0
        %v2028 = vadd.f32 0.0, %v2027
        %v2029 = vpop.f32.mrb[0].mxu0
        %2030 = vmatprep.mubr.bf16.mxu0 0
        %2031 = vmatmul.mubr.bf16.gmra.mrb[0].mxu0 %v1864
        %v2032 = vpop.f32.mrb[0].mxu0
        %v2033 = vadd.f32 0.0, %v2032
        %v2034 = vpop.f32.mrb[0].mxu0
        %v2035 = vpop.f32.mrb[0].mxu0
        %v2036 = vadd.f32 0.0, %v2035
        %v2037 = vpop.f32.mrb[0].mxu0
        %2038 = vmatprep.mubr.bf16.mxu0 0
        %2039 = vmatmul.mubr.bf16.gmra.mrb[0].mxu0 %v1865
        %v2040 = vpop.f32.mrb[0].mxu0
        %v2041 = vadd.f32 0.0, %v2040
        %v2042 = vpop.f32.mrb[0].mxu0
        %v2043 = vpop.f32.mrb[0].mxu0
        %v2044 = vadd.f32 0.0, %v2043
        %v2045 = vpop.f32.mrb[0].mxu0
        %2046 = vmatprep.mubr.bf16.mxu0 0
        %2047 = vmatmul.mubr.bf16.gmra.mrb[0].mxu0 %v1866
        %v2048 = vpop.f32.mrb[0].mxu0
        %v2049 = vadd.f32 0.0, %v2048
        %v2050 = vpop.f32.mrb[0].mxu0
        %v2051 = vpop.f32.mrb[0].mxu0
        %v2052 = vadd.f32 0.0, %v2051
        %v2053 = vpop.f32.mrb[0].mxu0
        %2054 = vmatprep.mubr.bf16.mxu0 0
        %2055 = vmatmul.mubr.bf16.gmra.mrb[0].mxu0 %v1867
        %v2056 = vpop.f32.mrb[0].mxu0
        %v2057 = vadd.f32 0.0, %v2056
        %v2058 = vpop.f32.mrb[0].mxu0
        %v2059 = vpop.f32.mrb[0].mxu0
        %v2060 = vadd.f32 0.0, %v2059
        %v2061 = vpop.f32.mrb[0].mxu0
        %2062 = vmatprep.mubr.bf16.mxu0 0
        %2063 = vmatmul.mubr.bf16.gmra.mrb[0].mxu0 %v1868
        %v2064 = vpop.f32.mrb[0].mxu0
        %v2065 = vadd.f32 0.0, %v2064
        %v2066 = vpop.f32.mrb[0].mxu0
        %v2067 = vpop.f32.mrb[0].mxu0
        %v2068 = vadd.f32 0.0, %v2067
        %v2069 = vpop.f32.mrb[0].mxu0
        %2070 = vmatprep.mubr.bf16.mxu0 0
        %2071 = vmatmul.mubr.bf16.gmra.mrb[0].mxu0 %v1869
        %v2072 = vpop.f32.mrb[0].mxu0
        %v2073 = vadd.f32 0.0, %v2072
        %v2074 = vpop.f32.mrb[0].mxu0
        %v2075 = vpop.f32.mrb[0].mxu0
        %v2076 = vadd.f32 0.0, %v2075
        %v2077 = vpop.f32.mrb[0].mxu0
        %2078 = vdwg.mxu0
        %v2079 = vpack.c.bf16 %v1956, %v1953
        %v2080 = vpack.c.bf16 %v1964, %v1961
        %v2081 = vpack.c.bf16 %v1972, %v1969
        %v2082 = vpack.c.bf16 %v1980, %v1977
        %v2083 = vpack.c.bf16 %v1988, %v1985
        %v2084 = vpack.c.bf16 %v1996, %v1993
        %v2085 = vpack.c.bf16 %v2004, %v2001
        %v2086 = vpack.c.bf16 %v2012, %v2009
        %v2087 = vpack.c.bf16 %v2020, %v2017
        %v2088 = vpack.c.bf16 %v2028, %v2025
        %v2089 = vpack.c.bf16 %v2036, %v2033
        %v2090 = vpack.c.bf16 %v2044, %v2041
        %v2091 = vpack.c.bf16 %v2052, %v2049
        %v2092 = vpack.c.bf16 %v2060, %v2057
        %v2093 = vpack.c.bf16 %v2068, %v2065
        %v2094 = vpack.c.bf16 %v2076, %v2073
        %v2095 = vld [vmem:[#allocation11] sm:$0xf]
        %v2096 = vld [vmem:[#allocation11 + $0x4] sm:$0xf]
        %v2097 = vld [vmem:[#allocation11 + $0x8] sm:$0xf]
        %v2098 = vld [vmem:[#allocation11 + $0xc] sm:$0xf]
        %v2099 = vld [vmem:[#allocation11 + $0x10] sm:$0xf]
        %v2100 = vld [vmem:[#allocation11 + $0x14] sm:$0xf]
        %v2101 = vld [vmem:[#allocation11 + $0x18] sm:$0xf]
        %v2102 = vld [vmem:[#allocation11 + $0x1c] sm:$0xf]
        %v2103 = vld [vmem:[#allocation11 + $0x20] sm:$0xf]
        %v2104 = vld [vmem:[#allocation11 + $0x24] sm:$0xf]
        %v2105 = vld [vmem:[#allocation11 + $0x28] sm:$0xf]
        %v2106 = vld [vmem:[#allocation11 + $0x2c] sm:$0xf]
        %v2107 = vld [vmem:[#allocation11 + $0x30] sm:$0xf]
        %v2108 = vld [vmem:[#allocation11 + $0x34] sm:$0xf]
        %v2109 = vld [vmem:[#allocation11 + $0x38] sm:$0xf]
        %v2110 = vld [vmem:[#allocation11 + $0x3c] sm:$0xf]
        %v2111 = vld [vmem:[%s9] sm:$0x1]
        %v2113 = vlaneseq
        %v2114 = vshrl.u32 %v2113, 7
        %v2115 = vsub.s32 0, %v2114
        %v2116 = vrot.slane %v2111, %v2115
        %v2134 = vunpack.c.l.b16 %v2095
        %v2135 = vunpack.c.l.b16 %v2096
        %v2136 = vunpack.c.l.b16 %v2097
        %v2137 = vunpack.c.l.b16 %v2098
        %v2138 = vunpack.c.l.b16 %v2099
        %v2139 = vunpack.c.l.b16 %v2100
        %v2140 = vunpack.c.l.b16 %v2101
        %v2141 = vunpack.c.l.b16 %v2102
        %v2142 = vunpack.c.l.b16 %v2103
        %v2143 = vunpack.c.l.b16 %v2104
        %v2144 = vunpack.c.l.b16 %v2105
        %v2145 = vunpack.c.l.b16 %v2106
        %v2146 = vunpack.c.l.b16 %v2107
        %v2147 = vunpack.c.l.b16 %v2108
        %v2148 = vunpack.c.l.b16 %v2109
        %v2149 = vunpack.c.l.b16 %v2110
        %v2150 = vpack.c.b16 %v2135, %v2134
        %v2151 = vpack.c.b16 %v2137, %v2136
        %v2152 = vpack.c.b16 %v2139, %v2138
        %v2153 = vpack.c.b16 %v2141, %v2140
        %v2154 = vpack.c.b16 %v2143, %v2142
        %v2155 = vpack.c.b16 %v2145, %v2144
        %v2156 = vpack.c.b16 %v2147, %v2146
        %v2157 = vpack.c.b16 %v2149, %v2148
        %2166 = vmatprep.subr.bf16.mxu0 0
        %2167 = vmatpush1.bf16.msra.mxu0 %v2150
        %2168 = vmatprep.subr.bf16.mxu0 0
        %2169 = vmatpush1.bf16.msra.mxu0 %v2151
        %2170 = vmatprep.subr.bf16.mxu0 0
        %2171 = vmatpush1.bf16.msra.mxu0 %v2152
        %2172 = vmatprep.subr.bf16.mxu0 0
        %2173 = vmatpush1.bf16.msra.mxu0 %v2153
        %2174 = vmatprep.subr.bf16.mxu0 0
        %2175 = vmatpush1.bf16.msra.mxu0 %v2154
        %2176 = vmatprep.subr.bf16.mxu0 0
        %2177 = vmatpush1.bf16.msra.mxu0 %v2155
        %2178 = vmatprep.subr.bf16.mxu0 0
        %2179 = vmatpush1.bf16.msra.mxu0 %v2156
        %2180 = vmatprep.subr.bf16.mxu0 0
        %2181 = vmatpush1.bf16.msra.mxu0 %v2157
        %2182 = vmatprep.subr.bf16.mxu0 0
        %2183 = vmatpush1.bf16.msra.mxu0 0
        %2184 = vmatprep.subr.bf16.mxu0 0
        %2185 = vmatpush1.bf16.msra.mxu0 0
        %2186 = vmatprep.subr.bf16.mxu0 0
        %2187 = vmatpush1.bf16.msra.mxu0 0
        %2188 = vmatprep.subr.bf16.mxu0 0
        %2189 = vmatpush1.bf16.msra.mxu0 0
        %2190 = vmatprep.subr.bf16.mxu0 0
        %2191 = vmatpush1.bf16.msra.mxu0 0
        %2192 = vmatprep.subr.bf16.mxu0 0
        %2193 = vmatpush1.bf16.msra.mxu0 0
        %2194 = vmatprep.subr.bf16.mxu0 0
        %2195 = vmatpush1.bf16.msra.mxu0 0
        %2196 = vmatprep.subr.bf16.mxu0 0
        %2197 = vmatpush1.bf16.msra.mxu0 0
        %2198 = vmatprep.mubr.bf16.mxu0 0
        %2199 = vmatmul.mubr.bf16.gmra.mrb[0].mxu0 %v2079
        %v2200 = vpop.f32.mrb[0].mxu0
        %v2201 = vadd.f32 %v2116, %v2200
        %v2202 = vpop.f32.mrb[0].mxu0
        %v2203 = vpop.f32.mrb[0].mxu0
        %v2204 = vadd.f32 %v2116, %v2203
        %v2205 = vpop.f32.mrb[0].mxu0
        %2206 = vmatprep.mubr.bf16.mxu0 0
        %2207 = vmatmul.mubr.bf16.gmra.mrb[0].mxu0 %v2080
        %v2208 = vpop.f32.mrb[0].mxu0
        %v2209 = vadd.f32 %v2116, %v2208
        %v2210 = vpop.f32.mrb[0].mxu0
        %v2211 = vpop.f32.mrb[0].mxu0
        %v2212 = vadd.f32 %v2116, %v2211
        %v2213 = vpop.f32.mrb[0].mxu0
        %2214 = vmatprep.mubr.bf16.mxu0 0
        %2215 = vmatmul.mubr.bf16.gmra.mrb[0].mxu0 %v2081
        %v2216 = vpop.f32.mrb[0].mxu0
        %v2217 = vadd.f32 %v2116, %v2216
        %v2218 = vpop.f32.mrb[0].mxu0
        %v2219 = vpop.f32.mrb[0].mxu0
        %v2220 = vadd.f32 %v2116, %v2219
        %v2221 = vpop.f32.mrb[0].mxu0
        %2222 = vmatprep.mubr.bf16.mxu0 0
        %2223 = vmatmul.mubr.bf16.gmra.mrb[0].mxu0 %v2082
        %v2224 = vpop.f32.mrb[0].mxu0
        %v2225 = vadd.f32 %v2116, %v2224
        %v2226 = vpop.f32.mrb[0].mxu0
        %v2227 = vpop.f32.mrb[0].mxu0
        %v2228 = vadd.f32 %v2116, %v2227
        %v2229 = vpop.f32.mrb[0].mxu0
        %2230 = vmatprep.mubr.bf16.mxu0 0
        %2231 = vmatmul.mubr.bf16.gmra.mrb[0].mxu0 %v2083
        %v2232 = vpop.f32.mrb[0].mxu0
        %v2233 = vadd.f32 %v2116, %v2232
        %v2234 = vpop.f32.mrb[0].mxu0
        %v2235 = vpop.f32.mrb[0].mxu0
        %v2236 = vadd.f32 %v2116, %v2235
        %v2237 = vpop.f32.mrb[0].mxu0
        %2238 = vmatprep.mubr.bf16.mxu0 0
        %2239 = vmatmul.mubr.bf16.gmra.mrb[0].mxu0 %v2084
        %v2240 = vpop.f32.mrb[0].mxu0
        %v2241 = vadd.f32 %v2116, %v2240
        %v2242 = vpop.f32.mrb[0].mxu0
        %v2243 = vpop.f32.mrb[0].mxu0
        %v2244 = vadd.f32 %v2116, %v2243
        %v2245 = vpop.f32.mrb[0].mxu0
        %2246 = vmatprep.mubr.bf16.mxu0 0
        %2247 = vmatmul.mubr.bf16.gmra.mrb[0].mxu0 %v2085
        %v2248 = vpop.f32.mrb[0].mxu0
        %v2249 = vadd.f32 %v2116, %v2248
        %v2250 = vpop.f32.mrb[0].mxu0
        %v2251 = vpop.f32.mrb[0].mxu0
        %v2252 = vadd.f32 %v2116, %v2251
        %v2253 = vpop.f32.mrb[0].mxu0
        %2254 = vmatprep.mubr.bf16.mxu0 0
        %2255 = vmatmul.mubr.bf16.gmra.mrb[0].mxu0 %v2086
        %v2256 = vpop.f32.mrb[0].mxu0
        %v2257 = vadd.f32 %v2116, %v2256
        %v2258 = vpop.f32.mrb[0].mxu0
        %v2259 = vpop.f32.mrb[0].mxu0
        %v2260 = vadd.f32 %v2116, %v2259
        %v2261 = vpop.f32.mrb[0].mxu0
        %2262 = vmatprep.mubr.bf16.mxu0 0
        %2263 = vmatmul.mubr.bf16.gmra.mrb[0].mxu0 %v2087
        %v2264 = vpop.f32.mrb[0].mxu0
        %v2265 = vadd.f32 %v2116, %v2264
        %v2266 = vpop.f32.mrb[0].mxu0
        %v2267 = vpop.f32.mrb[0].mxu0
        %v2268 = vadd.f32 %v2116, %v2267
        %v2269 = vpop.f32.mrb[0].mxu0
        %2270 = vmatprep.mubr.bf16.mxu0 0
        %2271 = vmatmul.mubr.bf16.gmra.mrb[0].mxu0 %v2088
        %v2272 = vpop.f32.mrb[0].mxu0
        %v2273 = vadd.f32 %v2116, %v2272
        %v2274 = vpop.f32.mrb[0].mxu0
        %v2275 = vpop.f32.mrb[0].mxu0
        %v2276 = vadd.f32 %v2116, %v2275
        %v2277 = vpop.f32.mrb[0].mxu0
        %2278 = vmatprep.mubr.bf16.mxu0 0
        %2279 = vmatmul.mubr.bf16.gmra.mrb[0].mxu0 %v2089
        %v2280 = vpop.f32.mrb[0].mxu0
        %v2281 = vadd.f32 %v2116, %v2280
        %v2282 = vpop.f32.mrb[0].mxu0
        %v2283 = vpop.f32.mrb[0].mxu0
        %v2284 = vadd.f32 %v2116, %v2283
        %v2285 = vpop.f32.mrb[0].mxu0
        %2286 = vmatprep.mubr.bf16.mxu0 0
        %2287 = vmatmul.mubr.bf16.gmra.mrb[0].mxu0 %v2090
        %v2288 = vpop.f32.mrb[0].mxu0
        %v2289 = vadd.f32 %v2116, %v2288
        %v2290 = vpop.f32.mrb[0].mxu0
        %v2291 = vpop.f32.mrb[0].mxu0
        %v2292 = vadd.f32 %v2116, %v2291
        %v2293 = vpop.f32.mrb[0].mxu0
        %2294 = vmatprep.mubr.bf16.mxu0 0
        %2295 = vmatmul.mubr.bf16.gmra.mrb[0].mxu0 %v2091
        %v2296 = vpop.f32.mrb[0].mxu0
        %v2297 = vadd.f32 %v2116, %v2296
        %v2298 = vpop.f32.mrb[0].mxu0
        %v2299 = vpop.f32.mrb[0].mxu0
        %v2300 = vadd.f32 %v2116, %v2299
        %v2301 = vpop.f32.mrb[0].mxu0
        %2302 = vmatprep.mubr.bf16.mxu0 0
        %2303 = vmatmul.mubr.bf16.gmra.mrb[0].mxu0 %v2092
        %v2304 = vpop.f32.mrb[0].mxu0
        %v2305 = vadd.f32 %v2116, %v2304
        %v2306 = vpop.f32.mrb[0].mxu0
        %v2307 = vpop.f32.mrb[0].mxu0
        %v2308 = vadd.f32 %v2116, %v2307
        %v2309 = vpop.f32.mrb[0].mxu0
        %2310 = vmatprep.mubr.bf16.mxu0 0
        %2311 = vmatmul.mubr.bf16.gmra.mrb[0].mxu0 %v2093
        %v2312 = vpop.f32.mrb[0].mxu0
        %v2313 = vadd.f32 %v2116, %v2312
        %v2314 = vpop.f32.mrb[0].mxu0
        %v2315 = vpop.f32.mrb[0].mxu0
        %v2316 = vadd.f32 %v2116, %v2315
        %v2317 = vpop.f32.mrb[0].mxu0
        %2318 = vmatprep.mubr.bf16.mxu0 0
        %2319 = vmatmul.mubr.bf16.gmra.mrb[0].mxu0 %v2094
        %v2320 = vpop.f32.mrb[0].mxu0
        %v2321 = vadd.f32 %v2116, %v2320
        %v2322 = vpop.f32.mrb[0].mxu0
        %v2323 = vpop.f32.mrb[0].mxu0
        %v2324 = vadd.f32 %v2116, %v2323
        %v2325 = vpop.f32.mrb[0].mxu0
        %2326 = vdwg.mxu0
        %v2327 = vmax.f32 %v2201, 0.0
        %v2328 = vmax.f32 %v2204, 0.0
        %v2329 = vmax.f32 %v2209, 0.0
        %v2330 = vmax.f32 %v2212, 0.0
        %v2331 = vmax.f32 %v2217, 0.0
        %v2332 = vmax.f32 %v2220, 0.0
        %v2333 = vmax.f32 %v2225, 0.0
        %v2334 = vmax.f32 %v2228, 0.0
        %v2335 = vmax.f32 %v2233, 0.0
        %v2336 = vmax.f32 %v2236, 0.0
        %v2337 = vmax.f32 %v2241, 0.0
        %v2338 = vmax.f32 %v2244, 0.0
        %v2339 = vmax.f32 %v2249, 0.0
        %v2340 = vmax.f32 %v2252, 0.0
        %v2341 = vmax.f32 %v2257, 0.0
        %v2342 = vmax.f32 %v2260, 0.0
        %v2343 = vmax.f32 %v2265, 0.0
        %v2344 = vmax.f32 %v2268, 0.0
        %v2345 = vmax.f32 %v2273, 0.0
        %v2346 = vmax.f32 %v2276, 0.0
        %v2347 = vmax.f32 %v2281, 0.0
        %v2348 = vmax.f32 %v2284, 0.0
        %v2349 = vmax.f32 %v2289, 0.0
        %v2350 = vmax.f32 %v2292, 0.0
        %v2351 = vmax.f32 %v2297, 0.0
        %v2352 = vmax.f32 %v2300, 0.0
        %v2353 = vmax.f32 %v2305, 0.0
        %v2354 = vmax.f32 %v2308, 0.0
        %v2355 = vmax.f32 %v2313, 0.0
        %v2356 = vmax.f32 %v2316, 0.0
        %v2357 = vmax.f32 %v2321, 0.0
        %v2358 = vmax.f32 %v2324, 0.0
        %v2359 = vpack.c.bf16 %v2328, %v2327
        %v2360 = vpack.c.bf16 %v2330, %v2329
        %v2361 = vpack.c.bf16 %v2332, %v2331
        %v2362 = vpack.c.bf16 %v2334, %v2333
        %v2363 = vpack.c.bf16 %v2336, %v2335
        %v2364 = vpack.c.bf16 %v2338, %v2337
        %v2365 = vpack.c.bf16 %v2340, %v2339
        %v2366 = vpack.c.bf16 %v2342, %v2341
        %v2367 = vpack.c.bf16 %v2344, %v2343
        %v2368 = vpack.c.bf16 %v2346, %v2345
        %v2369 = vpack.c.bf16 %v2348, %v2347
        %v2370 = vpack.c.bf16 %v2350, %v2349
        %v2371 = vpack.c.bf16 %v2352, %v2351
        %v2372 = vpack.c.bf16 %v2354, %v2353
        %v2373 = vpack.c.bf16 %v2356, %v2355
        %v2374 = vpack.c.bf16 %v2358, %v2357
        %v2375 = vld [vmem:[#allocation13] sm:$0xf]
        %v2376 = vld [vmem:[#allocation13 + $0x4] sm:$0xf]
        %v2377 = vld [vmem:[#allocation13 + $0x8] sm:$0xf]
        %v2378 = vld [vmem:[#allocation13 + $0xc] sm:$0xf]
        %v2379 = vld [vmem:[#allocation13 + $0x10] sm:$0xf]
        %v2380 = vld [vmem:[#allocation13 + $0x14] sm:$0xf]
        %v2381 = vld [vmem:[#allocation13 + $0x18] sm:$0xf]
        %v2382 = vld [vmem:[#allocation13 + $0x1c] sm:$0xf]
        %v2383 = vld [vmem:[#allocation13 + $0x20] sm:$0xf]
        %v2384 = vld [vmem:[#allocation13 + $0x24] sm:$0xf]
        %v2385 = vld [vmem:[#allocation13 + $0x28] sm:$0xf]
        %v2386 = vld [vmem:[#allocation13 + $0x2c] sm:$0xf]
        %v2387 = vld [vmem:[#allocation13 + $0x30] sm:$0xf]
        %v2388 = vld [vmem:[#allocation13 + $0x34] sm:$0xf]
        %v2389 = vld [vmem:[#allocation13 + $0x38] sm:$0xf]
        %v2390 = vld [vmem:[#allocation13 + $0x3c] sm:$0xf]
        %v2391 = vld [vmem:[#allocation14] sm:$0xf]
        %v2392 = vld [vmem:[#allocation14 + $0x4] sm:$0xf]
        %v2393 = vld [vmem:[#allocation14 + $0x8] sm:$0xf]
        %v2394 = vld [vmem:[#allocation14 + $0xc] sm:$0xf]
        %v2395 = vld [vmem:[#allocation14 + $0x10] sm:$0xf]
        %v2396 = vld [vmem:[#allocation14 + $0x14] sm:$0xf]
        %v2397 = vld [vmem:[#allocation14 + $0x18] sm:$0xf]
        %v2398 = vld [vmem:[#allocation14 + $0x1c] sm:$0xf]
        %v2399 = vld [vmem:[#allocation14 + $0x20] sm:$0xf]
        %v2400 = vld [vmem:[#allocation14 + $0x24] sm:$0xf]
        %v2401 = vld [vmem:[#allocation14 + $0x28] sm:$0xf]
        %v2402 = vld [vmem:[#allocation14 + $0x2c] sm:$0xf]
        %v2403 = vld [vmem:[#allocation14 + $0x30] sm:$0xf]
        %v2404 = vld [vmem:[#allocation14 + $0x34] sm:$0xf]
        %v2405 = vld [vmem:[#allocation14 + $0x38] sm:$0xf]
        %v2406 = vld [vmem:[#allocation14 + $0x3c] sm:$0xf]
        %v2423 = vunpack.c.l.b16 %v2391
        %v2424 = vunpack.c.l.b16 %v2392
        %v2425 = vunpack.c.l.b16 %v2393
        %v2426 = vunpack.c.l.b16 %v2394
        %v2427 = vunpack.c.l.b16 %v2395
        %v2428 = vunpack.c.l.b16 %v2396
        %v2429 = vunpack.c.l.b16 %v2397
        %v2430 = vunpack.c.l.b16 %v2398
        %v2431 = vunpack.c.l.b16 %v2399
        %v2432 = vunpack.c.l.b16 %v2400
        %v2433 = vunpack.c.l.b16 %v2401
        %v2434 = vunpack.c.l.b16 %v2402
        %v2435 = vunpack.c.l.b16 %v2403
        %v2436 = vunpack.c.l.b16 %v2404
        %v2437 = vunpack.c.l.b16 %v2405
        %v2438 = vunpack.c.l.b16 %v2406
        %v2439 = vpack.c.b16 %v2424, %v2423
        %v2440 = vpack.c.b16 %v2426, %v2425
        %v2441 = vpack.c.b16 %v2428, %v2427
        %v2442 = vpack.c.b16 %v2430, %v2429
        %v2443 = vpack.c.b16 %v2432, %v2431
        %v2444 = vpack.c.b16 %v2434, %v2433
        %v2445 = vpack.c.b16 %v2436, %v2435
        %v2446 = vpack.c.b16 %v2438, %v2437
        %2455 = vmatprep.subr.bf16.mxu0 0
        %2456 = vmatpush1.bf16.msra.mxu0 %v2439
        %2457 = vmatprep.subr.bf16.mxu0 0
        %2458 = vmatpush1.bf16.msra.mxu0 %v2440
        %2459 = vmatprep.subr.bf16.mxu0 0
        %2460 = vmatpush1.bf16.msra.mxu0 %v2441
        %2461 = vmatprep.subr.bf16.mxu0 0
        %2462 = vmatpush1.bf16.msra.mxu0 %v2442
        %2463 = vmatprep.subr.bf16.mxu0 0
        %2464 = vmatpush1.bf16.msra.mxu0 %v2443
        %2465 = vmatprep.subr.bf16.mxu0 0
        %2466 = vmatpush1.bf16.msra.mxu0 %v2444
        %2467 = vmatprep.subr.bf16.mxu0 0
        %2468 = vmatpush1.bf16.msra.mxu0 %v2445
        %2469 = vmatprep.subr.bf16.mxu0 0
        %2470 = vmatpush1.bf16.msra.mxu0 %v2446
        %2471 = vmatprep.subr.bf16.mxu0 0
        %2472 = vmatpush1.bf16.msra.mxu0 0
        %2473 = vmatprep.subr.bf16.mxu0 0
        %2474 = vmatpush1.bf16.msra.mxu0 0
        %2475 = vmatprep.subr.bf16.mxu0 0
        %2476 = vmatpush1.bf16.msra.mxu0 0
        %2477 = vmatprep.subr.bf16.mxu0 0
        %2478 = vmatpush1.bf16.msra.mxu0 0
        %2479 = vmatprep.subr.bf16.mxu0 0
        %2480 = vmatpush1.bf16.msra.mxu0 0
        %2481 = vmatprep.subr.bf16.mxu0 0
        %2482 = vmatpush1.bf16.msra.mxu0 0
        %2483 = vmatprep.subr.bf16.mxu0 0
        %2484 = vmatpush1.bf16.msra.mxu0 0
        %2485 = vmatprep.subr.bf16.mxu0 0
        %2486 = vmatpush1.bf16.msra.mxu0 0
        %2487 = vmatprep.mubr.bf16.mxu0 0
        %2488 = vmatmul.mubr.bf16.gmra.mrb[0].mxu0 %v781
        %v2489 = vpop.f32.mrb[0].mxu0
        %v2490 = vadd.f32 0.0, %v2489
        %v2491 = vpop.f32.mrb[0].mxu0
        %v2492 = vpop.f32.mrb[0].mxu0
        %v2493 = vadd.f32 0.0, %v2492
        %v2494 = vpop.f32.mrb[0].mxu0
        %2495 = vmatprep.mubr.bf16.mxu0 0
        %2496 = vmatmul.mubr.bf16.gmra.mrb[0].mxu0 %v782
        %v2497 = vpop.f32.mrb[0].mxu0
        %v2498 = vadd.f32 0.0, %v2497
        %v2499 = vpop.f32.mrb[0].mxu0
        %v2500 = vpop.f32.mrb[0].mxu0
        %v2501 = vadd.f32 0.0, %v2500
        %v2502 = vpop.f32.mrb[0].mxu0
        %2503 = vmatprep.mubr.bf16.mxu0 0
        %2504 = vmatmul.mubr.bf16.gmra.mrb[0].mxu0 %v783
        %v2505 = vpop.f32.mrb[0].mxu0
        %v2506 = vadd.f32 0.0, %v2505
        %v2507 = vpop.f32.mrb[0].mxu0
        %v2508 = vpop.f32.mrb[0].mxu0
        %v2509 = vadd.f32 0.0, %v2508
        %v2510 = vpop.f32.mrb[0].mxu0
        %2511 = vmatprep.mubr.bf16.mxu0 0
        %2512 = vmatmul.mubr.bf16.gmra.mrb[0].mxu0 %v784
        %v2513 = vpop.f32.mrb[0].mxu0
        %v2514 = vadd.f32 0.0, %v2513
        %v2515 = vpop.f32.mrb[0].mxu0
        %v2516 = vpop.f32.mrb[0].mxu0
        %v2517 = vadd.f32 0.0, %v2516
        %v2518 = vpop.f32.mrb[0].mxu0
        %2519 = vmatprep.mubr.bf16.mxu0 0
        %2520 = vmatmul.mubr.bf16.gmra.mrb[0].mxu0 %v785
        %v2521 = vpop.f32.mrb[0].mxu0
        %v2522 = vadd.f32 0.0, %v2521
        %v2523 = vpop.f32.mrb[0].mxu0
        %v2524 = vpop.f32.mrb[0].mxu0
        %v2525 = vadd.f32 0.0, %v2524
        %v2526 = vpop.f32.mrb[0].mxu0
        %2527 = vmatprep.mubr.bf16.mxu0 0
        %2528 = vmatmul.mubr.bf16.gmra.mrb[0].mxu0 %v786
        %v2529 = vpop.f32.mrb[0].mxu0
        %v2530 = vadd.f32 0.0, %v2529
        %v2531 = vpop.f32.mrb[0].mxu0
        %v2532 = vpop.f32.mrb[0].mxu0
        %v2533 = vadd.f32 0.0, %v2532
        %v2534 = vpop.f32.mrb[0].mxu0
        %2535 = vmatprep.mubr.bf16.mxu0 0
        %2536 = vmatmul.mubr.bf16.gmra.mrb[0].mxu0 %v787
        %v2537 = vpop.f32.mrb[0].mxu0
        %v2538 = vadd.f32 0.0, %v2537
        %v2539 = vpop.f32.mrb[0].mxu0
        %v2540 = vpop.f32.mrb[0].mxu0
        %v2541 = vadd.f32 0.0, %v2540
        %v2542 = vpop.f32.mrb[0].mxu0
        %2543 = vmatprep.mubr.bf16.mxu0 0
        %2544 = vmatmul.mubr.bf16.gmra.mrb[0].mxu0 %v788
        %v2545 = vpop.f32.mrb[0].mxu0
        %v2546 = vadd.f32 0.0, %v2545
        %v2547 = vpop.f32.mrb[0].mxu0
        %v2548 = vpop.f32.mrb[0].mxu0
        %v2549 = vadd.f32 0.0, %v2548
        %v2550 = vpop.f32.mrb[0].mxu0
        %2551 = vmatprep.mubr.bf16.mxu0 0
        %2552 = vmatmul.mubr.bf16.gmra.mrb[0].mxu0 %v789
        %v2553 = vpop.f32.mrb[0].mxu0
        %v2554 = vadd.f32 0.0, %v2553
        %v2555 = vpop.f32.mrb[0].mxu0
        %v2556 = vpop.f32.mrb[0].mxu0
        %v2557 = vadd.f32 0.0, %v2556
        %v2558 = vpop.f32.mrb[0].mxu0
        %2559 = vmatprep.mubr.bf16.mxu0 0
        %2560 = vmatmul.mubr.bf16.gmra.mrb[0].mxu0 %v790
        %v2561 = vpop.f32.mrb[0].mxu0
        %v2562 = vadd.f32 0.0, %v2561
        %v2563 = vpop.f32.mrb[0].mxu0
        %v2564 = vpop.f32.mrb[0].mxu0
        %v2565 = vadd.f32 0.0, %v2564
        %v2566 = vpop.f32.mrb[0].mxu0
        %2567 = vmatprep.mubr.bf16.mxu0 0
        %2568 = vmatmul.mubr.bf16.gmra.mrb[0].mxu0 %v791
        %v2569 = vpop.f32.mrb[0].mxu0
        %v2570 = vadd.f32 0.0, %v2569
        %v2571 = vpop.f32.mrb[0].mxu0
        %v2572 = vpop.f32.mrb[0].mxu0
        %v2573 = vadd.f32 0.0, %v2572
        %v2574 = vpop.f32.mrb[0].mxu0
        %2575 = vmatprep.mubr.bf16.mxu0 0
        %2576 = vmatmul.mubr.bf16.gmra.mrb[0].mxu0 %v792
        %v2577 = vpop.f32.mrb[0].mxu0
        %v2578 = vadd.f32 0.0, %v2577
        %v2579 = vpop.f32.mrb[0].mxu0
        %v2580 = vpop.f32.mrb[0].mxu0
        %v2581 = vadd.f32 0.0, %v2580
        %v2582 = vpop.f32.mrb[0].mxu0
        %2583 = vmatprep.mubr.bf16.mxu0 0
        %2584 = vmatmul.mubr.bf16.gmra.mrb[0].mxu0 %v793
        %v2585 = vpop.f32.mrb[0].mxu0
        %v2586 = vadd.f32 0.0, %v2585
        %v2587 = vpop.f32.mrb[0].mxu0
        %v2588 = vpop.f32.mrb[0].mxu0
        %v2589 = vadd.f32 0.0, %v2588
        %v2590 = vpop.f32.mrb[0].mxu0
        %2591 = vmatprep.mubr.bf16.mxu0 0
        %2592 = vmatmul.mubr.bf16.gmra.mrb[0].mxu0 %v794
        %v2593 = vpop.f32.mrb[0].mxu0
        %v2594 = vadd.f32 0.0, %v2593
        %v2595 = vpop.f32.mrb[0].mxu0
        %v2596 = vpop.f32.mrb[0].mxu0
        %v2597 = vadd.f32 0.0, %v2596
        %v2598 = vpop.f32.mrb[0].mxu0
        %2599 = vmatprep.mubr.bf16.mxu0 0
        %2600 = vmatmul.mubr.bf16.gmra.mrb[0].mxu0 %v795
        %v2601 = vpop.f32.mrb[0].mxu0
        %v2602 = vadd.f32 0.0, %v2601
        %v2603 = vpop.f32.mrb[0].mxu0
        %v2604 = vpop.f32.mrb[0].mxu0
        %v2605 = vadd.f32 0.0, %v2604
        %v2606 = vpop.f32.mrb[0].mxu0
        %2607 = vmatprep.mubr.bf16.mxu0 0
        %2608 = vmatmul.mubr.bf16.gmra.mrb[0].mxu0 %v796
        %v2609 = vpop.f32.mrb[0].mxu0
        %v2610 = vadd.f32 0.0, %v2609
        %v2611 = vpop.f32.mrb[0].mxu0
        %v2612 = vpop.f32.mrb[0].mxu0
        %v2613 = vadd.f32 0.0, %v2612
        %v2614 = vpop.f32.mrb[0].mxu0
        %2615 = vdwg.mxu0
        %v2632 = vunpack.c.l.b16 %v2375
        %v2633 = vunpack.c.l.b16 %v2376
        %v2634 = vunpack.c.l.b16 %v2377
        %v2635 = vunpack.c.l.b16 %v2378
        %v2636 = vunpack.c.l.b16 %v2379
        %v2637 = vunpack.c.l.b16 %v2380
        %v2638 = vunpack.c.l.b16 %v2381
        %v2639 = vunpack.c.l.b16 %v2382
        %v2640 = vunpack.c.l.b16 %v2383
        %v2641 = vunpack.c.l.b16 %v2384
        %v2642 = vunpack.c.l.b16 %v2385
        %v2643 = vunpack.c.l.b16 %v2386
        %v2644 = vunpack.c.l.b16 %v2387
        %v2645 = vunpack.c.l.b16 %v2388
        %v2646 = vunpack.c.l.b16 %v2389
        %v2647 = vunpack.c.l.b16 %v2390
        %v2648 = vpack.c.b16 %v2633, %v2632
        %v2649 = vpack.c.b16 %v2635, %v2634
        %v2650 = vpack.c.b16 %v2637, %v2636
        %v2651 = vpack.c.b16 %v2639, %v2638
        %v2652 = vpack.c.b16 %v2641, %v2640
        %v2653 = vpack.c.b16 %v2643, %v2642
        %v2654 = vpack.c.b16 %v2645, %v2644
        %v2655 = vpack.c.b16 %v2647, %v2646
        %2664 = vmatprep.subr.bf16.mxu0 0
        %2665 = vmatpush1.bf16.msra.mxu0 %v2648
        %2666 = vmatprep.subr.bf16.mxu0 0
        %2667 = vmatpush1.bf16.msra.mxu0 %v2649
        %2668 = vmatprep.subr.bf16.mxu0 0
        %2669 = vmatpush1.bf16.msra.mxu0 %v2650
        %2670 = vmatprep.subr.bf16.mxu0 0
        %2671 = vmatpush1.bf16.msra.mxu0 %v2651
        %2672 = vmatprep.subr.bf16.mxu0 0
        %2673 = vmatpush1.bf16.msra.mxu0 %v2652
        %2674 = vmatprep.subr.bf16.mxu0 0
        %2675 = vmatpush1.bf16.msra.mxu0 %v2653
        %2676 = vmatprep.subr.bf16.mxu0 0
        %2677 = vmatpush1.bf16.msra.mxu0 %v2654
        %2678 = vmatprep.subr.bf16.mxu0 0
        %2679 = vmatpush1.bf16.msra.mxu0 %v2655
        %2680 = vmatprep.subr.bf16.mxu0 0
        %2681 = vmatpush1.bf16.msra.mxu0 0
        %2682 = vmatprep.subr.bf16.mxu0 0
        %2683 = vmatpush1.bf16.msra.mxu0 0
        %2684 = vmatprep.subr.bf16.mxu0 0
        %2685 = vmatpush1.bf16.msra.mxu0 0
        %2686 = vmatprep.subr.bf16.mxu0 0
        %2687 = vmatpush1.bf16.msra.mxu0 0
        %2688 = vmatprep.subr.bf16.mxu0 0
        %2689 = vmatpush1.bf16.msra.mxu0 0
        %2690 = vmatprep.subr.bf16.mxu0 0
        %2691 = vmatpush1.bf16.msra.mxu0 0
        %2692 = vmatprep.subr.bf16.mxu0 0
        %2693 = vmatpush1.bf16.msra.mxu0 0
        %2694 = vmatprep.subr.bf16.mxu0 0
        %2695 = vmatpush1.bf16.msra.mxu0 0
        %2696 = vmatprep.mubr.bf16.mxu0 0
        %2697 = vmatmul.mubr.bf16.gmra.mrb[0].mxu0 %v2359
        %v2698 = vpop.f32.mrb[0].mxu0
        %v2699 = vadd.f32 %v2490, %v2698
        %v2700 = vpop.f32.mrb[0].mxu0
        %v2701 = vpop.f32.mrb[0].mxu0
        %v2702 = vadd.f32 %v2493, %v2701
        %v2703 = vpop.f32.mrb[0].mxu0
        %2704 = vmatprep.mubr.bf16.mxu0 0
        %2705 = vmatmul.mubr.bf16.gmra.mrb[0].mxu0 %v2360
        %v2706 = vpop.f32.mrb[0].mxu0
        %v2707 = vadd.f32 %v2498, %v2706
        %v2708 = vpop.f32.mrb[0].mxu0
        %v2709 = vpop.f32.mrb[0].mxu0
        %v2710 = vadd.f32 %v2501, %v2709
        %v2711 = vpop.f32.mrb[0].mxu0
        %2712 = vmatprep.mubr.bf16.mxu0 0
        %2713 = vmatmul.mubr.bf16.gmra.mrb[0].mxu0 %v2361
        %v2714 = vpop.f32.mrb[0].mxu0
        %v2715 = vadd.f32 %v2506, %v2714
        %v2716 = vpop.f32.mrb[0].mxu0
        %v2717 = vpop.f32.mrb[0].mxu0
        %v2718 = vadd.f32 %v2509, %v2717
        %v2719 = vpop.f32.mrb[0].mxu0
        %2720 = vmatprep.mubr.bf16.mxu0 0
        %2721 = vmatmul.mubr.bf16.gmra.mrb[0].mxu0 %v2362
        %v2722 = vpop.f32.mrb[0].mxu0
        %v2723 = vadd.f32 %v2514, %v2722
        %v2724 = vpop.f32.mrb[0].mxu0
        %v2725 = vpop.f32.mrb[0].mxu0
        %v2726 = vadd.f32 %v2517, %v2725
        %v2727 = vpop.f32.mrb[0].mxu0
        %2728 = vmatprep.mubr.bf16.mxu0 0
        %2729 = vmatmul.mubr.bf16.gmra.mrb[0].mxu0 %v2363
        %v2730 = vpop.f32.mrb[0].mxu0
        %v2731 = vadd.f32 %v2522, %v2730
        %v2732 = vpop.f32.mrb[0].mxu0
        %v2733 = vpop.f32.mrb[0].mxu0
        %v2734 = vadd.f32 %v2525, %v2733
        %v2735 = vpop.f32.mrb[0].mxu0
        %2736 = vmatprep.mubr.bf16.mxu0 0
        %2737 = vmatmul.mubr.bf16.gmra.mrb[0].mxu0 %v2364
        %v2738 = vpop.f32.mrb[0].mxu0
        %v2739 = vadd.f32 %v2530, %v2738
        %v2740 = vpop.f32.mrb[0].mxu0
        %v2741 = vpop.f32.mrb[0].mxu0
        %v2742 = vadd.f32 %v2533, %v2741
        %v2743 = vpop.f32.mrb[0].mxu0
        %2744 = vmatprep.mubr.bf16.mxu0 0
        %2745 = vmatmul.mubr.bf16.gmra.mrb[0].mxu0 %v2365
        %v2746 = vpop.f32.mrb[0].mxu0
        %v2747 = vadd.f32 %v2538, %v2746
        %v2748 = vpop.f32.mrb[0].mxu0
        %v2749 = vpop.f32.mrb[0].mxu0
        %v2750 = vadd.f32 %v2541, %v2749
        %v2751 = vpop.f32.mrb[0].mxu0
        %2752 = vmatprep.mubr.bf16.mxu0 0
        %2753 = vmatmul.mubr.bf16.gmra.mrb[0].mxu0 %v2366
        %v2754 = vpop.f32.mrb[0].mxu0
        %v2755 = vadd.f32 %v2546, %v2754
        %v2756 = vpop.f32.mrb[0].mxu0
        %v2757 = vpop.f32.mrb[0].mxu0
        %v2758 = vadd.f32 %v2549, %v2757
        %v2759 = vpop.f32.mrb[0].mxu0
        %2760 = vmatprep.mubr.bf16.mxu0 0
        %2761 = vmatmul.mubr.bf16.gmra.mrb[0].mxu0 %v2367
        %v2762 = vpop.f32.mrb[0].mxu0
        %v2763 = vadd.f32 %v2554, %v2762
        %v2764 = vpop.f32.mrb[0].mxu0
        %v2765 = vpop.f32.mrb[0].mxu0
        %v2766 = vadd.f32 %v2557, %v2765
        %v2767 = vpop.f32.mrb[0].mxu0
        %2768 = vmatprep.mubr.bf16.mxu0 0
        %2769 = vmatmul.mubr.bf16.gmra.mrb[0].mxu0 %v2368
        %v2770 = vpop.f32.mrb[0].mxu0
        %v2771 = vadd.f32 %v2562, %v2770
        %v2772 = vpop.f32.mrb[0].mxu0
        %v2773 = vpop.f32.mrb[0].mxu0
        %v2774 = vadd.f32 %v2565, %v2773
        %v2775 = vpop.f32.mrb[0].mxu0
        %2776 = vmatprep.mubr.bf16.mxu0 0
        %2777 = vmatmul.mubr.bf16.gmra.mrb[0].mxu0 %v2369
        %v2778 = vpop.f32.mrb[0].mxu0
        %v2779 = vadd.f32 %v2570, %v2778
        %v2780 = vpop.f32.mrb[0].mxu0
        %v2781 = vpop.f32.mrb[0].mxu0
        %v2782 = vadd.f32 %v2573, %v2781
        %v2783 = vpop.f32.mrb[0].mxu0
        %2784 = vmatprep.mubr.bf16.mxu0 0
        %2785 = vmatmul.mubr.bf16.gmra.mrb[0].mxu0 %v2370
        %v2786 = vpop.f32.mrb[0].mxu0
        %v2787 = vadd.f32 %v2578, %v2786
        %v2788 = vpop.f32.mrb[0].mxu0
        %v2789 = vpop.f32.mrb[0].mxu0
        %v2790 = vadd.f32 %v2581, %v2789
        %v2791 = vpop.f32.mrb[0].mxu0
        %2792 = vmatprep.mubr.bf16.mxu0 0
        %2793 = vmatmul.mubr.bf16.gmra.mrb[0].mxu0 %v2371
        %v2794 = vpop.f32.mrb[0].mxu0
        %v2795 = vadd.f32 %v2586, %v2794
        %v2796 = vpop.f32.mrb[0].mxu0
        %v2797 = vpop.f32.mrb[0].mxu0
        %v2798 = vadd.f32 %v2589, %v2797
        %v2799 = vpop.f32.mrb[0].mxu0
        %2800 = vmatprep.mubr.bf16.mxu0 0
        %2801 = vmatmul.mubr.bf16.gmra.mrb[0].mxu0 %v2372
        %v2802 = vpop.f32.mrb[0].mxu0
        %v2803 = vadd.f32 %v2594, %v2802
        %v2804 = vpop.f32.mrb[0].mxu0
        %v2805 = vpop.f32.mrb[0].mxu0
        %v2806 = vadd.f32 %v2597, %v2805
        %v2807 = vpop.f32.mrb[0].mxu0
        %2808 = vmatprep.mubr.bf16.mxu0 0
        %2809 = vmatmul.mubr.bf16.gmra.mrb[0].mxu0 %v2373
        %v2810 = vpop.f32.mrb[0].mxu0
        %v2811 = vadd.f32 %v2602, %v2810
        %v2812 = vpop.f32.mrb[0].mxu0
        %v2813 = vpop.f32.mrb[0].mxu0
        %v2814 = vadd.f32 %v2605, %v2813
        %v2815 = vpop.f32.mrb[0].mxu0
        %2816 = vmatprep.mubr.bf16.mxu0 0
        %2817 = vmatmul.mubr.bf16.gmra.mrb[0].mxu0 %v2374
        %v2818 = vpop.f32.mrb[0].mxu0
        %v2819 = vadd.f32 %v2610, %v2818
        %v2820 = vpop.f32.mrb[0].mxu0
        %v2821 = vpop.f32.mrb[0].mxu0
        %v2822 = vadd.f32 %v2613, %v2821
        %v2823 = vpop.f32.mrb[0].mxu0
        %2824 = vdwg.mxu0
        %v2825 = vld [vmem:[%s12] sm:$0x1]
        %v2827 = vlaneseq
        %v2828 = vshrl.u32 %v2827, 7
        %v2829 = vsub.s32 0, %v2828
        %v2830 = vrot.slane %v2825, %v2829
        %v2832 = vadd.f32 %v2699, %v2830
        %v2833 = vadd.f32 %v2702, %v2830
        %v2834 = vadd.f32 %v2707, %v2830
        %v2835 = vadd.f32 %v2710, %v2830
        %v2836 = vadd.f32 %v2715, %v2830
        %v2837 = vadd.f32 %v2718, %v2830
        %v2838 = vadd.f32 %v2723, %v2830
        %v2839 = vadd.f32 %v2726, %v2830
        %v2840 = vadd.f32 %v2731, %v2830
        %v2841 = vadd.f32 %v2734, %v2830
        %v2842 = vadd.f32 %v2739, %v2830
        %v2843 = vadd.f32 %v2742, %v2830
        %v2844 = vadd.f32 %v2747, %v2830
        %v2845 = vadd.f32 %v2750, %v2830
        %v2846 = vadd.f32 %v2755, %v2830
        %v2847 = vadd.f32 %v2758, %v2830
        %v2848 = vadd.f32 %v2763, %v2830
        %v2849 = vadd.f32 %v2766, %v2830
        %v2850 = vadd.f32 %v2771, %v2830
        %v2851 = vadd.f32 %v2774, %v2830
        %v2852 = vadd.f32 %v2779, %v2830
        %v2853 = vadd.f32 %v2782, %v2830
        %v2854 = vadd.f32 %v2787, %v2830
        %v2855 = vadd.f32 %v2790, %v2830
        %v2856 = vadd.f32 %v2795, %v2830
        %v2857 = vadd.f32 %v2798, %v2830
        %v2858 = vadd.f32 %v2803, %v2830
        %v2859 = vadd.f32 %v2806, %v2830
        %v2860 = vadd.f32 %v2811, %v2830
        %v2861 = vadd.f32 %v2814, %v2830
        %v2862 = vadd.f32 %v2819, %v2830
        %v2863 = vadd.f32 %v2822, %v2830
        %v2864 = vmax.f32 %v2832, 0.0
        %v2865 = vmax.f32 %v2833, 0.0
        %v2866 = vmax.f32 %v2834, 0.0
        %v2867 = vmax.f32 %v2835, 0.0
        %v2868 = vmax.f32 %v2836, 0.0
        %v2869 = vmax.f32 %v2837, 0.0
        %v2870 = vmax.f32 %v2838, 0.0
        %v2871 = vmax.f32 %v2839, 0.0
        %v2872 = vmax.f32 %v2840, 0.0
        %v2873 = vmax.f32 %v2841, 0.0
        %v2874 = vmax.f32 %v2842, 0.0
        %v2875 = vmax.f32 %v2843, 0.0
        %v2876 = vmax.f32 %v2844, 0.0
        %v2877 = vmax.f32 %v2845, 0.0
        %v2878 = vmax.f32 %v2846, 0.0
        %v2879 = vmax.f32 %v2847, 0.0
        %v2880 = vmax.f32 %v2848, 0.0
        %v2881 = vmax.f32 %v2849, 0.0
        %v2882 = vmax.f32 %v2850, 0.0
        %v2883 = vmax.f32 %v2851, 0.0
        %v2884 = vmax.f32 %v2852, 0.0
        %v2885 = vmax.f32 %v2853, 0.0
        %v2886 = vmax.f32 %v2854, 0.0
        %v2887 = vmax.f32 %v2855, 0.0
        %v2888 = vmax.f32 %v2856, 0.0
        %v2889 = vmax.f32 %v2857, 0.0
        %v2890 = vmax.f32 %v2858, 0.0
        %v2891 = vmax.f32 %v2859, 0.0
        %v2892 = vmax.f32 %v2860, 0.0
        %v2893 = vmax.f32 %v2861, 0.0
        %v2894 = vmax.f32 %v2862, 0.0
        %v2895 = vmax.f32 %v2863, 0.0
        %2896 = vxpose.xlu0.b32.start [1/16] %v2864, 128
        %2897 = vxpose.xlu0.b32.cont [2/16] %v2865, 128
        %2898 = vxpose.xlu0.b32.cont [3/16] %v2866, 128
        %2899 = vxpose.xlu0.b32.cont [4/16] %v2867, 128
        %2900 = vxpose.xlu0.b32.cont [5/16] %v2868, 128
        %2901 = vxpose.xlu0.b32.cont [6/16] %v2869, 128
        %2902 = vxpose.xlu0.b32.cont [7/16] %v2870, 128
        %2903 = vxpose.xlu0.b32.cont [8/16] %v2871, 128
        %2904 = vxpose.xlu0.b32.cont [9/16] %v2872, 128
        %2905 = vxpose.xlu0.b32.cont [10/16] %v2873, 128
        %2906 = vxpose.xlu0.b32.cont [11/16] %v2874, 128
        %2907 = vxpose.xlu0.b32.cont [12/16] %v2875, 128
        %2908 = vxpose.xlu0.b32.cont [13/16] %v2876, 128
        %2909 = vxpose.xlu0.b32.cont [14/16] %v2877, 128
        %2910 = vxpose.xlu0.b32.cont [15/16] %v2878, 128
        %2911 = vxpose.xlu0.b32.end [16/16] %v2879, 128
        %v2912 = vpop.trf.xlu0
        %v2913 = vpop.trf.xlu0
        %v2914 = vpop.trf.xlu0
        %v2915 = vpop.trf.xlu0
        %v2916 = vpop.trf.xlu0
        %v2917 = vpop.trf.xlu0
        %v2918 = vpop.trf.xlu0
        %v2919 = vpop.trf.xlu0
        %v2920 = vpop.trf.xlu0
        %v2921 = vpop.trf.xlu0
        %v2922 = vpop.trf.xlu0
        %v2923 = vpop.trf.xlu0
        %v2924 = vpop.trf.xlu0
        %v2925 = vpop.trf.xlu0
        %v2926 = vpop.trf.xlu0
        %v2927 = vpop.trf.xlu0
        %2928 = vxpose.xlu0.b32.start [1/16] %v2880, 128
        %2929 = vxpose.xlu0.b32.cont [2/16] %v2881, 128
        %2930 = vxpose.xlu0.b32.cont [3/16] %v2882, 128
        %2931 = vxpose.xlu0.b32.cont [4/16] %v2883, 128
        %2932 = vxpose.xlu0.b32.cont [5/16] %v2884, 128
        %2933 = vxpose.xlu0.b32.cont [6/16] %v2885, 128
        %2934 = vxpose.xlu0.b32.cont [7/16] %v2886, 128
        %2935 = vxpose.xlu0.b32.cont [8/16] %v2887, 128
        %2936 = vxpose.xlu0.b32.cont [9/16] %v2888, 128
        %2937 = vxpose.xlu0.b32.cont [10/16] %v2889, 128
        %2938 = vxpose.xlu0.b32.cont [11/16] %v2890, 128
        %2939 = vxpose.xlu0.b32.cont [12/16] %v2891, 128
        %2940 = vxpose.xlu0.b32.cont [13/16] %v2892, 128
        %2941 = vxpose.xlu0.b32.cont [14/16] %v2893, 128
        %2942 = vxpose.xlu0.b32.cont [15/16] %v2894, 128
        %2943 = vxpose.xlu0.b32.end [16/16] %v2895, 128
        %v2944 = vpop.trf.xlu0
        %v2945 = vpop.trf.xlu0
        %v2946 = vpop.trf.xlu0
        %v2947 = vpop.trf.xlu0
        %v2948 = vpop.trf.xlu0
        %v2949 = vpop.trf.xlu0
        %v2950 = vpop.trf.xlu0
        %v2951 = vpop.trf.xlu0
        %v2952 = vpop.trf.xlu0
        %v2953 = vpop.trf.xlu0
        %v2954 = vpop.trf.xlu0
        %v2955 = vpop.trf.xlu0
        %v2956 = vpop.trf.xlu0
        %v2957 = vpop.trf.xlu0
        %v2958 = vpop.trf.xlu0
        %v2959 = vpop.trf.xlu0
        %v2960 = vpack.c.bf16 %v2913, %v2912
        %v2961 = vpack.c.bf16 %v2945, %v2944
        %v2962 = vpack.c.bf16 %v2915, %v2914
        %v2963 = vpack.c.bf16 %v2947, %v2946
        %v2964 = vpack.c.bf16 %v2917, %v2916
        %v2965 = vpack.c.bf16 %v2949, %v2948
        %v2966 = vpack.c.bf16 %v2919, %v2918
        %v2967 = vpack.c.bf16 %v2951, %v2950
        %v2968 = vpack.c.bf16 %v2921, %v2920
        %v2969 = vpack.c.bf16 %v2953, %v2952
        %v2970 = vpack.c.bf16 %v2923, %v2922
        %v2971 = vpack.c.bf16 %v2955, %v2954
        %v2972 = vpack.c.bf16 %v2925, %v2924
        %v2973 = vpack.c.bf16 %v2957, %v2956
        %v2974 = vpack.c.bf16 %v2927, %v2926
        %v2975 = vpack.c.bf16 %v2959, %v2958
        %v2992 = vunpack.c.l.b16 %v2960
        %v2993 = vunpack.c.l.b16 %v2961
        %v2994 = vunpack.c.h.b16 %v2960
        %v2995 = vunpack.c.h.b16 %v2961
        %v2996 = vunpack.c.l.b16 %v2962
        %v2997 = vunpack.c.l.b16 %v2963
        %v2998 = vunpack.c.h.b16 %v2962
        %v2999 = vunpack.c.h.b16 %v2963
        %v3000 = vunpack.c.l.b16 %v2964
        %v3001 = vunpack.c.l.b16 %v2965
        %v3002 = vunpack.c.h.b16 %v2964
        %v3003 = vunpack.c.h.b16 %v2965
        %v3004 = vunpack.c.l.b16 %v2966
        %v3005 = vunpack.c.l.b16 %v2967
        %v3006 = vunpack.c.h.b16 %v2966
        %v3007 = vunpack.c.h.b16 %v2967
        %v3008 = vunpack.c.l.b16 %v2968
        %v3009 = vunpack.c.l.b16 %v2969
        %v3010 = vunpack.c.h.b16 %v2968
        %v3011 = vunpack.c.h.b16 %v2969
        %v3012 = vunpack.c.l.b16 %v2970
        %v3013 = vunpack.c.l.b16 %v2971
        %v3014 = vunpack.c.h.b16 %v2970
        %v3015 = vunpack.c.h.b16 %v2971
        %v3016 = vunpack.c.l.b16 %v2972
        %v3017 = vunpack.c.l.b16 %v2973
        %v3018 = vunpack.c.h.b16 %v2972
        %v3019 = vunpack.c.h.b16 %v2973
        %v3020 = vunpack.c.l.b16 %v2974
        %v3021 = vunpack.c.l.b16 %v2975
        %v3022 = vunpack.c.h.b16 %v2974
        %v3023 = vunpack.c.h.b16 %v2975
        %v3024 = vpack.c.b16 %v2993, %v2992
        %v3025 = vpack.c.b16 %v2995, %v2994
        %v3026 = vpack.c.b16 %v2997, %v2996
        %v3027 = vpack.c.b16 %v2999, %v2998
        %v3028 = vpack.c.b16 %v3001, %v3000
        %v3029 = vpack.c.b16 %v3003, %v3002
        %v3030 = vpack.c.b16 %v3005, %v3004
        %v3031 = vpack.c.b16 %v3007, %v3006
        %v3032 = vpack.c.b16 %v3009, %v3008
        %v3033 = vpack.c.b16 %v3011, %v3010
        %v3034 = vpack.c.b16 %v3013, %v3012
        %v3035 = vpack.c.b16 %v3015, %v3014
        %v3036 = vpack.c.b16 %v3017, %v3016
        %v3037 = vpack.c.b16 %v3019, %v3018
        %v3038 = vpack.c.b16 %v3021, %v3020
        %v3039 = vpack.c.b16 %v3023, %v3022
        %3056 = vst [vmem:[%s626] sm:$0xff] %v3024
        %3057 = vst [vmem:[%s626 + $0x8] sm:$0xff] %v3025
        %3058 = vst [vmem:[%s626 + $0x10] sm:$0xff] %v3026
        %3059 = vst [vmem:[%s626 + $0x18] sm:$0xff] %v3027
        %3060 = vst [vmem:[%s626 + $0x20] sm:$0xff] %v3028
        %3061 = vst [vmem:[%s626 + $0x28] sm:$0xff] %v3029
        %3062 = vst [vmem:[%s626 + $0x30] sm:$0xff] %v3030
        %3063 = vst [vmem:[%s626 + $0x38] sm:$0xff] %v3031
        %3064 = vst [vmem:[%s626 + $0x40] sm:$0xff] %v3032
        %3065 = vst [vmem:[%s626 + $0x48] sm:$0xff] %v3033
        %3066 = vst [vmem:[%s626 + $0x50] sm:$0xff] %v3034
        %3067 = vst [vmem:[%s626 + $0x58] sm:$0xff] %v3035
        %3068 = vst [vmem:[%s626 + $0x60] sm:$0xff] %v3036
        %3069 = vst [vmem:[%s626 + $0x68] sm:$0xff] %v3037
        %3070 = vst [vmem:[%s626 + $0x70] sm:$0xff] %v3038
        %3071 = vst [vmem:[%s626 + $0x78] sm:$0xff] %v3039
        %s3072 = sand.u32 %s348, 1
        %s3073 = scalar_lea.sflag [#allocation4], %s3072
        %s3074 = sand.u32 %s348, 1
        %s3075 = smul.addr %s3074, 128
        %s3076 = scalar_lea.vmem [#allocation16], %s3075
        // Predicated region
        $region105: #{tpu_custom_call.1} parent=71 // pred_check
          %p3077 = pneg %p358
        $region106: #{tpu_custom_call.1} parent=71 // pred_check_branch
          %3079 = sbr.rel (%p3077) target = $region108
        $region107: #{tpu_custom_call.1} parent=71 // pred_region
          %s3080 = smul.u32 2, %s41
          %s3082 = ssub.s32 2048, 2048
          %3083 = vsyncadd %s3073, %s3082
          %s3084 = smul.addr %s40, 32
          %s3085 = sadd.s32 %s3080, %s3084
          %s3086 = smul.addr %s3085, 64
          %s3087 = scalar_lea.hbm %s13, %s3086
          %s3088 = sshll.u32 %s3076, 4
          %s3089 = int_to_ptr.vmem [resolvable:$true] %s3088
          %3094 = dma.vmem_to_hbm [thread:$0]  %s3089, 2048, %s3087, %s3073, 128, 128, 8
        $region108: #{tpu_custom_call.1} parent=71 // pred_fallthru
          _
      $region72: #{tpu_custom_call.1} parent=5 // pred_fallthru
        _
      %p3095 = scmp.le.s32.totalorder 2, %s31
      // Predicated region
      $region109: #{tpu_custom_call.1} parent=5 // pred_check
        %p3096 = pneg %p3095
      $region110: #{tpu_custom_call.1} parent=5 // pred_check_branch
        %3098 = sbr.rel (%p3096) target = $region112
      $region111: #{tpu_custom_call.1} parent=5 // pred_region
        %s3099 = ssub.s32 %s31, 2
        // Predicated region
        $region113: #{tpu_custom_call.1} parent=111 // pred_check
          %p3100 = pneg %p364
        $region114: #{tpu_custom_call.1} parent=111 // pred_check_branch
          %3102 = sbr.rel (%p3100) target = $region116
        $region115: #{tpu_custom_call.1} parent=111 // pred_region
          %s3103 = sand.u32 %s349, 1
          %s3104 = scalar_lea.sflag [#allocation4], %s3103
          %s3105 = sand.u32 %s349, 1
          %s3106 = smul.addr %s3105, 128
          %s3107 = scalar_lea.vmem [#allocation16], %s3106
          %3108 = dma.done %s3104, 2048
        $region116: #{tpu_custom_call.1} parent=111 // pred_fallthru
          _
      $region112: #{tpu_custom_call.1} parent=5 // pred_fallthru
        _
    $region6: #{tpu_custom_call.1} parent=1 // loop_footer
      %s35 = sadd.s32 1, %s31
    $region7: #{tpu_custom_call.1} parent=1 // loop_footer_branch
      %30 = sbr.rel target = $region3
    $region8: #{tpu_custom_call.1} parent=1 // loop_exit
      _
    %3109 = vsyncpa [#allocation3], 1
    %s3110 = scalar_lea.sflag [#allocation3], 1
    %3111 = vsyncpa %s3110, 1
    %3112 = vsyncpa [#allocation6], 1
    %s3113 = scalar_lea.sflag [#allocation6], 1
    %3114 = vsyncpa %s3113, 1
    %3115 = vsyncpa [#allocation9], 1
    %3116 = vsyncpa [#allocation12], 1
    %3117 = vsyncpa [#allocation15], 1
    %3118 = vsyncpa [#allocation4], 1
    %s3119 = scalar_lea.sflag [#allocation4], 1
    %3120 = vsyncpa %s3119, 1

</llo_original>
